<compile_context>
chip_gen: v6e
topology: v6e:2x2x1
jax: 0.10.0
libtpu: 0.0.40
codegen_flags: <defaults>
</compile_context>

<pallas_src>
import math
from functools import partial

import jax
import jax.numpy as jnp
from jax import lax
from jax.experimental import pallas as pl
from jax.experimental.pallas import tpu as pltpu

_BN_EPS = 1e-5


# ---------------------------------------------------------------------------
# Pallas kernels
# ---------------------------------------------------------------------------

def _head_ext_kernel(xp_ref, wext_ref, bext_ref, whead_ref, bhead_ref, o_ref,
                     *, H, W, relu):
    """Fused CBA(3x3 conv + folded-BN + act) -> 1x1 head conv (+bias).

    xp_ref:    (1, H+2, W+2, Cin)  f32   spatially pre-padded input (one image)
    wext_ref:  (9, Cin, Cin)       bf16  3x3 taps (kh*3+kw), BN scale folded in
    bext_ref:  (1, Cin)            f32   folded BN bias
    whead_ref: (Cin, Cout)         bf16  1x1 head weights
    bhead_ref: (1, Cout)           f32   head bias
    o_ref:     (1, H*W, Cout)      f32
    """
    cmid = wext_ref.shape[2]
    acc = jnp.zeros((H * W, cmid), jnp.float32)
    # 3x3 conv = 9 shifted (H*W, Cin) x (Cin, Cmid) matmuls, accumulated in f32.
    # The shifted windows are read straight out of the VMEM input block, so no
    # im2col tensor ever hits HBM.
    for kh in range(3):
        for kw in range(3):
            tap = xp_ref[0, kh:kh + H, kw:kw + W, :]          # (H, W, Cin) f32
            tap2d = tap.reshape(H * W, tap.shape[-1])
            acc = acc + jnp.dot(tap2d.astype(jnp.bfloat16),
                                wext_ref[kh * 3 + kw],
                                preferred_element_type=jnp.float32)
    h = acc + bext_ref[...]                                   # folded BN bias
    if relu:
        h = jnp.maximum(h, 0.0)
    y = jnp.dot(h.astype(jnp.bfloat16), whead_ref[...],
                preferred_element_type=jnp.float32) + bhead_ref[...]
    o_ref[0] = y


def _head_1x1_kernel(x_ref, w_ref, b_ref, o_ref):
    """y = x @ w + b (1x1 conv over flattened spatial positions)."""
    y = jnp.dot(x_ref[...].astype(jnp.bfloat16), w_ref[...],
                preferred_element_type=jnp.float32)
    o_ref[...] = y + b_ref[...]


# ---------------------------------------------------------------------------
# Parameters (weights reshaped / BN-folded / bf16-cast once, here)
# ---------------------------------------------------------------------------

def init_params(key, in_channels, out_channels, has_ext=True):
    k1, k2, k3 = jax.random.split(key, 3)
    params = {}
    if has_ext:
        # CBAModule conv: 3x3, no bias, xavier_uniform_ init.
        fan_in = in_channels * 9
        fan_out = in_channels * 9
        limit = math.sqrt(6.0 / (fan_in + fan_out))
        w = jax.random.uniform(k1, (3, 3, in_channels, in_channels),
                               jnp.float32, -limit, limit)          # HWIO
        # Eval-mode BatchNorm fold (defaults: gamma=1, beta=0, mean=0, var=1).
        gamma = jnp.ones((in_channels,), jnp.float32)
        beta = jnp.zeros((in_channels,), jnp.float32)
        mean = jnp.zeros((in_channels,), jnp.float32)
        var = jnp.ones((in_channels,), jnp.float32)
        scale = gamma / jnp.sqrt(var + _BN_EPS)
        params['w_ext'] = (w * scale[None, None, None, :]).reshape(
            9, in_channels, in_channels).astype(jnp.bfloat16)
        params['b_ext'] = (beta - mean * scale).reshape(1, in_channels)
    # head conv: 1x1 with bias (PyTorch default Conv2d init).
    bound = 1.0 / math.sqrt(in_channels)
    params['w_head'] = jax.random.uniform(
        k2, (in_channels, out_channels), jnp.float32, -bound, bound
    ).astype(jnp.bfloat16)
    params['b_head'] = jax.random.uniform(
        k3, (1, out_channels), jnp.float32, -bound, bound)
    return params


# ---------------------------------------------------------------------------
# Forward
# ---------------------------------------------------------------------------

@partial(jax.jit, static_argnames=('has_ext', 'act'))
def head_module_forward(params, x_nchw, *, has_ext=True, act='relu'):
    x = jnp.transpose(x_nchw.astype(jnp.float32), (0, 2, 3, 1))   # NCHW -> NHWC
    N, H, W, C = x.shape
    cout = params['w_head'].shape[1]

    if has_ext:
        # Only a 1-pixel spatial halo pad; no channel / M padding round trips.
        xp = jnp.pad(x, ((0, 0), (1, 1), (1, 1), (0, 0)))
        out = pl.pallas_call(
            partial(_head_ext_kernel, H=H, W=W, relu=(act == 'relu')),
            grid=(N,),
            in_specs=[
                pl.BlockSpec((1, H + 2, W + 2, C), lambda n: (n, 0, 0, 0)),
                pl.BlockSpec((9, C, C), lambda n: (0, 0, 0)),
                pl.BlockSpec((1, C), lambda n: (0, 0)),
                pl.BlockSpec((C, cout), lambda n: (0, 0)),
                pl.BlockSpec((1, cout), lambda n: (0, 0)),
            ],
            out_specs=pl.BlockSpec((1, H * W, cout), lambda n: (n, 0, 0)),
            out_shape=jax.ShapeDtypeStruct((N, H * W, cout), jnp.float32),
            compiler_params=pltpu.CompilerParams(
                dimension_semantics=("parallel",)),
        )(xp, params['w_ext'], params['b_ext'],
          params['w_head'], params['b_head'])
        y = out.reshape(N, H, W, cout)
    else:
        M = N * H * W
        x2 = x.reshape(M, C)                       # free NHWC flatten
        TM = 256 if M >= 256 else M                # fixed tile; >=2 steps when possible
        out = pl.pallas_call(
            _head_1x1_kernel,
            grid=(pl.cdiv(M, TM),),
            in_specs=[
                pl.BlockSpec((TM, C), lambda i: (i, 0)),
                pl.BlockSpec((C, cout), lambda i: (0, 0)),
                pl.BlockSpec((1, cout), lambda i: (0, 0)),
            ],
            out_specs=pl.BlockSpec((TM, cout), lambda i: (i, 0)),
            out_shape=jax.ShapeDtypeStruct((M, cout), jnp.float32),
            compiler_params=pltpu.CompilerParams(
                dimension_semantics=("parallel",)),
        )(x2, params['w_head'], params['b_head'])
        y = out.reshape(N, H, W, cout)

    return jnp.transpose(y, (0, 3, 1, 2))          # NHWC -> NCHW


# ---------------------------------------------------------------------------
# Pure-JAX reference (uses the same BN-folded weights) for a sanity check
# ---------------------------------------------------------------------------

def _reference_forward(params, x_nchw, has_ext, act):
    x = jnp.transpose(x_nchw.astype(jnp.float32), (0, 2, 3, 1))
    C = x.shape[-1]
    if has_ext:
        w = params['w_ext'].astype(jnp.float32).reshape(3, 3, C, C)
        y = lax.conv_general_dilated(
            x, w, window_strides=(1, 1), padding='SAME',
            dimension_numbers=('NHWC', 'HWIO', 'NHWC'))
        y = y + params['b_ext'][0]
        if act == 'relu':
            y = jnp.maximum(y, 0.0)
        x = y
    y = jnp.einsum('nhwc,cd->nhwd', x,
                   params['w_head'].astype(jnp.float32)) + params['b_head'][0]
    return jnp.transpose(y, (0, 3, 1, 2))


if __name__ == "__main__":
    key = jax.random.PRNGKey(0)
    pkey, xkey = jax.random.split(key)
    in_ch, out_ch = 16, 4
    N, H, W = 2, 16, 16
    x = jax.random.normal(xkey, (N, in_ch, H, W), jnp.float32)

    # has_ext=True path (CBA 3x3 + BN + ReLU fused with 1x1 head)
    params = init_params(pkey, in_ch, out_ch, has_ext=True)
    y = jax.block_until_ready(
        head_module_forward(params, x, has_ext=True, act='relu'))
    assert y.shape == (N, out_ch, H, W), y.shape
    assert bool(jnp.all(jnp.isfinite(y)))
    y_ref = _reference_forward(params, x, True, 'relu')
    assert float(jnp.max(jnp.abs(y - y_ref))) < 1e-1, "ext path mismatch"

    # has_ext=False path (plain 1x1 head conv)
    params2 = init_params(jax.random.PRNGKey(1), in_ch, out_ch, has_ext=False)
    y2 = jax.block_until_ready(
        head_module_forward(params2, x, has_ext=False))
    assert y2.shape == (N, out_ch, H, W), y2.shape
    assert bool(jnp.all(jnp.isfinite(y2)))
    y2_ref = _reference_forward(params2, x, False, 'relu')
    assert float(jnp.max(jnp.abs(y2 - y2_ref))) < 1e-1, "head-only path mismatch"

    print("KERNEL_OK")
</pallas_src>

<mosaic_0001>
module attributes {stable_mosaic.version = 11 : i64} {
  func.func @_head_ext_kernel(%arg0: i32, %arg1: memref<1x18x18x16xf32, #tpu.memory_space<vmem>>, %arg2: memref<9x16x16xbf16, #tpu.memory_space<vmem>>, %arg3: memref<1x16xf32, #tpu.memory_space<vmem>>, %arg4: memref<16x4xbf16, #tpu.memory_space<vmem>>, %arg5: memref<1x4xf32, #tpu.memory_space<vmem>>, %arg6: memref<1x256x4xf32, #tpu.memory_space<vmem>>) attributes {dimension_semantics = [#tpu.dimension_semantics<parallel>], iteration_bounds = array<i64: 2>, scalar_prefetch = 0 : i64, scratch_operands = 0 : i64, tpu.core_type = #tpu.core_type<tc>, window_params = [{transform_indices = @transform_0, window_bounds = array<i64: 1, 18, 18, 16>}, {pipeline_mode = #tpu.pipeline_mode<synchronous>, transform_indices = @transform_1, window_bounds = array<i64: 9, 16, 16>}, {pipeline_mode = #tpu.pipeline_mode<synchronous>, transform_indices = @transform_2, window_bounds = array<i64: 1, 16>}, {pipeline_mode = #tpu.pipeline_mode<synchronous>, transform_indices = @transform_3, window_bounds = array<i64: 16, 4>}, {pipeline_mode = #tpu.pipeline_mode<synchronous>, transform_indices = @transform_4, window_bounds = array<i64: 1, 4>}, {transform_indices = @transform_5, window_bounds = array<i64: 1, 256, 4>}]} {
    %cst = arith.constant 0.000000e+00 : f32
    %0 = vector.broadcast %cst : f32 to vector<256x16xf32>
    %c0 = arith.constant 0 : index
    %c0_0 = arith.constant 0 : index
    %c0_1 = arith.constant 0 : index
    %c0_2 = arith.constant 0 : index
    %1 = vector.load %arg1[%c0, %c0_0, %c0_1, %c0_2] : memref<1x18x18x16xf32, #tpu.memory_space<vmem>>, vector<1x16x16x16xf32>
    %2 = vector.shape_cast %1 : vector<1x16x16x16xf32> to vector<16x16x16xf32>
    %3 = vector.shape_cast %2 : vector<16x16x16xf32> to vector<256x16xf32>
    %4 = arith.truncf %3 : vector<256x16xf32> to vector<256x16xbf16>
    %c0_3 = arith.constant 0 : index
    %c0_4 = arith.constant 0 : index
    %c0_5 = arith.constant 0 : index
    %5 = vector.load %arg2[%c0_3, %c0_4, %c0_5] : memref<9x16x16xbf16, #tpu.memory_space<vmem>>, vector<1x16x16xbf16>
    %6 = vector.shape_cast %5 : vector<1x16x16xbf16> to vector<16x16xbf16>
    %cst_6 = arith.constant dense<0.000000e+00> : vector<256x16xf32>
    %7 = tpu.matmul %4, %6, %cst_6 {dimension_numbers = #tpu.dot_dimension_numbers<[1], [0], [0], [1], [0, 0, 1, 1], [], []>} : vector<256x16xbf16>, vector<16x16xbf16>, vector<256x16xf32> -> vector<256x16xf32>
    %8 = arith.addf %0, %7 : vector<256x16xf32>
    %c0_7 = arith.constant 0 : index
    %c0_8 = arith.constant 0 : index
    %c1 = arith.constant 1 : index
    %c0_9 = arith.constant 0 : index
    %9 = vector.load %arg1[%c0_7, %c0_8, %c1, %c0_9] : memref<1x18x18x16xf32, #tpu.memory_space<vmem>>, vector<1x16x16x16xf32>
    %10 = vector.shape_cast %9 : vector<1x16x16x16xf32> to vector<16x16x16xf32>
    %11 = vector.shape_cast %10 : vector<16x16x16xf32> to vector<256x16xf32>
    %12 = arith.truncf %11 : vector<256x16xf32> to vector<256x16xbf16>
    %c1_10 = arith.constant 1 : index
    %c0_11 = arith.constant 0 : index
    %c0_12 = arith.constant 0 : index
    %13 = vector.load %arg2[%c1_10, %c0_11, %c0_12] : memref<9x16x16xbf16, #tpu.memory_space<vmem>>, vector<1x16x16xbf16>
    %14 = vector.shape_cast %13 : vector<1x16x16xbf16> to vector<16x16xbf16>
    %cst_13 = arith.constant dense<0.000000e+00> : vector<256x16xf32>
    %15 = tpu.matmul %12, %14, %cst_13 {dimension_numbers = #tpu.dot_dimension_numbers<[1], [0], [0], [1], [0, 0, 1, 1], [], []>} : vector<256x16xbf16>, vector<16x16xbf16>, vector<256x16xf32> -> vector<256x16xf32>
    %16 = arith.addf %8, %15 : vector<256x16xf32>
    %c0_14 = arith.constant 0 : index
    %c0_15 = arith.constant 0 : index
    %c2 = arith.constant 2 : index
    %c0_16 = arith.constant 0 : index
    %17 = vector.load %arg1[%c0_14, %c0_15, %c2, %c0_16] : memref<1x18x18x16xf32, #tpu.memory_space<vmem>>, vector<1x16x16x16xf32>
    %18 = vector.shape_cast %17 : vector<1x16x16x16xf32> to vector<16x16x16xf32>
    %19 = vector.shape_cast %18 : vector<16x16x16xf32> to vector<256x16xf32>
    %20 = arith.truncf %19 : vector<256x16xf32> to vector<256x16xbf16>
    %c2_17 = arith.constant 2 : index
    %c0_18 = arith.constant 0 : index
    %c0_19 = arith.constant 0 : index
    %21 = vector.load %arg2[%c2_17, %c0_18, %c0_19] : memref<9x16x16xbf16, #tpu.memory_space<vmem>>, vector<1x16x16xbf16>
    %22 = vector.shape_cast %21 : vector<1x16x16xbf16> to vector<16x16xbf16>
    %cst_20 = arith.constant dense<0.000000e+00> : vector<256x16xf32>
    %23 = tpu.matmul %20, %22, %cst_20 {dimension_numbers = #tpu.dot_dimension_numbers<[1], [0], [0], [1], [0, 0, 1, 1], [], []>} : vector<256x16xbf16>, vector<16x16xbf16>, vector<256x16xf32> -> vector<256x16xf32>
    %24 = arith.addf %16, %23 : vector<256x16xf32>
    %c0_21 = arith.constant 0 : index
    %c1_22 = arith.constant 1 : index
    %c0_23 = arith.constant 0 : index
    %c0_24 = arith.constant 0 : index
    %25 = vector.load %arg1[%c0_21, %c1_22, %c0_23, %c0_24] : memref<1x18x18x16xf32, #tpu.memory_space<vmem>>, vector<1x16x16x16xf32>
    %26 = vector.shape_cast %25 : vector<1x16x16x16xf32> to vector<16x16x16xf32>
    %27 = vector.shape_cast %26 : vector<16x16x16xf32> to vector<256x16xf32>
    %28 = arith.truncf %27 : vector<256x16xf32> to vector<256x16xbf16>
    %c3 = arith.constant 3 : index
    %c0_25 = arith.constant 0 : index
    %c0_26 = arith.constant 0 : index
    %29 = vector.load %arg2[%c3, %c0_25, %c0_26] : memref<9x16x16xbf16, #tpu.memory_space<vmem>>, vector<1x16x16xbf16>
    %30 = vector.shape_cast %29 : vector<1x16x16xbf16> to vector<16x16xbf16>
    %cst_27 = arith.constant dense<0.000000e+00> : vector<256x16xf32>
    %31 = tpu.matmul %28, %30, %cst_27 {dimension_numbers = #tpu.dot_dimension_numbers<[1], [0], [0], [1], [0, 0, 1, 1], [], []>} : vector<256x16xbf16>, vector<16x16xbf16>, vector<256x16xf32> -> vector<256x16xf32>
    %32 = arith.addf %24, %31 : vector<256x16xf32>
    %c0_28 = arith.constant 0 : index
    %c1_29 = arith.constant 1 : index
    %c1_30 = arith.constant 1 : index
    %c0_31 = arith.constant 0 : index
    %33 = vector.load %arg1[%c0_28, %c1_29, %c1_30, %c0_31] : memref<1x18x18x16xf32, #tpu.memory_space<vmem>>, vector<1x16x16x16xf32>
    %34 = vector.shape_cast %33 : vector<1x16x16x16xf32> to vector<16x16x16xf32>
    %35 = vector.shape_cast %34 : vector<16x16x16xf32> to vector<256x16xf32>
    %36 = arith.truncf %35 : vector<256x16xf32> to vector<256x16xbf16>
    %c4 = arith.constant 4 : index
    %c0_32 = arith.constant 0 : index
    %c0_33 = arith.constant 0 : index
    %37 = vector.load %arg2[%c4, %c0_32, %c0_33] : memref<9x16x16xbf16, #tpu.memory_space<vmem>>, vector<1x16x16xbf16>
    %38 = vector.shape_cast %37 : vector<1x16x16xbf16> to vector<16x16xbf16>
    %cst_34 = arith.constant dense<0.000000e+00> : vector<256x16xf32>
    %39 = tpu.matmul %36, %38, %cst_34 {dimension_numbers = #tpu.dot_dimension_numbers<[1], [0], [0], [1], [0, 0, 1, 1], [], []>} : vector<256x16xbf16>, vector<16x16xbf16>, vector<256x16xf32> -> vector<256x16xf32>
    %40 = arith.addf %32, %39 : vector<256x16xf32>
    %c0_35 = arith.constant 0 : index
    %c1_36 = arith.constant 1 : index
    %c2_37 = arith.constant 2 : index
    %c0_38 = arith.constant 0 : index
    %41 = vector.load %arg1[%c0_35, %c1_36, %c2_37, %c0_38] : memref<1x18x18x16xf32, #tpu.memory_space<vmem>>, vector<1x16x16x16xf32>
    %42 = vector.shape_cast %41 : vector<1x16x16x16xf32> to vector<16x16x16xf32>
    %43 = vector.shape_cast %42 : vector<16x16x16xf32> to vector<256x16xf32>
    %44 = arith.truncf %43 : vector<256x16xf32> to vector<256x16xbf16>
    %c5 = arith.constant 5 : index
    %c0_39 = arith.constant 0 : index
    %c0_40 = arith.constant 0 : index
    %45 = vector.load %arg2[%c5, %c0_39, %c0_40] : memref<9x16x16xbf16, #tpu.memory_space<vmem>>, vector<1x16x16xbf16>
    %46 = vector.shape_cast %45 : vector<1x16x16xbf16> to vector<16x16xbf16>
    %cst_41 = arith.constant dense<0.000000e+00> : vector<256x16xf32>
    %47 = tpu.matmul %44, %46, %cst_41 {dimension_numbers = #tpu.dot_dimension_numbers<[1], [0], [0], [1], [0, 0, 1, 1], [], []>} : vector<256x16xbf16>, vector<16x16xbf16>, vector<256x16xf32> -> vector<256x16xf32>
    %48 = arith.addf %40, %47 : vector<256x16xf32>
    %c0_42 = arith.constant 0 : index
    %c2_43 = arith.constant 2 : index
    %c0_44 = arith.constant 0 : index
    %c0_45 = arith.constant 0 : index
    %49 = vector.load %arg1[%c0_42, %c2_43, %c0_44, %c0_45] : memref<1x18x18x16xf32, #tpu.memory_space<vmem>>, vector<1x16x16x16xf32>
    %50 = vector.shape_cast %49 : vector<1x16x16x16xf32> to vector<16x16x16xf32>
    %51 = vector.shape_cast %50 : vector<16x16x16xf32> to vector<256x16xf32>
    %52 = arith.truncf %51 : vector<256x16xf32> to vector<256x16xbf16>
    %c6 = arith.constant 6 : index
    %c0_46 = arith.constant 0 : index
    %c0_47 = arith.constant 0 : index
    %53 = vector.load %arg2[%c6, %c0_46, %c0_47] : memref<9x16x16xbf16, #tpu.memory_space<vmem>>, vector<1x16x16xbf16>
    %54 = vector.shape_cast %53 : vector<1x16x16xbf16> to vector<16x16xbf16>
    %cst_48 = arith.constant dense<0.000000e+00> : vector<256x16xf32>
    %55 = tpu.matmul %52, %54, %cst_48 {dimension_numbers = #tpu.dot_dimension_numbers<[1], [0], [0], [1], [0, 0, 1, 1], [], []>} : vector<256x16xbf16>, vector<16x16xbf16>, vector<256x16xf32> -> vector<256x16xf32>
    %56 = arith.addf %48, %55 : vector<256x16xf32>
    %c0_49 = arith.constant 0 : index
    %c2_50 = arith.constant 2 : index
    %c1_51 = arith.constant 1 : index
    %c0_52 = arith.constant 0 : index
    %57 = vector.load %arg1[%c0_49, %c2_50, %c1_51, %c0_52] : memref<1x18x18x16xf32, #tpu.memory_space<vmem>>, vector<1x16x16x16xf32>
    %58 = vector.shape_cast %57 : vector<1x16x16x16xf32> to vector<16x16x16xf32>
    %59 = vector.shape_cast %58 : vector<16x16x16xf32> to vector<256x16xf32>
    %60 = arith.truncf %59 : vector<256x16xf32> to vector<256x16xbf16>
    %c7 = arith.constant 7 : index
    %c0_53 = arith.constant 0 : index
    %c0_54 = arith.constant 0 : index
    %61 = vector.load %arg2[%c7, %c0_53, %c0_54] : memref<9x16x16xbf16, #tpu.memory_space<vmem>>, vector<1x16x16xbf16>
    %62 = vector.shape_cast %61 : vector<1x16x16xbf16> to vector<16x16xbf16>
    %cst_55 = arith.constant dense<0.000000e+00> : vector<256x16xf32>
    %63 = tpu.matmul %60, %62, %cst_55 {dimension_numbers = #tpu.dot_dimension_numbers<[1], [0], [0], [1], [0, 0, 1, 1], [], []>} : vector<256x16xbf16>, vector<16x16xbf16>, vector<256x16xf32> -> vector<256x16xf32>
    %64 = arith.addf %56, %63 : vector<256x16xf32>
    %c0_56 = arith.constant 0 : index
    %c2_57 = arith.constant 2 : index
    %c2_58 = arith.constant 2 : index
    %c0_59 = arith.constant 0 : index
    %65 = vector.load %arg1[%c0_56, %c2_57, %c2_58, %c0_59] : memref<1x18x18x16xf32, #tpu.memory_space<vmem>>, vector<1x16x16x16xf32>
    %66 = vector.shape_cast %65 : vector<1x16x16x16xf32> to vector<16x16x16xf32>
    %67 = vector.shape_cast %66 : vector<16x16x16xf32> to vector<256x16xf32>
    %68 = arith.truncf %67 : vector<256x16xf32> to vector<256x16xbf16>
    %c8 = arith.constant 8 : index
    %c0_60 = arith.constant 0 : index
    %c0_61 = arith.constant 0 : index
    %69 = vector.load %arg2[%c8, %c0_60, %c0_61] : memref<9x16x16xbf16, #tpu.memory_space<vmem>>, vector<1x16x16xbf16>
    %70 = vector.shape_cast %69 : vector<1x16x16xbf16> to vector<16x16xbf16>
    %cst_62 = arith.constant dense<0.000000e+00> : vector<256x16xf32>
    %71 = tpu.matmul %68, %70, %cst_62 {dimension_numbers = #tpu.dot_dimension_numbers<[1], [0], [0], [1], [0, 0, 1, 1], [], []>} : vector<256x16xbf16>, vector<16x16xbf16>, vector<256x16xf32> -> vector<256x16xf32>
    %72 = arith.addf %64, %71 : vector<256x16xf32>
    %c0_63 = arith.constant 0 : index
    %c0_64 = arith.constant 0 : index
    %73 = vector.load %arg3[%c0_63, %c0_64] : memref<1x16xf32, #tpu.memory_space<vmem>>, vector<1x16xf32>
    %74 = vector.broadcast %73 : vector<1x16xf32> to vector<256x16xf32>
    %75 = arith.addf %72, %74 : vector<256x16xf32>
    %cst_65 = arith.constant 0.000000e+00 : f32
    %76 = vector.broadcast %cst_65 : f32 to vector<256x16xf32>
    %77 = arith.maximumf %75, %76 : vector<256x16xf32>
    %78 = arith.truncf %77 : vector<256x16xf32> to vector<256x16xbf16>
    %c0_66 = arith.constant 0 : index
    %c0_67 = arith.constant 0 : index
    %79 = vector.load %arg4[%c0_66, %c0_67] : memref<16x4xbf16, #tpu.memory_space<vmem>>, vector<16x4xbf16>
    %cst_68 = arith.constant dense<0.000000e+00> : vector<256x4xf32>
    %80 = tpu.matmul %78, %79, %cst_68 {dimension_numbers = #tpu.dot_dimension_numbers<[1], [0], [0], [1], [0, 0, 1, 1], [], []>} : vector<256x16xbf16>, vector<16x4xbf16>, vector<256x4xf32> -> vector<256x4xf32>
    %c0_69 = arith.constant 0 : index
    %c0_70 = arith.constant 0 : index
    %81 = vector.load %arg5[%c0_69, %c0_70] : memref<1x4xf32, #tpu.memory_space<vmem>>, vector<1x4xf32>
    %82 = vector.broadcast %81 : vector<1x4xf32> to vector<256x4xf32>
    %83 = arith.addf %80, %82 : vector<256x4xf32>
    %c0_71 = arith.constant 0 : index
    %c0_72 = arith.constant 0 : index
    %c0_73 = arith.constant 0 : index
    %84 = vector.load %arg6[%c0_71, %c0_72, %c0_73] : memref<1x256x4xf32, #tpu.memory_space<vmem>>, vector<1x256x4xf32>
    %85 = vector.shape_cast %84 : vector<1x256x4xf32> to vector<256x4xf32>
    %86 = vector.shape_cast %83 : vector<256x4xf32> to vector<1x256x4xf32>
    tpu.vector_store %arg6[%c0_71, %c0_72, %c0_73], %86 {strides = array<i32>} : memref<1x256x4xf32, #tpu.memory_space<vmem>>, vector<1x256x4xf32>,
    return
  }
  func.func @transform_0(%arg0: i32) -> (i32, i32, i32, i32) {
    %c0_i32 = arith.constant 0 : i32
    %c0_i32_0 = arith.constant 0 : i32
    %c0_i32_1 = arith.constant 0 : i32
    %c0_i32_2 = arith.constant 0 : i32
    return %arg0, %c0_i32, %c0_i32_0, %c0_i32_1 : i32, i32, i32, i32
  }
  func.func @transform_1(%arg0: i32) -> (i32, i32, i32) {
    %c0_i32 = arith.constant 0 : i32
    %c0_i32_0 = arith.constant 0 : i32
    %c0_i32_1 = arith.constant 0 : i32
    %c0_i32_2 = arith.constant 0 : i32
    return %c0_i32, %c0_i32_0, %c0_i32_1 : i32, i32, i32
  }
  func.func @transform_2(%arg0: i32) -> (i32, i32) {
    %c0_i32 = arith.constant 0 : i32
    %c0_i32_0 = arith.constant 0 : i32
    %c0_i32_1 = arith.constant 0 : i32
    return %c0_i32, %c0_i32_0 : i32, i32
  }
  func.func @transform_3(%arg0: i32) -> (i32, i32) {
    %c0_i32 = arith.constant 0 : i32
    %c0_i32_0 = arith.constant 0 : i32
    %c0_i32_1 = arith.constant 0 : i32
    return %c0_i32, %c0_i32_0 : i32, i32
  }
  func.func @transform_4(%arg0: i32) -> (i32, i32) {
    %c0_i32 = arith.constant 0 : i32
    %c0_i32_0 = arith.constant 0 : i32
    %c0_i32_1 = arith.constant 0 : i32
    return %c0_i32, %c0_i32_0 : i32, i32
  }
  func.func @transform_5(%arg0: i32) -> (i32, i32, i32) {
    %c0_i32 = arith.constant 0 : i32
    %c0_i32_0 = arith.constant 0 : i32
    %c0_i32_1 = arith.constant 0 : i32
    return %arg0, %c0_i32, %c0_i32_0 : i32, i32, i32
  }
}

</mosaic_0001>

<llo_original>
// kernel: head_module_forward.1
$region0: #{head_module_forward.1}
  #allocation0 [shape = 'u32[]', space=smem, size = 0x4, offset = 0x4, fixed_abs, tag = 'smem constant byte address 0x4 - core index']
  #allocation1 [shape = 'u32[144,128]{1,0:T(1,128)}', space=vmem, size = 0x12000, scoped, tag = 'internal scratch']
  %s0 = inlined_call_operand.vmem [shape: f32[2,18,18,16], index: 0, kind: input, shape index: {}]
  %s1 = inlined_call_operand.vmem [shape: bf16[9,16,16], index: 1, kind: input, shape index: {}]
  %s2 = inlined_call_operand.vmem [shape: f32[1,16], index: 2, kind: input, shape index: {}]
  %s3 = inlined_call_operand.vmem [shape: bf16[16,4], index: 3, kind: input, shape index: {}]
  %s4 = inlined_call_operand.vmem [shape: f32[1,4], index: 4, kind: input, shape index: {}]
  %s5 = inlined_call_operand.vmem [shape: f32[2,256,4], index: 5, kind: output, shape index: {}]
  %s6 = sld [smem:[#allocation0]]
  $region53: #{head_module_forward.1} parent=0
    _
  %s8 = ssub.s32 1, %s6
  %s9 = scalar_select 0, %s8, %s6
  loop: start=0, step=1, limit=4
  $region2: #{head_module_forward.1} parent=0 // loop_pre_header
    _
  $region3: #{head_module_forward.1} parent=0 // loop_header
    %s11 = sphi 0, %s15
    %p12 = scmp.ge.s32.totalorder %s11, 4
    %s21 = sphi 0, %s23
    %s24 = sphi 0, %s21
    %s25 = sphi 0, %s24
    %s41 = sphi 0, %s25
    %s45 = sphi 0, %s45
    %s47 = sphi 0, %s45
    %s48 = sphi 0, %s47
    %s62 = sphi 0, %s48
    %s66 = sphi 0, %s66
    %s68 = sphi 0, %s66
    %s69 = sphi 0, %s68
    %s83 = sphi 0, %s69
    %s87 = sphi 0, %s87
    %s89 = sphi 0, %s87
    %s90 = sphi 0, %s89
    %s104 = sphi 0, %s90
    %s108 = sphi 0, %s108
    %s110 = sphi 0, %s108
    %s111 = sphi 0, %s110
    %s125 = sphi 0, %s111
    %s131 = sphi 0, %s133
    %s134 = sphi 0, %s131
    %s135 = sphi 0, %s134
    %s151 = sphi 0, %s135
  $region4: #{head_module_forward.1} parent=0 // loop_header_branch
    %14 = sbr.rel (%p12) target = $region8
  $region5: #{head_module_forward.1} parent=0 // loop_body
    %s16 = ssub.s32 %s11, 1
    %s17 = ssub.s32 %s11, 2
    %s18 = sadd.s32 %s11, 1
    %s19 = ssub.s32 %s11, %s18
    %p20 = scmp.eq.s32.totalorder %s19, 0
    %s22 = sadd.s32 %s21, 1
    %s23 = scalar_select %p20, %s21, %s22
    %p26 = pneg %p20
    %p27 = scmp.eq.s32.totalorder %s11, 1
    %p28 = por %p26, %p27
    %p29 = scmp.ne.s32.totalorder %s21, %s24
    %p30 = scmp.eq.s32.totalorder %s11, 0
    %p31 = por %p29, %p30
    %p32 = scmp.ne.s32.totalorder %s21, %s24
    %p33 = scmp.eq.s32.totalorder %s16, 1
    %p34 = por %p32, %p33
    %p35 = scmp.ne.s32.totalorder %s24, %s25
    %p36 = scmp.eq.s32.totalorder %s16, 0
    %p37 = por %p35, %p36
    %p38 = scmp.ne.s32.totalorder %s24, %s25
    %p39 = scmp.eq.s32.totalorder %s17, 1
    %p40 = por %p38, %p39
    %p42 = scmp.ne.s32.totalorder %s25, %s41
    %p43 = scmp.eq.s32.totalorder %s17, 0
    %p44 = por %p42, %p43
    %s46 = sadd.s32 %s45, 1
    %p49 = scmp.eq.s32.totalorder %s11, 1
    %p50 = scmp.ne.s32.totalorder %s45, %s47
    %p51 = scmp.eq.s32.totalorder %s11, 0
    %p52 = por %p50, %p51
    %p53 = scmp.ne.s32.totalorder %s45, %s47
    %p54 = scmp.eq.s32.totalorder %s16, 1
    %p55 = por %p53, %p54
    %p56 = scmp.ne.s32.totalorder %s47, %s48
    %p57 = scmp.eq.s32.totalorder %s16, 0
    %p58 = por %p56, %p57
    %p59 = scmp.ne.s32.totalorder %s47, %s48
    %p60 = scmp.eq.s32.totalorder %s17, 1
    %p61 = por %p59, %p60
    %p63 = scmp.ne.s32.totalorder %s48, %s62
    %p64 = scmp.eq.s32.totalorder %s17, 0
    %p65 = por %p63, %p64
    %s67 = sadd.s32 %s66, 1
    %p70 = scmp.eq.s32.totalorder %s11, 1
    %p71 = scmp.ne.s32.totalorder %s66, %s68
    %p72 = scmp.eq.s32.totalorder %s11, 0
    %p73 = por %p71, %p72
    %p74 = scmp.ne.s32.totalorder %s66, %s68
    %p75 = scmp.eq.s32.totalorder %s16, 1
    %p76 = por %p74, %p75
    %p77 = scmp.ne.s32.totalorder %s68, %s69
    %p78 = scmp.eq.s32.totalorder %s16, 0
    %p79 = por %p77, %p78
    %p80 = scmp.ne.s32.totalorder %s68, %s69
    %p81 = scmp.eq.s32.totalorder %s17, 1
    %p82 = por %p80, %p81
    %p84 = scmp.ne.s32.totalorder %s69, %s83
    %p85 = scmp.eq.s32.totalorder %s17, 0
    %p86 = por %p84, %p85
    %s88 = sadd.s32 %s87, 1
    %p91 = scmp.eq.s32.totalorder %s11, 1
    %p92 = scmp.ne.s32.totalorder %s87, %s89
    %p93 = scmp.eq.s32.totalorder %s11, 0
    %p94 = por %p92, %p93
    %p95 = scmp.ne.s32.totalorder %s87, %s89
    %p96 = scmp.eq.s32.totalorder %s16, 1
    %p97 = por %p95, %p96
    %p98 = scmp.ne.s32.totalorder %s89, %s90
    %p99 = scmp.eq.s32.totalorder %s16, 0
    %p100 = por %p98, %p99
    %p101 = scmp.ne.s32.totalorder %s89, %s90
    %p102 = scmp.eq.s32.totalorder %s17, 1
    %p103 = por %p101, %p102
    %p105 = scmp.ne.s32.totalorder %s90, %s104
    %p106 = scmp.eq.s32.totalorder %s17, 0
    %p107 = por %p105, %p106
    %s109 = sadd.s32 %s108, 1
    %p112 = scmp.eq.s32.totalorder %s11, 1
    %p113 = scmp.ne.s32.totalorder %s108, %s110
    %p114 = scmp.eq.s32.totalorder %s11, 0
    %p115 = por %p113, %p114
    %p116 = scmp.ne.s32.totalorder %s108, %s110
    %p117 = scmp.eq.s32.totalorder %s16, 1
    %p118 = por %p116, %p117
    %p119 = scmp.ne.s32.totalorder %s110, %s111
    %p120 = scmp.eq.s32.totalorder %s16, 0
    %p121 = por %p119, %p120
    %p122 = scmp.ne.s32.totalorder %s110, %s111
    %p123 = scmp.eq.s32.totalorder %s17, 1
    %p124 = por %p122, %p123
    %p126 = scmp.ne.s32.totalorder %s111, %s125
    %p127 = scmp.eq.s32.totalorder %s17, 0
    %p128 = por %p126, %p127
    %s129 = ssub.s32 %s11, %s18
    %p130 = scmp.eq.s32.totalorder %s129, 0
    %s132 = sadd.s32 %s131, 1
    %s133 = scalar_select %p130, %s131, %s132
    %p136 = pneg %p130
    %p137 = scmp.eq.s32.totalorder %s11, 1
    %p138 = por %p136, %p137
    %p139 = scmp.ne.s32.totalorder %s131, %s134
    %p140 = scmp.eq.s32.totalorder %s11, 0
    %p141 = por %p139, %p140
    %p142 = scmp.ne.s32.totalorder %s131, %s134
    %p143 = scmp.eq.s32.totalorder %s16, 1
    %p144 = por %p142, %p143
    %p145 = scmp.ne.s32.totalorder %s134, %s135
    %p146 = scmp.eq.s32.totalorder %s16, 0
    %p147 = por %p145, %p146
    %p148 = scmp.ne.s32.totalorder %s134, %s135
    %p149 = scmp.eq.s32.totalorder %s17, 1
    %p150 = por %p148, %p149
    %p152 = scmp.ne.s32.totalorder %s135, %s151
    %p153 = scmp.eq.s32.totalorder %s17, 0
    %p154 = por %p152, %p153
    %p155 = scmp.le.s32.totalorder 1, %s11
    %p156 = scmp.lt.s32.totalorder %s11, 3
    %p157 = pnand %p155, %p156
    %p158 = pneg %p157
    // Predicated region
    $region9: #{head_module_forward.1} parent=5 // pred_check
      _
    $region10: #{head_module_forward.1} parent=5 // pred_check_branch
      %160 = sbr.rel (%p157) target = $region12
    $region11: #{head_module_forward.1} parent=5 // pred_region
      %s161 = ssub.s32 %s11, 1
      // Predicated region
      $region13: #{head_module_forward.1} parent=11 // pred_check
        %p162 = pneg %p58
      $region14: #{head_module_forward.1} parent=11 // pred_check_branch
        %164 = sbr.rel (%p162) target = $region16
      $region15: #{head_module_forward.1} parent=11 // pred_region
        _
      $region16: #{head_module_forward.1} parent=11 // pred_fallthru
        _
      // Predicated region
      $region17: #{head_module_forward.1} parent=11 // pred_check
        %p165 = pneg %p79
      $region18: #{head_module_forward.1} parent=11 // pred_check_branch
        %167 = sbr.rel (%p165) target = $region20
      $region19: #{head_module_forward.1} parent=11 // pred_region
        _
      $region20: #{head_module_forward.1} parent=11 // pred_fallthru
        _
      // Predicated region
      $region21: #{head_module_forward.1} parent=11 // pred_check
        %p168 = pneg %p100
      $region22: #{head_module_forward.1} parent=11 // pred_check_branch
        %170 = sbr.rel (%p168) target = $region24
      $region23: #{head_module_forward.1} parent=11 // pred_region
        _
      $region24: #{head_module_forward.1} parent=11 // pred_fallthru
        _
      // Predicated region
      $region25: #{head_module_forward.1} parent=11 // pred_check
        %p171 = pneg %p121
      $region26: #{head_module_forward.1} parent=11 // pred_check_branch
        %173 = sbr.rel (%p171) target = $region28
      $region27: #{head_module_forward.1} parent=11 // pred_region
        _
      $region28: #{head_module_forward.1} parent=11 // pred_fallthru
        _
    $region12: #{head_module_forward.1} parent=5 // pred_fallthru
      _
    %p174 = scmp.lt.s32.totalorder %s11, 2
    // Predicated region
    $region29: #{head_module_forward.1} parent=5 // pred_check
      %p175 = pneg %p174
    $region30: #{head_module_forward.1} parent=5 // pred_check_branch
      %177 = sbr.rel (%p175) target = $region32
    $region31: #{head_module_forward.1} parent=5 // pred_region
      // Predicated region
      $region33: #{head_module_forward.1} parent=31 // pred_check
        %p178 = pneg %p31
      $region34: #{head_module_forward.1} parent=31 // pred_check_branch
        %180 = sbr.rel (%p178) target = $region36
      $region35: #{head_module_forward.1} parent=31 // pred_region
        %p181 = scmp.lt.s32.totalorder %s11, 1
        %s182 = scalar_select %p181, %s11, 1
        %s183 = smul.addr %s182, 54
        %s184 = smul.addr %s183, 8
        %s185 = scalar_lea.vmem %s0, %s184
      $region36: #{head_module_forward.1} parent=31 // pred_fallthru
        _
    $region32: #{head_module_forward.1} parent=5 // pred_fallthru
      _
    %p186 = scmp.le.s32.totalorder 1, %s11
    %p187 = scmp.lt.s32.totalorder %s11, 3
    %p188 = pnand %p186, %p187
    %p189 = pneg %p188
    // Predicated region
    $region37: #{head_module_forward.1} parent=5 // pred_check
      _
    $region38: #{head_module_forward.1} parent=5 // pred_check_branch
      %191 = sbr.rel (%p188) target = $region40
    $region39: #{head_module_forward.1} parent=5 // pred_region
      %s192 = ssub.s32 %s11, 1
      %p193 = scmp.lt.s32.totalorder %s16, 1
      %s194 = scalar_select %p193, %s16, 1
      %s195 = smul.addr %s194, 54
      %s196 = smul.addr %s195, 8
      %s197 = scalar_lea.vmem %s0, %s196
      %p198 = pneg %p37
      %p199 = pneg %p34
      %p200 = pneg %p58
      %p201 = pneg %p55
      %p202 = pneg %p79
      %p203 = pneg %p76
      %p204 = pneg %p100
      %p205 = pneg %p97
      %p206 = pneg %p121
      %p207 = pneg %p118
      %p208 = pneg %p147
      %p209 = pneg %p144
      %p210 = scmp.lt.s32.totalorder %s16, 1
      %s211 = scalar_select %p210, %s16, 1
      %s212 = smul.addr %s211, 32
      %s213 = smul.addr %s212, 8
      %s214 = scalar_lea.vmem %s5, %s213
      %p215 = scmp.lt.s32.totalorder %s16, 1
      %s216 = scalar_select %p215, %s16, 1
      %s217 = smul.addr %s216, 54
      %s218 = smul.addr %s217, 8
      %s219 = scalar_lea.vmem %s0, %s218
      %p220 = scmp.lt.s32.totalorder %s16, 1
      %s221 = scalar_select %p220, %s16, 1
      %s222 = smul.addr %s221, 32
      %s223 = smul.addr %s222, 8
      %s224 = scalar_lea.vmem %s5, %s223
      %v226 = vld [vmem:[%s219] sm:$0xff]
      %v227 = vld [vmem:[%s219 + $0x8] sm:$0xff]
      %v228 = vld [vmem:[%s219 + $0x18] sm:$0xff]
      %v229 = vld [vmem:[%s219 + $0x20] sm:$0xff]
      %v230 = vld [vmem:[%s219 + $0x30] sm:$0xff]
      %v231 = vld [vmem:[%s219 + $0x38] sm:$0xff]
      %v232 = vld [vmem:[%s219 + $0x48] sm:$0xff]
      %v233 = vld [vmem:[%s219 + $0x50] sm:$0xff]
      %v234 = vld [vmem:[%s219 + $0x60] sm:$0xff]
      %v235 = vld [vmem:[%s219 + $0x68] sm:$0xff]
      %v236 = vld [vmem:[%s219 + $0x78] sm:$0xff]
      %v237 = vld [vmem:[%s219 + $0x80] sm:$0xff]
      %v238 = vld [vmem:[%s219 + $0x90] sm:$0xff]
      %v239 = vld [vmem:[%s219 + $0x98] sm:$0xff]
      %v240 = vld [vmem:[%s219 + $0xa8] sm:$0xff]
      %v241 = vld [vmem:[%s219 + $0xb0] sm:$0xff]
      %v242 = vld [vmem:[%s219 + $0xc0] sm:$0xff]
      %v243 = vld [vmem:[%s219 + $0xc8] sm:$0xff]
      %v244 = vld [vmem:[%s219 + $0xd8] sm:$0xff]
      %v245 = vld [vmem:[%s219 + $0xe0] sm:$0xff]
      %v246 = vld [vmem:[%s219 + $0xf0] sm:$0xff]
      %v247 = vld [vmem:[%s219 + $0xf8] sm:$0xff]
      %v248 = vld [vmem:[%s219 + $0x108] sm:$0xff]
      %v249 = vld [vmem:[%s219 + $0x110] sm:$0xff]
      %v250 = vld [vmem:[%s219 + $0x120] sm:$0xff]
      %v251 = vld [vmem:[%s219 + $0x128] sm:$0xff]
      %v252 = vld [vmem:[%s219 + $0x138] sm:$0xff]
      %v253 = vld [vmem:[%s219 + $0x140] sm:$0xff]
      %v254 = vld [vmem:[%s219 + $0x150] sm:$0xff]
      %v255 = vld [vmem:[%s219 + $0x158] sm:$0xff]
      %v256 = vld [vmem:[%s219 + $0x168] sm:$0xff]
      %v257 = vld [vmem:[%s219 + $0x170] sm:$0xff]
      %v258 = vpack.c.bf16 %v227, %v226
      %v259 = vpack.c.bf16 %v229, %v228
      %v260 = vpack.c.bf16 %v231, %v230
      %v261 = vpack.c.bf16 %v233, %v232
      %v262 = vpack.c.bf16 %v235, %v234
      %v263 = vpack.c.bf16 %v237, %v236
      %v264 = vpack.c.bf16 %v239, %v238
      %v265 = vpack.c.bf16 %v241, %v240
      %v266 = vpack.c.bf16 %v243, %v242
      %v267 = vpack.c.bf16 %v245, %v244
      %v268 = vpack.c.bf16 %v247, %v246
      %v269 = vpack.c.bf16 %v249, %v248
      %v270 = vpack.c.bf16 %v251, %v250
      %v271 = vpack.c.bf16 %v253, %v252
      %v272 = vpack.c.bf16 %v255, %v254
      %v273 = vpack.c.bf16 %v257, %v256
      %v274 = vld [vmem:[%s1] sm:$0xf]
      %v275 = vld [vmem:[%s1 + $0x4] sm:$0xf]
      %v276 = vld [vmem:[%s219 + $0x1] sm:$0xff]
      %v277 = vld [vmem:[%s219 + $0x9] sm:$0xff]
      %v278 = vld [vmem:[%s219 + $0x19] sm:$0xff]
      %v279 = vld [vmem:[%s219 + $0x21] sm:$0xff]
      %v280 = vld [vmem:[%s219 + $0x31] sm:$0xff]
      %v281 = vld [vmem:[%s219 + $0x39] sm:$0xff]
      %v282 = vld [vmem:[%s219 + $0x49] sm:$0xff]
      %v283 = vld [vmem:[%s219 + $0x51] sm:$0xff]
      %v284 = vld [vmem:[%s219 + $0x61] sm:$0xff]
      %v285 = vld [vmem:[%s219 + $0x69] sm:$0xff]
      %v286 = vld [vmem:[%s219 + $0x79] sm:$0xff]
      %v287 = vld [vmem:[%s219 + $0x81] sm:$0xff]
      %v288 = vld [vmem:[%s219 + $0x91] sm:$0xff]
      %v289 = vld [vmem:[%s219 + $0x99] sm:$0xff]
      %v290 = vld [vmem:[%s219 + $0xa9] sm:$0xff]
      %v291 = vld [vmem:[%s219 + $0xb1] sm:$0xff]
      %v292 = vld [vmem:[%s219 + $0xc1] sm:$0xff]
      %v293 = vld [vmem:[%s219 + $0xc9] sm:$0xff]
      %v294 = vld [vmem:[%s219 + $0xd9] sm:$0xff]
      %v295 = vld [vmem:[%s219 + $0xe1] sm:$0xff]
      %v296 = vld [vmem:[%s219 + $0xf1] sm:$0xff]
      %v297 = vld [vmem:[%s219 + $0xf9] sm:$0xff]
      %v298 = vld [vmem:[%s219 + $0x109] sm:$0xff]
      %v299 = vld [vmem:[%s219 + $0x111] sm:$0xff]
      %v300 = vld [vmem:[%s219 + $0x121] sm:$0xff]
      %v301 = vld [vmem:[%s219 + $0x129] sm:$0xff]
      %v302 = vld [vmem:[%s219 + $0x139] sm:$0xff]
      %v303 = vld [vmem:[%s219 + $0x141] sm:$0xff]
      %v304 = vld [vmem:[%s219 + $0x151] sm:$0xff]
      %v305 = vld [vmem:[%s219 + $0x159] sm:$0xff]
      %v306 = vld [vmem:[%s219 + $0x169] sm:$0xff]
      %v307 = vld [vmem:[%s219 + $0x171] sm:$0xff]
      %v308 = vpack.c.bf16 %v277, %v276
      %v309 = vpack.c.bf16 %v279, %v278
      %v310 = vpack.c.bf16 %v281, %v280
      %v311 = vpack.c.bf16 %v283, %v282
      %v312 = vpack.c.bf16 %v285, %v284
      %v313 = vpack.c.bf16 %v287, %v286
      %v314 = vpack.c.bf16 %v289, %v288
      %v315 = vpack.c.bf16 %v291, %v290
      %v316 = vpack.c.bf16 %v293, %v292
      %v317 = vpack.c.bf16 %v295, %v294
      %v318 = vpack.c.bf16 %v297, %v296
      %v319 = vpack.c.bf16 %v299, %v298
      %v320 = vpack.c.bf16 %v301, %v300
      %v321 = vpack.c.bf16 %v303, %v302
      %v322 = vpack.c.bf16 %v305, %v304
      %v323 = vpack.c.bf16 %v307, %v306
      %s324 = scalar_lea.vmem %s1, 8
      %v325 = vld [vmem:[%s324] sm:$0xf]
      %v326 = vld [vmem:[%s324 + $0x4] sm:$0xf]
      %v329 = vunpack.c.l.b16 %v325
      %v330 = vunpack.c.l.b16 %v326
      %v331 = vpack.c.b16 %v330, %v329
      %vm333 = vcmask 130048
      %v335 = vsel %vm333, %v308, 0
      %v338 = vsel %vm333, %v309, 0
      %v341 = vsel %vm333, %v310, 0
      %v344 = vsel %vm333, %v311, 0
      %v347 = vsel %vm333, %v312, 0
      %v350 = vsel %vm333, %v313, 0
      %v353 = vsel %vm333, %v314, 0
      %v356 = vsel %vm333, %v315, 0
      %v359 = vsel %vm333, %v316, 0
      %v362 = vsel %vm333, %v317, 0
      %v365 = vsel %vm333, %v318, 0
      %v368 = vsel %vm333, %v319, 0
      %v371 = vsel %vm333, %v320, 0
      %v374 = vsel %vm333, %v321, 0
      %v377 = vsel %vm333, %v322, 0
      %v380 = vsel %vm333, %v323, 0
      %382 = vmatprep.subr.bf16.mxu0 0
      %383 = vmatpush1.bf16.msra.mxu0 0
      %384 = vmatprep.subr.bf16.mxu0 0
      %385 = vmatpush1.bf16.msra.mxu0 0
      %386 = vmatprep.subr.bf16.mxu0 0
      %387 = vmatpush1.bf16.msra.mxu0 0
      %388 = vmatprep.subr.bf16.mxu0 0
      %389 = vmatpush1.bf16.msra.mxu0 0
      %390 = vmatprep.subr.bf16.mxu0 0
      %391 = vmatpush1.bf16.msra.mxu0 0
      %392 = vmatprep.subr.bf16.mxu0 0
      %393 = vmatpush1.bf16.msra.mxu0 0
      %394 = vmatprep.subr.bf16.mxu0 0
      %395 = vmatpush1.bf16.msra.mxu0 0
      %396 = vmatprep.subr.bf16.mxu0 0
      %397 = vmatpush1.bf16.msra.mxu0 %v331
      %398 = vmatprep.subr.bf16.mxu0 0
      %399 = vmatpush2.bf16.msra.mxu0 0
      %400 = vmatprep.subr.bf16.mxu0 0
      %401 = vmatpush2.bf16.msra.mxu0 0
      %402 = vmatprep.subr.bf16.mxu0 0
      %403 = vmatpush2.bf16.msra.mxu0 0
      %404 = vmatprep.subr.bf16.mxu0 0
      %405 = vmatpush2.bf16.msra.mxu0 0
      %406 = vmatprep.subr.bf16.mxu0 0
      %407 = vmatpush2.bf16.msra.mxu0 0
      %408 = vmatprep.subr.bf16.mxu0 0
      %409 = vmatpush2.bf16.msra.mxu0 0
      %410 = vmatprep.subr.bf16.mxu0 0
      %411 = vmatpush2.bf16.msra.mxu0 0
      %412 = vmatprep.subr.bf16.mxu0 0
      %413 = vmatpush2.bf16.msra.mxu0 0
      %414 = vmatprep.mubr.bf16.mxu0 0
      %415 = vmatmul.mubr.bf16.gmra.mxu0 %v335
      %v416 = vpop.f32.mrf.mxu0
      %v417 = vadd.f32 0.0, %v416
      %v418 = vpop.f32.mrf.mxu0
      %v419 = vpop.f32.mrf.mxu0
      %v420 = vadd.f32 0.0, %v419
      %v421 = vpop.f32.mrf.mxu0
      %422 = vmatprep.mubr.bf16.mxu0 0
      %423 = vmatmul.mubr.bf16.gmra.mxu0 %v338
      %v424 = vpop.f32.mrf.mxu0
      %v425 = vadd.f32 0.0, %v424
      %v426 = vpop.f32.mrf.mxu0
      %v427 = vpop.f32.mrf.mxu0
      %v428 = vadd.f32 0.0, %v427
      %v429 = vpop.f32.mrf.mxu0
      %430 = vmatprep.mubr.bf16.mxu0 0
      %431 = vmatmul.mubr.bf16.gmra.mxu0 %v341
      %v432 = vpop.f32.mrf.mxu0
      %v433 = vadd.f32 0.0, %v432
      %v434 = vpop.f32.mrf.mxu0
      %v435 = vpop.f32.mrf.mxu0
      %v436 = vadd.f32 0.0, %v435
      %v437 = vpop.f32.mrf.mxu0
      %438 = vmatprep.mubr.bf16.mxu0 0
      %439 = vmatmul.mubr.bf16.gmra.mxu0 %v344
      %v440 = vpop.f32.mrf.mxu0
      %v441 = vadd.f32 0.0, %v440
      %v442 = vpop.f32.mrf.mxu0
      %v443 = vpop.f32.mrf.mxu0
      %v444 = vadd.f32 0.0, %v443
      %v445 = vpop.f32.mrf.mxu0
      %446 = vmatprep.mubr.bf16.mxu0 0
      %447 = vmatmul.mubr.bf16.gmra.mxu0 %v347
      %v448 = vpop.f32.mrf.mxu0
      %v449 = vadd.f32 0.0, %v448
      %v450 = vpop.f32.mrf.mxu0
      %v451 = vpop.f32.mrf.mxu0
      %v452 = vadd.f32 0.0, %v451
      %v453 = vpop.f32.mrf.mxu0
      %454 = vmatprep.mubr.bf16.mxu0 0
      %455 = vmatmul.mubr.bf16.gmra.mxu0 %v350
      %v456 = vpop.f32.mrf.mxu0
      %v457 = vadd.f32 0.0, %v456
      %v458 = vpop.f32.mrf.mxu0
      %v459 = vpop.f32.mrf.mxu0
      %v460 = vadd.f32 0.0, %v459
      %v461 = vpop.f32.mrf.mxu0
      %462 = vmatprep.mubr.bf16.mxu0 0
      %463 = vmatmul.mubr.bf16.gmra.mxu0 %v353
      %v464 = vpop.f32.mrf.mxu0
      %v465 = vadd.f32 0.0, %v464
      %v466 = vpop.f32.mrf.mxu0
      %v467 = vpop.f32.mrf.mxu0
      %v468 = vadd.f32 0.0, %v467
      %v469 = vpop.f32.mrf.mxu0
      %470 = vmatprep.mubr.bf16.mxu0 0
      %471 = vmatmul.mubr.bf16.gmra.mxu0 %v356
      %v472 = vpop.f32.mrf.mxu0
      %v473 = vadd.f32 0.0, %v472
      %v474 = vpop.f32.mrf.mxu0
      %v475 = vpop.f32.mrf.mxu0
      %v476 = vadd.f32 0.0, %v475
      %v477 = vpop.f32.mrf.mxu0
      %478 = vmatprep.mubr.bf16.mxu0 0
      %479 = vmatmul.mubr.bf16.gmra.mxu0 %v359
      %v480 = vpop.f32.mrf.mxu0
      %v481 = vadd.f32 0.0, %v480
      %v482 = vpop.f32.mrf.mxu0
      %v483 = vpop.f32.mrf.mxu0
      %v484 = vadd.f32 0.0, %v483
      %v485 = vpop.f32.mrf.mxu0
      %486 = vmatprep.mubr.bf16.mxu0 0
      %487 = vmatmul.mubr.bf16.gmra.mxu0 %v362
      %v488 = vpop.f32.mrf.mxu0
      %v489 = vadd.f32 0.0, %v488
      %v490 = vpop.f32.mrf.mxu0
      %v491 = vpop.f32.mrf.mxu0
      %v492 = vadd.f32 0.0, %v491
      %v493 = vpop.f32.mrf.mxu0
      %494 = vmatprep.mubr.bf16.mxu0 0
      %495 = vmatmul.mubr.bf16.gmra.mxu0 %v365
      %v496 = vpop.f32.mrf.mxu0
      %v497 = vadd.f32 0.0, %v496
      %v498 = vpop.f32.mrf.mxu0
      %v499 = vpop.f32.mrf.mxu0
      %v500 = vadd.f32 0.0, %v499
      %v501 = vpop.f32.mrf.mxu0
      %502 = vmatprep.mubr.bf16.mxu0 0
      %503 = vmatmul.mubr.bf16.gmra.mxu0 %v368
      %v504 = vpop.f32.mrf.mxu0
      %v505 = vadd.f32 0.0, %v504
      %v506 = vpop.f32.mrf.mxu0
      %v507 = vpop.f32.mrf.mxu0
      %v508 = vadd.f32 0.0, %v507
      %v509 = vpop.f32.mrf.mxu0
      %510 = vmatprep.mubr.bf16.mxu0 0
      %511 = vmatmul.mubr.bf16.gmra.mxu0 %v371
      %v512 = vpop.f32.mrf.mxu0
      %v513 = vadd.f32 0.0, %v512
      %v514 = vpop.f32.mrf.mxu0
      %v515 = vpop.f32.mrf.mxu0
      %v516 = vadd.f32 0.0, %v515
      %v517 = vpop.f32.mrf.mxu0
      %518 = vmatprep.mubr.bf16.mxu0 0
      %519 = vmatmul.mubr.bf16.gmra.mxu0 %v374
      %v520 = vpop.f32.mrf.mxu0
      %v521 = vadd.f32 0.0, %v520
      %v522 = vpop.f32.mrf.mxu0
      %v523 = vpop.f32.mrf.mxu0
      %v524 = vadd.f32 0.0, %v523
      %v525 = vpop.f32.mrf.mxu0
      %526 = vmatprep.mubr.bf16.mxu0 0
      %527 = vmatmul.mubr.bf16.gmra.mxu0 %v377
      %v528 = vpop.f32.mrf.mxu0
      %v529 = vadd.f32 0.0, %v528
      %v530 = vpop.f32.mrf.mxu0
      %v531 = vpop.f32.mrf.mxu0
      %v532 = vadd.f32 0.0, %v531
      %v533 = vpop.f32.mrf.mxu0
      %534 = vmatprep.mubr.bf16.mxu0 0
      %535 = vmatmul.mubr.bf16.gmra.mxu0 %v380
      %v536 = vpop.f32.mrf.mxu0
      %v537 = vadd.f32 0.0, %v536
      %v538 = vpop.f32.mrf.mxu0
      %v539 = vpop.f32.mrf.mxu0
      %v540 = vadd.f32 0.0, %v539
      %v541 = vpop.f32.mrf.mxu0
      %542 = vdwg.mxu0
      %v545 = vunpack.c.l.b16 %v274
      %v546 = vunpack.c.l.b16 %v275
      %v547 = vpack.c.b16 %v546, %v545
      %v550 = vsel %vm333, %v258, 0
      %v553 = vsel %vm333, %v259, 0
      %v556 = vsel %vm333, %v260, 0
      %v559 = vsel %vm333, %v261, 0
      %v562 = vsel %vm333, %v262, 0
      %v565 = vsel %vm333, %v263, 0
      %v568 = vsel %vm333, %v264, 0
      %v571 = vsel %vm333, %v265, 0
      %v574 = vsel %vm333, %v266, 0
      %v577 = vsel %vm333, %v267, 0
      %v580 = vsel %vm333, %v268, 0
      %v583 = vsel %vm333, %v269, 0
      %v586 = vsel %vm333, %v270, 0
      %v589 = vsel %vm333, %v271, 0
      %v592 = vsel %vm333, %v272, 0
      %v595 = vsel %vm333, %v273, 0
      %597 = vmatprep.subr.bf16.mxu0 0
      %598 = vmatpush1.bf16.msra.mxu0 0
      %599 = vmatprep.subr.bf16.mxu0 0
      %600 = vmatpush1.bf16.msra.mxu0 0
      %601 = vmatprep.subr.bf16.mxu0 0
      %602 = vmatpush1.bf16.msra.mxu0 0
      %603 = vmatprep.subr.bf16.mxu0 0
      %604 = vmatpush1.bf16.msra.mxu0 0
      %605 = vmatprep.subr.bf16.mxu0 0
      %606 = vmatpush1.bf16.msra.mxu0 0
      %607 = vmatprep.subr.bf16.mxu0 0
      %608 = vmatpush1.bf16.msra.mxu0 0
      %609 = vmatprep.subr.bf16.mxu0 0
      %610 = vmatpush1.bf16.msra.mxu0 0
      %611 = vmatprep.subr.bf16.mxu0 0
      %612 = vmatpush1.bf16.msra.mxu0 %v547
      %613 = vmatprep.subr.bf16.mxu0 0
      %614 = vmatpush2.bf16.msra.mxu0 0
      %615 = vmatprep.subr.bf16.mxu0 0
      %616 = vmatpush2.bf16.msra.mxu0 0
      %617 = vmatprep.subr.bf16.mxu0 0
      %618 = vmatpush2.bf16.msra.mxu0 0
      %619 = vmatprep.subr.bf16.mxu0 0
      %620 = vmatpush2.bf16.msra.mxu0 0
      %621 = vmatprep.subr.bf16.mxu0 0
      %622 = vmatpush2.bf16.msra.mxu0 0
      %623 = vmatprep.subr.bf16.mxu0 0
      %624 = vmatpush2.bf16.msra.mxu0 0
      %625 = vmatprep.subr.bf16.mxu0 0
      %626 = vmatpush2.bf16.msra.mxu0 0
      %627 = vmatprep.subr.bf16.mxu0 0
      %628 = vmatpush2.bf16.msra.mxu0 0
      %629 = vmatprep.mubr.bf16.mxu0 0
      %630 = vmatmul.mubr.bf16.gmra.mxu0 %v550
      %v631 = vpop.f32.mrf.mxu0
      %v632 = vadd.f32 %v417, %v631
      %v633 = vpop.f32.mrf.mxu0
      %v634 = vpop.f32.mrf.mxu0
      %v635 = vadd.f32 %v420, %v634
      %v636 = vpop.f32.mrf.mxu0
      %637 = vmatprep.mubr.bf16.mxu0 0
      %638 = vmatmul.mubr.bf16.gmra.mxu0 %v553
      %v639 = vpop.f32.mrf.mxu0
      %v640 = vadd.f32 %v425, %v639
      %v641 = vpop.f32.mrf.mxu0
      %v642 = vpop.f32.mrf.mxu0
      %v643 = vadd.f32 %v428, %v642
      %v644 = vpop.f32.mrf.mxu0
      %645 = vmatprep.mubr.bf16.mxu0 0
      %646 = vmatmul.mubr.bf16.gmra.mxu0 %v556
      %v647 = vpop.f32.mrf.mxu0
      %v648 = vadd.f32 %v433, %v647
      %v649 = vpop.f32.mrf.mxu0
      %v650 = vpop.f32.mrf.mxu0
      %v651 = vadd.f32 %v436, %v650
      %v652 = vpop.f32.mrf.mxu0
      %653 = vmatprep.mubr.bf16.mxu0 0
      %654 = vmatmul.mubr.bf16.gmra.mxu0 %v559
      %v655 = vpop.f32.mrf.mxu0
      %v656 = vadd.f32 %v441, %v655
      %v657 = vpop.f32.mrf.mxu0
      %v658 = vpop.f32.mrf.mxu0
      %v659 = vadd.f32 %v444, %v658
      %v660 = vpop.f32.mrf.mxu0
      %661 = vmatprep.mubr.bf16.mxu0 0
      %662 = vmatmul.mubr.bf16.gmra.mxu0 %v562
      %v663 = vpop.f32.mrf.mxu0
      %v664 = vadd.f32 %v449, %v663
      %v665 = vpop.f32.mrf.mxu0
      %v666 = vpop.f32.mrf.mxu0
      %v667 = vadd.f32 %v452, %v666
      %v668 = vpop.f32.mrf.mxu0
      %669 = vmatprep.mubr.bf16.mxu0 0
      %670 = vmatmul.mubr.bf16.gmra.mxu0 %v565
      %v671 = vpop.f32.mrf.mxu0
      %v672 = vadd.f32 %v457, %v671
      %v673 = vpop.f32.mrf.mxu0
      %v674 = vpop.f32.mrf.mxu0
      %v675 = vadd.f32 %v460, %v674
      %v676 = vpop.f32.mrf.mxu0
      %677 = vmatprep.mubr.bf16.mxu0 0
      %678 = vmatmul.mubr.bf16.gmra.mxu0 %v568
      %v679 = vpop.f32.mrf.mxu0
      %v680 = vadd.f32 %v465, %v679
      %v681 = vpop.f32.mrf.mxu0
      %v682 = vpop.f32.mrf.mxu0
      %v683 = vadd.f32 %v468, %v682
      %v684 = vpop.f32.mrf.mxu0
      %685 = vmatprep.mubr.bf16.mxu0 0
      %686 = vmatmul.mubr.bf16.gmra.mxu0 %v571
      %v687 = vpop.f32.mrf.mxu0
      %v688 = vadd.f32 %v473, %v687
      %v689 = vpop.f32.mrf.mxu0
      %v690 = vpop.f32.mrf.mxu0
      %v691 = vadd.f32 %v476, %v690
      %v692 = vpop.f32.mrf.mxu0
      %693 = vmatprep.mubr.bf16.mxu0 0
      %694 = vmatmul.mubr.bf16.gmra.mxu0 %v574
      %v695 = vpop.f32.mrf.mxu0
      %v696 = vadd.f32 %v481, %v695
      %v697 = vpop.f32.mrf.mxu0
      %v698 = vpop.f32.mrf.mxu0
      %v699 = vadd.f32 %v484, %v698
      %v700 = vpop.f32.mrf.mxu0
      %701 = vmatprep.mubr.bf16.mxu0 0
      %702 = vmatmul.mubr.bf16.gmra.mxu0 %v577
      %v703 = vpop.f32.mrf.mxu0
      %v704 = vadd.f32 %v489, %v703
      %v705 = vpop.f32.mrf.mxu0
      %v706 = vpop.f32.mrf.mxu0
      %v707 = vadd.f32 %v492, %v706
      %v708 = vpop.f32.mrf.mxu0
      %709 = vmatprep.mubr.bf16.mxu0 0
      %710 = vmatmul.mubr.bf16.gmra.mxu0 %v580
      %v711 = vpop.f32.mrf.mxu0
      %v712 = vadd.f32 %v497, %v711
      %v713 = vpop.f32.mrf.mxu0
      %v714 = vpop.f32.mrf.mxu0
      %v715 = vadd.f32 %v500, %v714
      %v716 = vpop.f32.mrf.mxu0
      %717 = vmatprep.mubr.bf16.mxu0 0
      %718 = vmatmul.mubr.bf16.gmra.mxu0 %v583
      %v719 = vpop.f32.mrf.mxu0
      %v720 = vadd.f32 %v505, %v719
      %v721 = vpop.f32.mrf.mxu0
      %v722 = vpop.f32.mrf.mxu0
      %v723 = vadd.f32 %v508, %v722
      %v724 = vpop.f32.mrf.mxu0
      %725 = vmatprep.mubr.bf16.mxu0 0
      %726 = vmatmul.mubr.bf16.gmra.mxu0 %v586
      %v727 = vpop.f32.mrf.mxu0
      %v728 = vadd.f32 %v513, %v727
      %v729 = vpop.f32.mrf.mxu0
      %v730 = vpop.f32.mrf.mxu0
      %v731 = vadd.f32 %v516, %v730
      %v732 = vpop.f32.mrf.mxu0
      %733 = vmatprep.mubr.bf16.mxu0 0
      %734 = vmatmul.mubr.bf16.gmra.mxu0 %v589
      %v735 = vpop.f32.mrf.mxu0
      %v736 = vadd.f32 %v521, %v735
      %v737 = vpop.f32.mrf.mxu0
      %v738 = vpop.f32.mrf.mxu0
      %v739 = vadd.f32 %v524, %v738
      %v740 = vpop.f32.mrf.mxu0
      %741 = vmatprep.mubr.bf16.mxu0 0
      %742 = vmatmul.mubr.bf16.gmra.mxu0 %v592
      %v743 = vpop.f32.mrf.mxu0
      %v744 = vadd.f32 %v529, %v743
      %v745 = vpop.f32.mrf.mxu0
      %v746 = vpop.f32.mrf.mxu0
      %v747 = vadd.f32 %v532, %v746
      %v748 = vpop.f32.mrf.mxu0
      %749 = vmatprep.mubr.bf16.mxu0 0
      %750 = vmatmul.mubr.bf16.gmra.mxu0 %v595
      %v751 = vpop.f32.mrf.mxu0
      %v752 = vadd.f32 %v537, %v751
      %v753 = vpop.f32.mrf.mxu0
      %v754 = vpop.f32.mrf.mxu0
      %v755 = vadd.f32 %v540, %v754
      %v756 = vpop.f32.mrf.mxu0
      %757 = vdwg.mxu0
      %v758 = vld [vmem:[%s219 + $0x2] sm:$0xff]
      %v759 = vld [vmem:[%s219 + $0xa] sm:$0xff]
      %v760 = vld [vmem:[%s219 + $0x1a] sm:$0xff]
      %v761 = vld [vmem:[%s219 + $0x22] sm:$0xff]
      %v762 = vld [vmem:[%s219 + $0x32] sm:$0xff]
      %v763 = vld [vmem:[%s219 + $0x3a] sm:$0xff]
      %v764 = vld [vmem:[%s219 + $0x4a] sm:$0xff]
      %v765 = vld [vmem:[%s219 + $0x52] sm:$0xff]
      %v766 = vld [vmem:[%s219 + $0x62] sm:$0xff]
      %v767 = vld [vmem:[%s219 + $0x6a] sm:$0xff]
      %v768 = vld [vmem:[%s219 + $0x7a] sm:$0xff]
      %v769 = vld [vmem:[%s219 + $0x82] sm:$0xff]
      %v770 = vld [vmem:[%s219 + $0x92] sm:$0xff]
      %v771 = vld [vmem:[%s219 + $0x9a] sm:$0xff]
      %v772 = vld [vmem:[%s219 + $0xaa] sm:$0xff]
      %v773 = vld [vmem:[%s219 + $0xb2] sm:$0xff]
      %v774 = vld [vmem:[%s219 + $0xc2] sm:$0xff]
      %v775 = vld [vmem:[%s219 + $0xca] sm:$0xff]
      %v776 = vld [vmem:[%s219 + $0xda] sm:$0xff]
      %v777 = vld [vmem:[%s219 + $0xe2] sm:$0xff]
      %v778 = vld [vmem:[%s219 + $0xf2] sm:$0xff]
      %v779 = vld [vmem:[%s219 + $0xfa] sm:$0xff]
      %v780 = vld [vmem:[%s219 + $0x10a] sm:$0xff]
      %v781 = vld [vmem:[%s219 + $0x112] sm:$0xff]
      %v782 = vld [vmem:[%s219 + $0x122] sm:$0xff]
      %v783 = vld [vmem:[%s219 + $0x12a] sm:$0xff]
      %v784 = vld [vmem:[%s219 + $0x13a] sm:$0xff]
      %v785 = vld [vmem:[%s219 + $0x142] sm:$0xff]
      %v786 = vld [vmem:[%s219 + $0x152] sm:$0xff]
      %v787 = vld [vmem:[%s219 + $0x15a] sm:$0xff]
      %v788 = vld [vmem:[%s219 + $0x16a] sm:$0xff]
      %v789 = vld [vmem:[%s219 + $0x172] sm:$0xff]
      %v790 = vpack.c.bf16 %v759, %v758
      %v791 = vpack.c.bf16 %v761, %v760
      %v792 = vpack.c.bf16 %v763, %v762
      %v793 = vpack.c.bf16 %v765, %v764
      %v794 = vpack.c.bf16 %v767, %v766
      %v795 = vpack.c.bf16 %v769, %v768
      %v796 = vpack.c.bf16 %v771, %v770
      %v797 = vpack.c.bf16 %v773, %v772
      %v798 = vpack.c.bf16 %v775, %v774
      %v799 = vpack.c.bf16 %v777, %v776
      %v800 = vpack.c.bf16 %v779, %v778
      %v801 = vpack.c.bf16 %v781, %v780
      %v802 = vpack.c.bf16 %v783, %v782
      %v803 = vpack.c.bf16 %v785, %v784
      %v804 = vpack.c.bf16 %v787, %v786
      %v805 = vpack.c.bf16 %v789, %v788
      %s806 = scalar_lea.vmem %s1, 16
      %v807 = vld [vmem:[%s806] sm:$0xf]
      %v808 = vld [vmem:[%s806 + $0x4] sm:$0xf]
      %v811 = vunpack.c.l.b16 %v807
      %v812 = vunpack.c.l.b16 %v808
      %v813 = vpack.c.b16 %v812, %v811
      %v816 = vsel %vm333, %v790, 0
      %v819 = vsel %vm333, %v791, 0
      %v822 = vsel %vm333, %v792, 0
      %v825 = vsel %vm333, %v793, 0
      %v828 = vsel %vm333, %v794, 0
      %v831 = vsel %vm333, %v795, 0
      %v834 = vsel %vm333, %v796, 0
      %v837 = vsel %vm333, %v797, 0
      %v840 = vsel %vm333, %v798, 0
      %v843 = vsel %vm333, %v799, 0
      %v846 = vsel %vm333, %v800, 0
      %v849 = vsel %vm333, %v801, 0
      %v852 = vsel %vm333, %v802, 0
      %v855 = vsel %vm333, %v803, 0
      %v858 = vsel %vm333, %v804, 0
      %v861 = vsel %vm333, %v805, 0
      %863 = vmatprep.subr.bf16.mxu0 0
      %864 = vmatpush1.bf16.msra.mxu0 0
      %865 = vmatprep.subr.bf16.mxu0 0
      %866 = vmatpush1.bf16.msra.mxu0 0
      %867 = vmatprep.subr.bf16.mxu0 0
      %868 = vmatpush1.bf16.msra.mxu0 0
      %869 = vmatprep.subr.bf16.mxu0 0
      %870 = vmatpush1.bf16.msra.mxu0 0
      %871 = vmatprep.subr.bf16.mxu0 0
      %872 = vmatpush1.bf16.msra.mxu0 0
      %873 = vmatprep.subr.bf16.mxu0 0
      %874 = vmatpush1.bf16.msra.mxu0 0
      %875 = vmatprep.subr.bf16.mxu0 0
      %876 = vmatpush1.bf16.msra.mxu0 0
      %877 = vmatprep.subr.bf16.mxu0 0
      %878 = vmatpush1.bf16.msra.mxu0 %v813
      %879 = vmatprep.subr.bf16.mxu0 0
      %880 = vmatpush2.bf16.msra.mxu0 0
      %881 = vmatprep.subr.bf16.mxu0 0
      %882 = vmatpush2.bf16.msra.mxu0 0
      %883 = vmatprep.subr.bf16.mxu0 0
      %884 = vmatpush2.bf16.msra.mxu0 0
      %885 = vmatprep.subr.bf16.mxu0 0
      %886 = vmatpush2.bf16.msra.mxu0 0
      %887 = vmatprep.subr.bf16.mxu0 0
      %888 = vmatpush2.bf16.msra.mxu0 0
      %889 = vmatprep.subr.bf16.mxu0 0
      %890 = vmatpush2.bf16.msra.mxu0 0
      %891 = vmatprep.subr.bf16.mxu0 0
      %892 = vmatpush2.bf16.msra.mxu0 0
      %893 = vmatprep.subr.bf16.mxu0 0
      %894 = vmatpush2.bf16.msra.mxu0 0
      %895 = vmatprep.mubr.bf16.mxu0 0
      %896 = vmatmul.mubr.bf16.gmra.mxu0 %v816
      %v897 = vpop.f32.mrf.mxu0
      %v898 = vadd.f32 0.0, %v897
      %v899 = vpop.f32.mrf.mxu0
      %v900 = vpop.f32.mrf.mxu0
      %v901 = vadd.f32 0.0, %v900
      %v902 = vpop.f32.mrf.mxu0
      %903 = vmatprep.mubr.bf16.mxu0 0
      %904 = vmatmul.mubr.bf16.gmra.mxu0 %v819
      %v905 = vpop.f32.mrf.mxu0
      %v906 = vadd.f32 0.0, %v905
      %v907 = vpop.f32.mrf.mxu0
      %v908 = vpop.f32.mrf.mxu0
      %v909 = vadd.f32 0.0, %v908
      %v910 = vpop.f32.mrf.mxu0
      %911 = vmatprep.mubr.bf16.mxu0 0
      %912 = vmatmul.mubr.bf16.gmra.mxu0 %v822
      %v913 = vpop.f32.mrf.mxu0
      %v914 = vadd.f32 0.0, %v913
      %v915 = vpop.f32.mrf.mxu0
      %v916 = vpop.f32.mrf.mxu0
      %v917 = vadd.f32 0.0, %v916
      %v918 = vpop.f32.mrf.mxu0
      %919 = vmatprep.mubr.bf16.mxu0 0
      %920 = vmatmul.mubr.bf16.gmra.mxu0 %v825
      %v921 = vpop.f32.mrf.mxu0
      %v922 = vadd.f32 0.0, %v921
      %v923 = vpop.f32.mrf.mxu0
      %v924 = vpop.f32.mrf.mxu0
      %v925 = vadd.f32 0.0, %v924
      %v926 = vpop.f32.mrf.mxu0
      %927 = vmatprep.mubr.bf16.mxu0 0
      %928 = vmatmul.mubr.bf16.gmra.mxu0 %v828
      %v929 = vpop.f32.mrf.mxu0
      %v930 = vadd.f32 0.0, %v929
      %v931 = vpop.f32.mrf.mxu0
      %v932 = vpop.f32.mrf.mxu0
      %v933 = vadd.f32 0.0, %v932
      %v934 = vpop.f32.mrf.mxu0
      %935 = vmatprep.mubr.bf16.mxu0 0
      %936 = vmatmul.mubr.bf16.gmra.mxu0 %v831
      %v937 = vpop.f32.mrf.mxu0
      %v938 = vadd.f32 0.0, %v937
      %v939 = vpop.f32.mrf.mxu0
      %v940 = vpop.f32.mrf.mxu0
      %v941 = vadd.f32 0.0, %v940
      %v942 = vpop.f32.mrf.mxu0
      %943 = vmatprep.mubr.bf16.mxu0 0
      %944 = vmatmul.mubr.bf16.gmra.mxu0 %v834
      %v945 = vpop.f32.mrf.mxu0
      %v946 = vadd.f32 0.0, %v945
      %v947 = vpop.f32.mrf.mxu0
      %v948 = vpop.f32.mrf.mxu0
      %v949 = vadd.f32 0.0, %v948
      %v950 = vpop.f32.mrf.mxu0
      %951 = vmatprep.mubr.bf16.mxu0 0
      %952 = vmatmul.mubr.bf16.gmra.mxu0 %v837
      %v953 = vpop.f32.mrf.mxu0
      %v954 = vadd.f32 0.0, %v953
      %v955 = vpop.f32.mrf.mxu0
      %v956 = vpop.f32.mrf.mxu0
      %v957 = vadd.f32 0.0, %v956
      %v958 = vpop.f32.mrf.mxu0
      %959 = vmatprep.mubr.bf16.mxu0 0
      %960 = vmatmul.mubr.bf16.gmra.mxu0 %v840
      %v961 = vpop.f32.mrf.mxu0
      %v962 = vadd.f32 0.0, %v961
      %v963 = vpop.f32.mrf.mxu0
      %v964 = vpop.f32.mrf.mxu0
      %v965 = vadd.f32 0.0, %v964
      %v966 = vpop.f32.mrf.mxu0
      %967 = vmatprep.mubr.bf16.mxu0 0
      %968 = vmatmul.mubr.bf16.gmra.mxu0 %v843
      %v969 = vpop.f32.mrf.mxu0
      %v970 = vadd.f32 0.0, %v969
      %v971 = vpop.f32.mrf.mxu0
      %v972 = vpop.f32.mrf.mxu0
      %v973 = vadd.f32 0.0, %v972
      %v974 = vpop.f32.mrf.mxu0
      %975 = vmatprep.mubr.bf16.mxu0 0
      %976 = vmatmul.mubr.bf16.gmra.mxu0 %v846
      %v977 = vpop.f32.mrf.mxu0
      %v978 = vadd.f32 0.0, %v977
      %v979 = vpop.f32.mrf.mxu0
      %v980 = vpop.f32.mrf.mxu0
      %v981 = vadd.f32 0.0, %v980
      %v982 = vpop.f32.mrf.mxu0
      %983 = vmatprep.mubr.bf16.mxu0 0
      %984 = vmatmul.mubr.bf16.gmra.mxu0 %v849
      %v985 = vpop.f32.mrf.mxu0
      %v986 = vadd.f32 0.0, %v985
      %v987 = vpop.f32.mrf.mxu0
      %v988 = vpop.f32.mrf.mxu0
      %v989 = vadd.f32 0.0, %v988
      %v990 = vpop.f32.mrf.mxu0
      %991 = vmatprep.mubr.bf16.mxu0 0
      %992 = vmatmul.mubr.bf16.gmra.mxu0 %v852
      %v993 = vpop.f32.mrf.mxu0
      %v994 = vadd.f32 0.0, %v993
      %v995 = vpop.f32.mrf.mxu0
      %v996 = vpop.f32.mrf.mxu0
      %v997 = vadd.f32 0.0, %v996
      %v998 = vpop.f32.mrf.mxu0
      %999 = vmatprep.mubr.bf16.mxu0 0
      %1000 = vmatmul.mubr.bf16.gmra.mxu0 %v855
      %v1001 = vpop.f32.mrf.mxu0
      %v1002 = vadd.f32 0.0, %v1001
      %v1003 = vpop.f32.mrf.mxu0
      %v1004 = vpop.f32.mrf.mxu0
      %v1005 = vadd.f32 0.0, %v1004
      %v1006 = vpop.f32.mrf.mxu0
      %1007 = vmatprep.mubr.bf16.mxu0 0
      %1008 = vmatmul.mubr.bf16.gmra.mxu0 %v858
      %v1009 = vpop.f32.mrf.mxu0
      %v1010 = vadd.f32 0.0, %v1009
      %v1011 = vpop.f32.mrf.mxu0
      %v1012 = vpop.f32.mrf.mxu0
      %v1013 = vadd.f32 0.0, %v1012
      %v1014 = vpop.f32.mrf.mxu0
      %1015 = vmatprep.mubr.bf16.mxu0 0
      %1016 = vmatmul.mubr.bf16.gmra.mxu0 %v861
      %v1017 = vpop.f32.mrf.mxu0
      %v1018 = vadd.f32 0.0, %v1017
      %v1019 = vpop.f32.mrf.mxu0
      %v1020 = vpop.f32.mrf.mxu0
      %v1021 = vadd.f32 0.0, %v1020
      %v1022 = vpop.f32.mrf.mxu0
      %1023 = vdwg.mxu0
      %v1024 = vadd.f32 %v632, %v898
      %v1025 = vadd.f32 %v635, %v901
      %v1026 = vadd.f32 %v640, %v906
      %v1027 = vadd.f32 %v643, %v909
      %v1028 = vadd.f32 %v648, %v914
      %v1029 = vadd.f32 %v651, %v917
      %v1030 = vadd.f32 %v656, %v922
      %v1031 = vadd.f32 %v659, %v925
      %v1032 = vadd.f32 %v664, %v930
      %v1033 = vadd.f32 %v667, %v933
      %v1034 = vadd.f32 %v672, %v938
      %v1035 = vadd.f32 %v675, %v941
      %v1036 = vadd.f32 %v680, %v946
      %v1037 = vadd.f32 %v683, %v949
      %v1038 = vadd.f32 %v688, %v954
      %v1039 = vadd.f32 %v691, %v957
      %v1040 = vadd.f32 %v696, %v962
      %v1041 = vadd.f32 %v699, %v965
      %v1042 = vadd.f32 %v704, %v970
      %v1043 = vadd.f32 %v707, %v973
      %v1044 = vadd.f32 %v712, %v978
      %v1045 = vadd.f32 %v715, %v981
      %v1046 = vadd.f32 %v720, %v986
      %v1047 = vadd.f32 %v723, %v989
      %v1048 = vadd.f32 %v728, %v994
      %v1049 = vadd.f32 %v731, %v997
      %v1050 = vadd.f32 %v736, %v1002
      %v1051 = vadd.f32 %v739, %v1005
      %v1052 = vadd.f32 %v744, %v1010
      %v1053 = vadd.f32 %v747, %v1013
      %v1054 = vadd.f32 %v752, %v1018
      %v1055 = vadd.f32 %v755, %v1021
      %s1056 = scalar_lea.vmem %s219, 24
      %v1057 = vld [vmem:[%s1056] sm:$0xff]
      %v1058 = vld [vmem:[%s1056 + $0x8] sm:$0xff]
      %v1059 = vld [vmem:[%s1056 + $0x18] sm:$0xff]
      %v1060 = vld [vmem:[%s1056 + $0x20] sm:$0xff]
      %v1061 = vld [vmem:[%s1056 + $0x30] sm:$0xff]
      %v1062 = vld [vmem:[%s1056 + $0x38] sm:$0xff]
      %v1063 = vld [vmem:[%s1056 + $0x48] sm:$0xff]
      %v1064 = vld [vmem:[%s1056 + $0x50] sm:$0xff]
      %v1065 = vld [vmem:[%s1056 + $0x60] sm:$0xff]
      %v1066 = vld [vmem:[%s1056 + $0x68] sm:$0xff]
      %v1067 = vld [vmem:[%s1056 + $0x78] sm:$0xff]
      %v1068 = vld [vmem:[%s1056 + $0x80] sm:$0xff]
      %v1069 = vld [vmem:[%s1056 + $0x90] sm:$0xff]
      %v1070 = vld [vmem:[%s1056 + $0x98] sm:$0xff]
      %v1071 = vld [vmem:[%s1056 + $0xa8] sm:$0xff]
      %v1072 = vld [vmem:[%s1056 + $0xb0] sm:$0xff]
      %v1073 = vld [vmem:[%s1056 + $0xc0] sm:$0xff]
      %v1074 = vld [vmem:[%s1056 + $0xc8] sm:$0xff]
      %v1075 = vld [vmem:[%s1056 + $0xd8] sm:$0xff]
      %v1076 = vld [vmem:[%s1056 + $0xe0] sm:$0xff]
      %v1077 = vld [vmem:[%s1056 + $0xf0] sm:$0xff]
      %v1078 = vld [vmem:[%s1056 + $0xf8] sm:$0xff]
      %v1079 = vld [vmem:[%s1056 + $0x108] sm:$0xff]
      %v1080 = vld [vmem:[%s1056 + $0x110] sm:$0xff]
      %v1081 = vld [vmem:[%s1056 + $0x120] sm:$0xff]
      %v1082 = vld [vmem:[%s1056 + $0x128] sm:$0xff]
      %v1083 = vld [vmem:[%s1056 + $0x138] sm:$0xff]
      %v1084 = vld [vmem:[%s1056 + $0x140] sm:$0xff]
      %v1085 = vld [vmem:[%s1056 + $0x150] sm:$0xff]
      %v1086 = vld [vmem:[%s1056 + $0x158] sm:$0xff]
      %v1087 = vld [vmem:[%s1056 + $0x168] sm:$0xff]
      %v1088 = vld [vmem:[%s1056 + $0x170] sm:$0xff]
      %v1089 = vpack.c.bf16 %v1058, %v1057
      %v1090 = vpack.c.bf16 %v1060, %v1059
      %v1091 = vpack.c.bf16 %v1062, %v1061
      %v1092 = vpack.c.bf16 %v1064, %v1063
      %v1093 = vpack.c.bf16 %v1066, %v1065
      %v1094 = vpack.c.bf16 %v1068, %v1067
      %v1095 = vpack.c.bf16 %v1070, %v1069
      %v1096 = vpack.c.bf16 %v1072, %v1071
      %v1097 = vpack.c.bf16 %v1074, %v1073
      %v1098 = vpack.c.bf16 %v1076, %v1075
      %v1099 = vpack.c.bf16 %v1078, %v1077
      %v1100 = vpack.c.bf16 %v1080, %v1079
      %v1101 = vpack.c.bf16 %v1082, %v1081
      %v1102 = vpack.c.bf16 %v1084, %v1083
      %v1103 = vpack.c.bf16 %v1086, %v1085
      %v1104 = vpack.c.bf16 %v1088, %v1087
      %s1105 = scalar_lea.vmem %s1, 24
      %v1106 = vld [vmem:[%s1105] sm:$0xf]
      %v1107 = vld [vmem:[%s1105 + $0x4] sm:$0xf]
      %v1110 = vunpack.c.l.b16 %v1106
      %v1111 = vunpack.c.l.b16 %v1107
      %v1112 = vpack.c.b16 %v1111, %v1110
      %v1115 = vsel %vm333, %v1089, 0
      %v1118 = vsel %vm333, %v1090, 0
      %v1121 = vsel %vm333, %v1091, 0
      %v1124 = vsel %vm333, %v1092, 0
      %v1127 = vsel %vm333, %v1093, 0
      %v1130 = vsel %vm333, %v1094, 0
      %v1133 = vsel %vm333, %v1095, 0
      %v1136 = vsel %vm333, %v1096, 0
      %v1139 = vsel %vm333, %v1097, 0
      %v1142 = vsel %vm333, %v1098, 0
      %v1145 = vsel %vm333, %v1099, 0
      %v1148 = vsel %vm333, %v1100, 0
      %v1151 = vsel %vm333, %v1101, 0
      %v1154 = vsel %vm333, %v1102, 0
      %v1157 = vsel %vm333, %v1103, 0
      %v1160 = vsel %vm333, %v1104, 0
      %1162 = vmatprep.subr.bf16.mxu0 0
      %1163 = vmatpush1.bf16.msra.mxu0 0
      %1164 = vmatprep.subr.bf16.mxu0 0
      %1165 = vmatpush1.bf16.msra.mxu0 0
      %1166 = vmatprep.subr.bf16.mxu0 0
      %1167 = vmatpush1.bf16.msra.mxu0 0
      %1168 = vmatprep.subr.bf16.mxu0 0
      %1169 = vmatpush1.bf16.msra.mxu0 0
      %1170 = vmatprep.subr.bf16.mxu0 0
      %1171 = vmatpush1.bf16.msra.mxu0 0
      %1172 = vmatprep.subr.bf16.mxu0 0
      %1173 = vmatpush1.bf16.msra.mxu0 0
      %1174 = vmatprep.subr.bf16.mxu0 0
      %1175 = vmatpush1.bf16.msra.mxu0 0
      %1176 = vmatprep.subr.bf16.mxu0 0
      %1177 = vmatpush1.bf16.msra.mxu0 %v1112
      %1178 = vmatprep.subr.bf16.mxu0 0
      %1179 = vmatpush2.bf16.msra.mxu0 0
      %1180 = vmatprep.subr.bf16.mxu0 0
      %1181 = vmatpush2.bf16.msra.mxu0 0
      %1182 = vmatprep.subr.bf16.mxu0 0
      %1183 = vmatpush2.bf16.msra.mxu0 0
      %1184 = vmatprep.subr.bf16.mxu0 0
      %1185 = vmatpush2.bf16.msra.mxu0 0
      %1186 = vmatprep.subr.bf16.mxu0 0
      %1187 = vmatpush2.bf16.msra.mxu0 0
      %1188 = vmatprep.subr.bf16.mxu0 0
      %1189 = vmatpush2.bf16.msra.mxu0 0
      %1190 = vmatprep.subr.bf16.mxu0 0
      %1191 = vmatpush2.bf16.msra.mxu0 0
      %1192 = vmatprep.subr.bf16.mxu0 0
      %1193 = vmatpush2.bf16.msra.mxu0 0
      %1194 = vmatprep.mubr.bf16.mxu0 0
      %1195 = vmatmul.mubr.bf16.gmra.mxu0 %v1115
      %v1196 = vpop.f32.mrf.mxu0
      %v1197 = vadd.f32 0.0, %v1196
      %v1198 = vpop.f32.mrf.mxu0
      %v1199 = vpop.f32.mrf.mxu0
      %v1200 = vadd.f32 0.0, %v1199
      %v1201 = vpop.f32.mrf.mxu0
      %1202 = vmatprep.mubr.bf16.mxu0 0
      %1203 = vmatmul.mubr.bf16.gmra.mxu0 %v1118
      %v1204 = vpop.f32.mrf.mxu0
      %v1205 = vadd.f32 0.0, %v1204
      %v1206 = vpop.f32.mrf.mxu0
      %v1207 = vpop.f32.mrf.mxu0
      %v1208 = vadd.f32 0.0, %v1207
      %v1209 = vpop.f32.mrf.mxu0
      %1210 = vmatprep.mubr.bf16.mxu0 0
      %1211 = vmatmul.mubr.bf16.gmra.mxu0 %v1121
      %v1212 = vpop.f32.mrf.mxu0
      %v1213 = vadd.f32 0.0, %v1212
      %v1214 = vpop.f32.mrf.mxu0
      %v1215 = vpop.f32.mrf.mxu0
      %v1216 = vadd.f32 0.0, %v1215
      %v1217 = vpop.f32.mrf.mxu0
      %1218 = vmatprep.mubr.bf16.mxu0 0
      %1219 = vmatmul.mubr.bf16.gmra.mxu0 %v1124
      %v1220 = vpop.f32.mrf.mxu0
      %v1221 = vadd.f32 0.0, %v1220
      %v1222 = vpop.f32.mrf.mxu0
      %v1223 = vpop.f32.mrf.mxu0
      %v1224 = vadd.f32 0.0, %v1223
      %v1225 = vpop.f32.mrf.mxu0
      %1226 = vmatprep.mubr.bf16.mxu0 0
      %1227 = vmatmul.mubr.bf16.gmra.mxu0 %v1127
      %v1228 = vpop.f32.mrf.mxu0
      %v1229 = vadd.f32 0.0, %v1228
      %v1230 = vpop.f32.mrf.mxu0
      %v1231 = vpop.f32.mrf.mxu0
      %v1232 = vadd.f32 0.0, %v1231
      %v1233 = vpop.f32.mrf.mxu0
      %1234 = vmatprep.mubr.bf16.mxu0 0
      %1235 = vmatmul.mubr.bf16.gmra.mxu0 %v1130
      %v1236 = vpop.f32.mrf.mxu0
      %v1237 = vadd.f32 0.0, %v1236
      %v1238 = vpop.f32.mrf.mxu0
      %v1239 = vpop.f32.mrf.mxu0
      %v1240 = vadd.f32 0.0, %v1239
      %v1241 = vpop.f32.mrf.mxu0
      %1242 = vmatprep.mubr.bf16.mxu0 0
      %1243 = vmatmul.mubr.bf16.gmra.mxu0 %v1133
      %v1244 = vpop.f32.mrf.mxu0
      %v1245 = vadd.f32 0.0, %v1244
      %v1246 = vpop.f32.mrf.mxu0
      %v1247 = vpop.f32.mrf.mxu0
      %v1248 = vadd.f32 0.0, %v1247
      %v1249 = vpop.f32.mrf.mxu0
      %1250 = vmatprep.mubr.bf16.mxu0 0
      %1251 = vmatmul.mubr.bf16.gmra.mxu0 %v1136
      %v1252 = vpop.f32.mrf.mxu0
      %v1253 = vadd.f32 0.0, %v1252
      %v1254 = vpop.f32.mrf.mxu0
      %v1255 = vpop.f32.mrf.mxu0
      %v1256 = vadd.f32 0.0, %v1255
      %v1257 = vpop.f32.mrf.mxu0
      %1258 = vmatprep.mubr.bf16.mxu0 0
      %1259 = vmatmul.mubr.bf16.gmra.mxu0 %v1139
      %v1260 = vpop.f32.mrf.mxu0
      %v1261 = vadd.f32 0.0, %v1260
      %v1262 = vpop.f32.mrf.mxu0
      %v1263 = vpop.f32.mrf.mxu0
      %v1264 = vadd.f32 0.0, %v1263
      %v1265 = vpop.f32.mrf.mxu0
      %1266 = vmatprep.mubr.bf16.mxu0 0
      %1267 = vmatmul.mubr.bf16.gmra.mxu0 %v1142
      %v1268 = vpop.f32.mrf.mxu0
      %v1269 = vadd.f32 0.0, %v1268
      %v1270 = vpop.f32.mrf.mxu0
      %v1271 = vpop.f32.mrf.mxu0
      %v1272 = vadd.f32 0.0, %v1271
      %v1273 = vpop.f32.mrf.mxu0
      %1274 = vmatprep.mubr.bf16.mxu0 0
      %1275 = vmatmul.mubr.bf16.gmra.mxu0 %v1145
      %v1276 = vpop.f32.mrf.mxu0
      %v1277 = vadd.f32 0.0, %v1276
      %v1278 = vpop.f32.mrf.mxu0
      %v1279 = vpop.f32.mrf.mxu0
      %v1280 = vadd.f32 0.0, %v1279
      %v1281 = vpop.f32.mrf.mxu0
      %1282 = vmatprep.mubr.bf16.mxu0 0
      %1283 = vmatmul.mubr.bf16.gmra.mxu0 %v1148
      %v1284 = vpop.f32.mrf.mxu0
      %v1285 = vadd.f32 0.0, %v1284
      %v1286 = vpop.f32.mrf.mxu0
      %v1287 = vpop.f32.mrf.mxu0
      %v1288 = vadd.f32 0.0, %v1287
      %v1289 = vpop.f32.mrf.mxu0
      %1290 = vmatprep.mubr.bf16.mxu0 0
      %1291 = vmatmul.mubr.bf16.gmra.mxu0 %v1151
      %v1292 = vpop.f32.mrf.mxu0
      %v1293 = vadd.f32 0.0, %v1292
      %v1294 = vpop.f32.mrf.mxu0
      %v1295 = vpop.f32.mrf.mxu0
      %v1296 = vadd.f32 0.0, %v1295
      %v1297 = vpop.f32.mrf.mxu0
      %1298 = vmatprep.mubr.bf16.mxu0 0
      %1299 = vmatmul.mubr.bf16.gmra.mxu0 %v1154
      %v1300 = vpop.f32.mrf.mxu0
      %v1301 = vadd.f32 0.0, %v1300
      %v1302 = vpop.f32.mrf.mxu0
      %v1303 = vpop.f32.mrf.mxu0
      %v1304 = vadd.f32 0.0, %v1303
      %v1305 = vpop.f32.mrf.mxu0
      %1306 = vmatprep.mubr.bf16.mxu0 0
      %1307 = vmatmul.mubr.bf16.gmra.mxu0 %v1157
      %v1308 = vpop.f32.mrf.mxu0
      %v1309 = vadd.f32 0.0, %v1308
      %v1310 = vpop.f32.mrf.mxu0
      %v1311 = vpop.f32.mrf.mxu0
      %v1312 = vadd.f32 0.0, %v1311
      %v1313 = vpop.f32.mrf.mxu0
      %1314 = vmatprep.mubr.bf16.mxu0 0
      %1315 = vmatmul.mubr.bf16.gmra.mxu0 %v1160
      %v1316 = vpop.f32.mrf.mxu0
      %v1317 = vadd.f32 0.0, %v1316
      %v1318 = vpop.f32.mrf.mxu0
      %v1319 = vpop.f32.mrf.mxu0
      %v1320 = vadd.f32 0.0, %v1319
      %v1321 = vpop.f32.mrf.mxu0
      %1322 = vdwg.mxu0
      %v1323 = vadd.f32 %v1024, %v1197
      %v1324 = vadd.f32 %v1025, %v1200
      %v1325 = vadd.f32 %v1026, %v1205
      %v1326 = vadd.f32 %v1027, %v1208
      %v1327 = vadd.f32 %v1028, %v1213
      %v1328 = vadd.f32 %v1029, %v1216
      %v1329 = vadd.f32 %v1030, %v1221
      %v1330 = vadd.f32 %v1031, %v1224
      %v1331 = vadd.f32 %v1032, %v1229
      %v1332 = vadd.f32 %v1033, %v1232
      %v1333 = vadd.f32 %v1034, %v1237
      %v1334 = vadd.f32 %v1035, %v1240
      %v1335 = vadd.f32 %v1036, %v1245
      %v1336 = vadd.f32 %v1037, %v1248
      %v1337 = vadd.f32 %v1038, %v1253
      %v1338 = vadd.f32 %v1039, %v1256
      %v1339 = vadd.f32 %v1040, %v1261
      %v1340 = vadd.f32 %v1041, %v1264
      %v1341 = vadd.f32 %v1042, %v1269
      %v1342 = vadd.f32 %v1043, %v1272
      %v1343 = vadd.f32 %v1044, %v1277
      %v1344 = vadd.f32 %v1045, %v1280
      %v1345 = vadd.f32 %v1046, %v1285
      %v1346 = vadd.f32 %v1047, %v1288
      %v1347 = vadd.f32 %v1048, %v1293
      %v1348 = vadd.f32 %v1049, %v1296
      %v1349 = vadd.f32 %v1050, %v1301
      %v1350 = vadd.f32 %v1051, %v1304
      %v1351 = vadd.f32 %v1052, %v1309
      %v1352 = vadd.f32 %v1053, %v1312
      %v1353 = vadd.f32 %v1054, %v1317
      %v1354 = vadd.f32 %v1055, %v1320
      %v1355 = vld [vmem:[%s1056 + $0x1] sm:$0xff]
      %v1356 = vld [vmem:[%s1056 + $0x9] sm:$0xff]
      %v1357 = vld [vmem:[%s1056 + $0x19] sm:$0xff]
      %v1358 = vld [vmem:[%s1056 + $0x21] sm:$0xff]
      %v1359 = vld [vmem:[%s1056 + $0x31] sm:$0xff]
      %v1360 = vld [vmem:[%s1056 + $0x39] sm:$0xff]
      %v1361 = vld [vmem:[%s1056 + $0x49] sm:$0xff]
      %v1362 = vld [vmem:[%s1056 + $0x51] sm:$0xff]
      %v1363 = vld [vmem:[%s1056 + $0x61] sm:$0xff]
      %v1364 = vld [vmem:[%s1056 + $0x69] sm:$0xff]
      %v1365 = vld [vmem:[%s1056 + $0x79] sm:$0xff]
      %v1366 = vld [vmem:[%s1056 + $0x81] sm:$0xff]
      %v1367 = vld [vmem:[%s1056 + $0x91] sm:$0xff]
      %v1368 = vld [vmem:[%s1056 + $0x99] sm:$0xff]
      %v1369 = vld [vmem:[%s1056 + $0xa9] sm:$0xff]
      %v1370 = vld [vmem:[%s1056 + $0xb1] sm:$0xff]
      %v1371 = vld [vmem:[%s1056 + $0xc1] sm:$0xff]
      %v1372 = vld [vmem:[%s1056 + $0xc9] sm:$0xff]
      %v1373 = vld [vmem:[%s1056 + $0xd9] sm:$0xff]
      %v1374 = vld [vmem:[%s1056 + $0xe1] sm:$0xff]
      %v1375 = vld [vmem:[%s1056 + $0xf1] sm:$0xff]
      %v1376 = vld [vmem:[%s1056 + $0xf9] sm:$0xff]
      %v1377 = vld [vmem:[%s1056 + $0x109] sm:$0xff]
      %v1378 = vld [vmem:[%s1056 + $0x111] sm:$0xff]
      %v1379 = vld [vmem:[%s1056 + $0x121] sm:$0xff]
      %v1380 = vld [vmem:[%s1056 + $0x129] sm:$0xff]
      %v1381 = vld [vmem:[%s1056 + $0x139] sm:$0xff]
      %v1382 = vld [vmem:[%s1056 + $0x141] sm:$0xff]
      %v1383 = vld [vmem:[%s1056 + $0x151] sm:$0xff]
      %v1384 = vld [vmem:[%s1056 + $0x159] sm:$0xff]
      %v1385 = vld [vmem:[%s1056 + $0x169] sm:$0xff]
      %v1386 = vld [vmem:[%s1056 + $0x171] sm:$0xff]
      %v1387 = vpack.c.bf16 %v1356, %v1355
      %v1388 = vpack.c.bf16 %v1358, %v1357
      %v1389 = vpack.c.bf16 %v1360, %v1359
      %v1390 = vpack.c.bf16 %v1362, %v1361
      %v1391 = vpack.c.bf16 %v1364, %v1363
      %v1392 = vpack.c.bf16 %v1366, %v1365
      %v1393 = vpack.c.bf16 %v1368, %v1367
      %v1394 = vpack.c.bf16 %v1370, %v1369
      %v1395 = vpack.c.bf16 %v1372, %v1371
      %v1396 = vpack.c.bf16 %v1374, %v1373
      %v1397 = vpack.c.bf16 %v1376, %v1375
      %v1398 = vpack.c.bf16 %v1378, %v1377
      %v1399 = vpack.c.bf16 %v1380, %v1379
      %v1400 = vpack.c.bf16 %v1382, %v1381
      %v1401 = vpack.c.bf16 %v1384, %v1383
      %v1402 = vpack.c.bf16 %v1386, %v1385
      %s1403 = scalar_lea.vmem %s1, 32
      %v1404 = vld [vmem:[%s1403] sm:$0xf]
      %v1405 = vld [vmem:[%s1403 + $0x4] sm:$0xf]
      %v1408 = vunpack.c.l.b16 %v1404
      %v1409 = vunpack.c.l.b16 %v1405
      %v1410 = vpack.c.b16 %v1409, %v1408
      %v1413 = vsel %vm333, %v1387, 0
      %v1416 = vsel %vm333, %v1388, 0
      %v1419 = vsel %vm333, %v1389, 0
      %v1422 = vsel %vm333, %v1390, 0
      %v1425 = vsel %vm333, %v1391, 0
      %v1428 = vsel %vm333, %v1392, 0
      %v1431 = vsel %vm333, %v1393, 0
      %v1434 = vsel %vm333, %v1394, 0
      %v1437 = vsel %vm333, %v1395, 0
      %v1440 = vsel %vm333, %v1396, 0
      %v1443 = vsel %vm333, %v1397, 0
      %v1446 = vsel %vm333, %v1398, 0
      %v1449 = vsel %vm333, %v1399, 0
      %v1452 = vsel %vm333, %v1400, 0
      %v1455 = vsel %vm333, %v1401, 0
      %v1458 = vsel %vm333, %v1402, 0
      %1460 = vmatprep.subr.bf16.mxu0 0
      %1461 = vmatpush1.bf16.msra.mxu0 0
      %1462 = vmatprep.subr.bf16.mxu0 0
      %1463 = vmatpush1.bf16.msra.mxu0 0
      %1464 = vmatprep.subr.bf16.mxu0 0
      %1465 = vmatpush1.bf16.msra.mxu0 0
      %1466 = vmatprep.subr.bf16.mxu0 0
      %1467 = vmatpush1.bf16.msra.mxu0 0
      %1468 = vmatprep.subr.bf16.mxu0 0
      %1469 = vmatpush1.bf16.msra.mxu0 0
      %1470 = vmatprep.subr.bf16.mxu0 0
      %1471 = vmatpush1.bf16.msra.mxu0 0
      %1472 = vmatprep.subr.bf16.mxu0 0
      %1473 = vmatpush1.bf16.msra.mxu0 0
      %1474 = vmatprep.subr.bf16.mxu0 0
      %1475 = vmatpush1.bf16.msra.mxu0 %v1410
      %1476 = vmatprep.subr.bf16.mxu0 0
      %1477 = vmatpush2.bf16.msra.mxu0 0
      %1478 = vmatprep.subr.bf16.mxu0 0
      %1479 = vmatpush2.bf16.msra.mxu0 0
      %1480 = vmatprep.subr.bf16.mxu0 0
      %1481 = vmatpush2.bf16.msra.mxu0 0
      %1482 = vmatprep.subr.bf16.mxu0 0
      %1483 = vmatpush2.bf16.msra.mxu0 0
      %1484 = vmatprep.subr.bf16.mxu0 0
      %1485 = vmatpush2.bf16.msra.mxu0 0
      %1486 = vmatprep.subr.bf16.mxu0 0
      %1487 = vmatpush2.bf16.msra.mxu0 0
      %1488 = vmatprep.subr.bf16.mxu0 0
      %1489 = vmatpush2.bf16.msra.mxu0 0
      %1490 = vmatprep.subr.bf16.mxu0 0
      %1491 = vmatpush2.bf16.msra.mxu0 0
      %1492 = vmatprep.mubr.bf16.mxu0 0
      %1493 = vmatmul.mubr.bf16.gmra.mxu0 %v1413
      %v1494 = vpop.f32.mrf.mxu0
      %v1495 = vadd.f32 0.0, %v1494
      %v1496 = vpop.f32.mrf.mxu0
      %v1497 = vpop.f32.mrf.mxu0
      %v1498 = vadd.f32 0.0, %v1497
      %v1499 = vpop.f32.mrf.mxu0
      %1500 = vmatprep.mubr.bf16.mxu0 0
      %1501 = vmatmul.mubr.bf16.gmra.mxu0 %v1416
      %v1502 = vpop.f32.mrf.mxu0
      %v1503 = vadd.f32 0.0, %v1502
      %v1504 = vpop.f32.mrf.mxu0
      %v1505 = vpop.f32.mrf.mxu0
      %v1506 = vadd.f32 0.0, %v1505
      %v1507 = vpop.f32.mrf.mxu0
      %1508 = vmatprep.mubr.bf16.mxu0 0
      %1509 = vmatmul.mubr.bf16.gmra.mxu0 %v1419
      %v1510 = vpop.f32.mrf.mxu0
      %v1511 = vadd.f32 0.0, %v1510
      %v1512 = vpop.f32.mrf.mxu0
      %v1513 = vpop.f32.mrf.mxu0
      %v1514 = vadd.f32 0.0, %v1513
      %v1515 = vpop.f32.mrf.mxu0
      %1516 = vmatprep.mubr.bf16.mxu0 0
      %1517 = vmatmul.mubr.bf16.gmra.mxu0 %v1422
      %v1518 = vpop.f32.mrf.mxu0
      %v1519 = vadd.f32 0.0, %v1518
      %v1520 = vpop.f32.mrf.mxu0
      %v1521 = vpop.f32.mrf.mxu0
      %v1522 = vadd.f32 0.0, %v1521
      %v1523 = vpop.f32.mrf.mxu0
      %1524 = vmatprep.mubr.bf16.mxu0 0
      %1525 = vmatmul.mubr.bf16.gmra.mxu0 %v1425
      %v1526 = vpop.f32.mrf.mxu0
      %v1527 = vadd.f32 0.0, %v1526
      %v1528 = vpop.f32.mrf.mxu0
      %v1529 = vpop.f32.mrf.mxu0
      %v1530 = vadd.f32 0.0, %v1529
      %v1531 = vpop.f32.mrf.mxu0
      %1532 = vmatprep.mubr.bf16.mxu0 0
      %1533 = vmatmul.mubr.bf16.gmra.mxu0 %v1428
      %v1534 = vpop.f32.mrf.mxu0
      %v1535 = vadd.f32 0.0, %v1534
      %v1536 = vpop.f32.mrf.mxu0
      %v1537 = vpop.f32.mrf.mxu0
      %v1538 = vadd.f32 0.0, %v1537
      %v1539 = vpop.f32.mrf.mxu0
      %1540 = vmatprep.mubr.bf16.mxu0 0
      %1541 = vmatmul.mubr.bf16.gmra.mxu0 %v1431
      %v1542 = vpop.f32.mrf.mxu0
      %v1543 = vadd.f32 0.0, %v1542
      %v1544 = vpop.f32.mrf.mxu0
      %v1545 = vpop.f32.mrf.mxu0
      %v1546 = vadd.f32 0.0, %v1545
      %v1547 = vpop.f32.mrf.mxu0
      %1548 = vmatprep.mubr.bf16.mxu0 0
      %1549 = vmatmul.mubr.bf16.gmra.mxu0 %v1434
      %v1550 = vpop.f32.mrf.mxu0
      %v1551 = vadd.f32 0.0, %v1550
      %v1552 = vpop.f32.mrf.mxu0
      %v1553 = vpop.f32.mrf.mxu0
      %v1554 = vadd.f32 0.0, %v1553
      %v1555 = vpop.f32.mrf.mxu0
      %1556 = vmatprep.mubr.bf16.mxu0 0
      %1557 = vmatmul.mubr.bf16.gmra.mxu0 %v1437
      %v1558 = vpop.f32.mrf.mxu0
      %v1559 = vadd.f32 0.0, %v1558
      %v1560 = vpop.f32.mrf.mxu0
      %v1561 = vpop.f32.mrf.mxu0
      %v1562 = vadd.f32 0.0, %v1561
      %v1563 = vpop.f32.mrf.mxu0
      %1564 = vmatprep.mubr.bf16.mxu0 0
      %1565 = vmatmul.mubr.bf16.gmra.mxu0 %v1440
      %v1566 = vpop.f32.mrf.mxu0
      %v1567 = vadd.f32 0.0, %v1566
      %v1568 = vpop.f32.mrf.mxu0
      %v1569 = vpop.f32.mrf.mxu0
      %v1570 = vadd.f32 0.0, %v1569
      %v1571 = vpop.f32.mrf.mxu0
      %1572 = vmatprep.mubr.bf16.mxu0 0
      %1573 = vmatmul.mubr.bf16.gmra.mxu0 %v1443
      %v1574 = vpop.f32.mrf.mxu0
      %v1575 = vadd.f32 0.0, %v1574
      %v1576 = vpop.f32.mrf.mxu0
      %v1577 = vpop.f32.mrf.mxu0
      %v1578 = vadd.f32 0.0, %v1577
      %v1579 = vpop.f32.mrf.mxu0
      %1580 = vmatprep.mubr.bf16.mxu0 0
      %1581 = vmatmul.mubr.bf16.gmra.mxu0 %v1446
      %v1582 = vpop.f32.mrf.mxu0
      %v1583 = vadd.f32 0.0, %v1582
      %v1584 = vpop.f32.mrf.mxu0
      %v1585 = vpop.f32.mrf.mxu0
      %v1586 = vadd.f32 0.0, %v1585
      %v1587 = vpop.f32.mrf.mxu0
      %1588 = vmatprep.mubr.bf16.mxu0 0
      %1589 = vmatmul.mubr.bf16.gmra.mxu0 %v1449
      %v1590 = vpop.f32.mrf.mxu0
      %v1591 = vadd.f32 0.0, %v1590
      %v1592 = vpop.f32.mrf.mxu0
      %v1593 = vpop.f32.mrf.mxu0
      %v1594 = vadd.f32 0.0, %v1593
      %v1595 = vpop.f32.mrf.mxu0
      %1596 = vmatprep.mubr.bf16.mxu0 0
      %1597 = vmatmul.mubr.bf16.gmra.mxu0 %v1452
      %v1598 = vpop.f32.mrf.mxu0
      %v1599 = vadd.f32 0.0, %v1598
      %v1600 = vpop.f32.mrf.mxu0
      %v1601 = vpop.f32.mrf.mxu0
      %v1602 = vadd.f32 0.0, %v1601
      %v1603 = vpop.f32.mrf.mxu0
      %1604 = vmatprep.mubr.bf16.mxu0 0
      %1605 = vmatmul.mubr.bf16.gmra.mxu0 %v1455
      %v1606 = vpop.f32.mrf.mxu0
      %v1607 = vadd.f32 0.0, %v1606
      %v1608 = vpop.f32.mrf.mxu0
      %v1609 = vpop.f32.mrf.mxu0
      %v1610 = vadd.f32 0.0, %v1609
      %v1611 = vpop.f32.mrf.mxu0
      %1612 = vmatprep.mubr.bf16.mxu0 0
      %1613 = vmatmul.mubr.bf16.gmra.mxu0 %v1458
      %v1614 = vpop.f32.mrf.mxu0
      %v1615 = vadd.f32 0.0, %v1614
      %v1616 = vpop.f32.mrf.mxu0
      %v1617 = vpop.f32.mrf.mxu0
      %v1618 = vadd.f32 0.0, %v1617
      %v1619 = vpop.f32.mrf.mxu0
      %1620 = vdwg.mxu0
      %v1621 = vadd.f32 %v1323, %v1495
      %v1622 = vadd.f32 %v1324, %v1498
      %v1623 = vadd.f32 %v1325, %v1503
      %v1624 = vadd.f32 %v1326, %v1506
      %v1625 = vadd.f32 %v1327, %v1511
      %v1626 = vadd.f32 %v1328, %v1514
      %v1627 = vadd.f32 %v1329, %v1519
      %v1628 = vadd.f32 %v1330, %v1522
      %v1629 = vadd.f32 %v1331, %v1527
      %v1630 = vadd.f32 %v1332, %v1530
      %v1631 = vadd.f32 %v1333, %v1535
      %v1632 = vadd.f32 %v1334, %v1538
      %v1633 = vadd.f32 %v1335, %v1543
      %v1634 = vadd.f32 %v1336, %v1546
      %v1635 = vadd.f32 %v1337, %v1551
      %v1636 = vadd.f32 %v1338, %v1554
      %v1637 = vadd.f32 %v1339, %v1559
      %v1638 = vadd.f32 %v1340, %v1562
      %v1639 = vadd.f32 %v1341, %v1567
      %v1640 = vadd.f32 %v1342, %v1570
      %v1641 = vadd.f32 %v1343, %v1575
      %v1642 = vadd.f32 %v1344, %v1578
      %v1643 = vadd.f32 %v1345, %v1583
      %v1644 = vadd.f32 %v1346, %v1586
      %v1645 = vadd.f32 %v1347, %v1591
      %v1646 = vadd.f32 %v1348, %v1594
      %v1647 = vadd.f32 %v1349, %v1599
      %v1648 = vadd.f32 %v1350, %v1602
      %v1649 = vadd.f32 %v1351, %v1607
      %v1650 = vadd.f32 %v1352, %v1610
      %v1651 = vadd.f32 %v1353, %v1615
      %v1652 = vadd.f32 %v1354, %v1618
      %v1653 = vld [vmem:[%s1056 + $0x2] sm:$0xff]
      %v1654 = vld [vmem:[%s1056 + $0xa] sm:$0xff]
      %v1655 = vld [vmem:[%s1056 + $0x1a] sm:$0xff]
      %v1656 = vld [vmem:[%s1056 + $0x22] sm:$0xff]
      %v1657 = vld [vmem:[%s1056 + $0x32] sm:$0xff]
      %v1658 = vld [vmem:[%s1056 + $0x3a] sm:$0xff]
      %v1659 = vld [vmem:[%s1056 + $0x4a] sm:$0xff]
      %v1660 = vld [vmem:[%s1056 + $0x52] sm:$0xff]
      %v1661 = vld [vmem:[%s1056 + $0x62] sm:$0xff]
      %v1662 = vld [vmem:[%s1056 + $0x6a] sm:$0xff]
      %v1663 = vld [vmem:[%s1056 + $0x7a] sm:$0xff]
      %v1664 = vld [vmem:[%s1056 + $0x82] sm:$0xff]
      %v1665 = vld [vmem:[%s1056 + $0x92] sm:$0xff]
      %v1666 = vld [vmem:[%s1056 + $0x9a] sm:$0xff]
      %v1667 = vld [vmem:[%s1056 + $0xaa] sm:$0xff]
      %v1668 = vld [vmem:[%s1056 + $0xb2] sm:$0xff]
      %v1669 = vld [vmem:[%s1056 + $0xc2] sm:$0xff]
      %v1670 = vld [vmem:[%s1056 + $0xca] sm:$0xff]
      %v1671 = vld [vmem:[%s1056 + $0xda] sm:$0xff]
      %v1672 = vld [vmem:[%s1056 + $0xe2] sm:$0xff]
      %v1673 = vld [vmem:[%s1056 + $0xf2] sm:$0xff]
      %v1674 = vld [vmem:[%s1056 + $0xfa] sm:$0xff]
      %v1675 = vld [vmem:[%s1056 + $0x10a] sm:$0xff]
      %v1676 = vld [vmem:[%s1056 + $0x112] sm:$0xff]
      %v1677 = vld [vmem:[%s1056 + $0x122] sm:$0xff]
      %v1678 = vld [vmem:[%s1056 + $0x12a] sm:$0xff]
      %v1679 = vld [vmem:[%s1056 + $0x13a] sm:$0xff]
      %v1680 = vld [vmem:[%s1056 + $0x142] sm:$0xff]
      %v1681 = vld [vmem:[%s1056 + $0x152] sm:$0xff]
      %v1682 = vld [vmem:[%s1056 + $0x15a] sm:$0xff]
      %v1683 = vld [vmem:[%s1056 + $0x16a] sm:$0xff]
      %v1684 = vld [vmem:[%s1056 + $0x172] sm:$0xff]
      %v1685 = vpack.c.bf16 %v1654, %v1653
      %v1686 = vpack.c.bf16 %v1656, %v1655
      %v1687 = vpack.c.bf16 %v1658, %v1657
      %v1688 = vpack.c.bf16 %v1660, %v1659
      %v1689 = vpack.c.bf16 %v1662, %v1661
      %v1690 = vpack.c.bf16 %v1664, %v1663
      %v1691 = vpack.c.bf16 %v1666, %v1665
      %v1692 = vpack.c.bf16 %v1668, %v1667
      %v1693 = vpack.c.bf16 %v1670, %v1669
      %v1694 = vpack.c.bf16 %v1672, %v1671
      %v1695 = vpack.c.bf16 %v1674, %v1673
      %v1696 = vpack.c.bf16 %v1676, %v1675
      %v1697 = vpack.c.bf16 %v1678, %v1677
      %v1698 = vpack.c.bf16 %v1680, %v1679
      %v1699 = vpack.c.bf16 %v1682, %v1681
      %v1700 = vpack.c.bf16 %v1684, %v1683
      %s1701 = scalar_lea.vmem %s1, 40
      %v1702 = vld [vmem:[%s1701] sm:$0xf]
      %v1703 = vld [vmem:[%s1701 + $0x4] sm:$0xf]
      %v1706 = vunpack.c.l.b16 %v1702
      %v1707 = vunpack.c.l.b16 %v1703
      %v1708 = vpack.c.b16 %v1707, %v1706
      %v1711 = vsel %vm333, %v1685, 0
      %v1714 = vsel %vm333, %v1686, 0
      %v1717 = vsel %vm333, %v1687, 0
      %v1720 = vsel %vm333, %v1688, 0
      %v1723 = vsel %vm333, %v1689, 0
      %v1726 = vsel %vm333, %v1690, 0
      %v1729 = vsel %vm333, %v1691, 0
      %v1732 = vsel %vm333, %v1692, 0
      %v1735 = vsel %vm333, %v1693, 0
      %v1738 = vsel %vm333, %v1694, 0
      %v1741 = vsel %vm333, %v1695, 0
      %v1744 = vsel %vm333, %v1696, 0
      %v1747 = vsel %vm333, %v1697, 0
      %v1750 = vsel %vm333, %v1698, 0
      %v1753 = vsel %vm333, %v1699, 0
      %v1756 = vsel %vm333, %v1700, 0
      %1758 = vmatprep.subr.bf16.mxu0 0
      %1759 = vmatpush1.bf16.msra.mxu0 0
      %1760 = vmatprep.subr.bf16.mxu0 0
      %1761 = vmatpush1.bf16.msra.mxu0 0
      %1762 = vmatprep.subr.bf16.mxu0 0
      %1763 = vmatpush1.bf16.msra.mxu0 0
      %1764 = vmatprep.subr.bf16.mxu0 0
      %1765 = vmatpush1.bf16.msra.mxu0 0
      %1766 = vmatprep.subr.bf16.mxu0 0
      %1767 = vmatpush1.bf16.msra.mxu0 0
      %1768 = vmatprep.subr.bf16.mxu0 0
      %1769 = vmatpush1.bf16.msra.mxu0 0
      %1770 = vmatprep.subr.bf16.mxu0 0
      %1771 = vmatpush1.bf16.msra.mxu0 0
      %1772 = vmatprep.subr.bf16.mxu0 0
      %1773 = vmatpush1.bf16.msra.mxu0 %v1708
      %1774 = vmatprep.subr.bf16.mxu0 0
      %1775 = vmatpush2.bf16.msra.mxu0 0
      %1776 = vmatprep.subr.bf16.mxu0 0
      %1777 = vmatpush2.bf16.msra.mxu0 0
      %1778 = vmatprep.subr.bf16.mxu0 0
      %1779 = vmatpush2.bf16.msra.mxu0 0
      %1780 = vmatprep.subr.bf16.mxu0 0
      %1781 = vmatpush2.bf16.msra.mxu0 0
      %1782 = vmatprep.subr.bf16.mxu0 0
      %1783 = vmatpush2.bf16.msra.mxu0 0
      %1784 = vmatprep.subr.bf16.mxu0 0
      %1785 = vmatpush2.bf16.msra.mxu0 0
      %1786 = vmatprep.subr.bf16.mxu0 0
      %1787 = vmatpush2.bf16.msra.mxu0 0
      %1788 = vmatprep.subr.bf16.mxu0 0
      %1789 = vmatpush2.bf16.msra.mxu0 0
      %1790 = vmatprep.mubr.bf16.mxu0 0
      %1791 = vmatmul.mubr.bf16.gmra.mxu0 %v1711
      %v1792 = vpop.f32.mrf.mxu0
      %v1793 = vadd.f32 0.0, %v1792
      %v1794 = vpop.f32.mrf.mxu0
      %v1795 = vpop.f32.mrf.mxu0
      %v1796 = vadd.f32 0.0, %v1795
      %v1797 = vpop.f32.mrf.mxu0
      %1798 = vmatprep.mubr.bf16.mxu0 0
      %1799 = vmatmul.mubr.bf16.gmra.mxu0 %v1714
      %v1800 = vpop.f32.mrf.mxu0
      %v1801 = vadd.f32 0.0, %v1800
      %v1802 = vpop.f32.mrf.mxu0
      %v1803 = vpop.f32.mrf.mxu0
      %v1804 = vadd.f32 0.0, %v1803
      %v1805 = vpop.f32.mrf.mxu0
      %1806 = vmatprep.mubr.bf16.mxu0 0
      %1807 = vmatmul.mubr.bf16.gmra.mxu0 %v1717
      %v1808 = vpop.f32.mrf.mxu0
      %v1809 = vadd.f32 0.0, %v1808
      %v1810 = vpop.f32.mrf.mxu0
      %v1811 = vpop.f32.mrf.mxu0
      %v1812 = vadd.f32 0.0, %v1811
      %v1813 = vpop.f32.mrf.mxu0
      %1814 = vmatprep.mubr.bf16.mxu0 0
      %1815 = vmatmul.mubr.bf16.gmra.mxu0 %v1720
      %v1816 = vpop.f32.mrf.mxu0
      %v1817 = vadd.f32 0.0, %v1816
      %v1818 = vpop.f32.mrf.mxu0
      %v1819 = vpop.f32.mrf.mxu0
      %v1820 = vadd.f32 0.0, %v1819
      %v1821 = vpop.f32.mrf.mxu0
      %1822 = vmatprep.mubr.bf16.mxu0 0
      %1823 = vmatmul.mubr.bf16.gmra.mxu0 %v1723
      %v1824 = vpop.f32.mrf.mxu0
      %v1825 = vadd.f32 0.0, %v1824
      %v1826 = vpop.f32.mrf.mxu0
      %v1827 = vpop.f32.mrf.mxu0
      %v1828 = vadd.f32 0.0, %v1827
      %v1829 = vpop.f32.mrf.mxu0
      %1830 = vmatprep.mubr.bf16.mxu0 0
      %1831 = vmatmul.mubr.bf16.gmra.mxu0 %v1726
      %v1832 = vpop.f32.mrf.mxu0
      %v1833 = vadd.f32 0.0, %v1832
      %v1834 = vpop.f32.mrf.mxu0
      %v1835 = vpop.f32.mrf.mxu0
      %v1836 = vadd.f32 0.0, %v1835
      %v1837 = vpop.f32.mrf.mxu0
      %1838 = vmatprep.mubr.bf16.mxu0 0
      %1839 = vmatmul.mubr.bf16.gmra.mxu0 %v1729
      %v1840 = vpop.f32.mrf.mxu0
      %v1841 = vadd.f32 0.0, %v1840
      %v1842 = vpop.f32.mrf.mxu0
      %v1843 = vpop.f32.mrf.mxu0
      %v1844 = vadd.f32 0.0, %v1843
      %v1845 = vpop.f32.mrf.mxu0
      %1846 = vmatprep.mubr.bf16.mxu0 0
      %1847 = vmatmul.mubr.bf16.gmra.mxu0 %v1732
      %v1848 = vpop.f32.mrf.mxu0
      %v1849 = vadd.f32 0.0, %v1848
      %v1850 = vpop.f32.mrf.mxu0
      %v1851 = vpop.f32.mrf.mxu0
      %v1852 = vadd.f32 0.0, %v1851
      %v1853 = vpop.f32.mrf.mxu0
      %1854 = vmatprep.mubr.bf16.mxu0 0
      %1855 = vmatmul.mubr.bf16.gmra.mxu0 %v1735
      %v1856 = vpop.f32.mrf.mxu0
      %v1857 = vadd.f32 0.0, %v1856
      %v1858 = vpop.f32.mrf.mxu0
      %v1859 = vpop.f32.mrf.mxu0
      %v1860 = vadd.f32 0.0, %v1859
      %v1861 = vpop.f32.mrf.mxu0
      %1862 = vmatprep.mubr.bf16.mxu0 0
      %1863 = vmatmul.mubr.bf16.gmra.mxu0 %v1738
      %v1864 = vpop.f32.mrf.mxu0
      %v1865 = vadd.f32 0.0, %v1864
      %v1866 = vpop.f32.mrf.mxu0
      %v1867 = vpop.f32.mrf.mxu0
      %v1868 = vadd.f32 0.0, %v1867
      %v1869 = vpop.f32.mrf.mxu0
      %1870 = vmatprep.mubr.bf16.mxu0 0
      %1871 = vmatmul.mubr.bf16.gmra.mxu0 %v1741
      %v1872 = vpop.f32.mrf.mxu0
      %v1873 = vadd.f32 0.0, %v1872
      %v1874 = vpop.f32.mrf.mxu0
      %v1875 = vpop.f32.mrf.mxu0
      %v1876 = vadd.f32 0.0, %v1875
      %v1877 = vpop.f32.mrf.mxu0
      %1878 = vmatprep.mubr.bf16.mxu0 0
      %1879 = vmatmul.mubr.bf16.gmra.mxu0 %v1744
      %v1880 = vpop.f32.mrf.mxu0
      %v1881 = vadd.f32 0.0, %v1880
      %v1882 = vpop.f32.mrf.mxu0
      %v1883 = vpop.f32.mrf.mxu0
      %v1884 = vadd.f32 0.0, %v1883
      %v1885 = vpop.f32.mrf.mxu0
      %1886 = vmatprep.mubr.bf16.mxu0 0
      %1887 = vmatmul.mubr.bf16.gmra.mxu0 %v1747
      %v1888 = vpop.f32.mrf.mxu0
      %v1889 = vadd.f32 0.0, %v1888
      %v1890 = vpop.f32.mrf.mxu0
      %v1891 = vpop.f32.mrf.mxu0
      %v1892 = vadd.f32 0.0, %v1891
      %v1893 = vpop.f32.mrf.mxu0
      %1894 = vmatprep.mubr.bf16.mxu0 0
      %1895 = vmatmul.mubr.bf16.gmra.mxu0 %v1750
      %v1896 = vpop.f32.mrf.mxu0
      %v1897 = vadd.f32 0.0, %v1896
      %v1898 = vpop.f32.mrf.mxu0
      %v1899 = vpop.f32.mrf.mxu0
      %v1900 = vadd.f32 0.0, %v1899
      %v1901 = vpop.f32.mrf.mxu0
      %1902 = vmatprep.mubr.bf16.mxu0 0
      %1903 = vmatmul.mubr.bf16.gmra.mxu0 %v1753
      %v1904 = vpop.f32.mrf.mxu0
      %v1905 = vadd.f32 0.0, %v1904
      %v1906 = vpop.f32.mrf.mxu0
      %v1907 = vpop.f32.mrf.mxu0
      %v1908 = vadd.f32 0.0, %v1907
      %v1909 = vpop.f32.mrf.mxu0
      %1910 = vmatprep.mubr.bf16.mxu0 0
      %1911 = vmatmul.mubr.bf16.gmra.mxu0 %v1756
      %v1912 = vpop.f32.mrf.mxu0
      %v1913 = vadd.f32 0.0, %v1912
      %v1914 = vpop.f32.mrf.mxu0
      %v1915 = vpop.f32.mrf.mxu0
      %v1916 = vadd.f32 0.0, %v1915
      %v1917 = vpop.f32.mrf.mxu0
      %1918 = vdwg.mxu0
      %v1919 = vadd.f32 %v1621, %v1793
      %v1920 = vadd.f32 %v1622, %v1796
      %v1921 = vadd.f32 %v1623, %v1801
      %v1922 = vadd.f32 %v1624, %v1804
      %v1923 = vadd.f32 %v1625, %v1809
      %v1924 = vadd.f32 %v1626, %v1812
      %v1925 = vadd.f32 %v1627, %v1817
      %v1926 = vadd.f32 %v1628, %v1820
      %v1927 = vadd.f32 %v1629, %v1825
      %v1928 = vadd.f32 %v1630, %v1828
      %v1929 = vadd.f32 %v1631, %v1833
      %v1930 = vadd.f32 %v1632, %v1836
      %v1931 = vadd.f32 %v1633, %v1841
      %v1932 = vadd.f32 %v1634, %v1844
      %v1933 = vadd.f32 %v1635, %v1849
      %v1934 = vadd.f32 %v1636, %v1852
      %v1935 = vadd.f32 %v1637, %v1857
      %v1936 = vadd.f32 %v1638, %v1860
      %v1937 = vadd.f32 %v1639, %v1865
      %v1938 = vadd.f32 %v1640, %v1868
      %v1939 = vadd.f32 %v1641, %v1873
      %v1940 = vadd.f32 %v1642, %v1876
      %v1941 = vadd.f32 %v1643, %v1881
      %v1942 = vadd.f32 %v1644, %v1884
      %v1943 = vadd.f32 %v1645, %v1889
      %v1944 = vadd.f32 %v1646, %v1892
      %v1945 = vadd.f32 %v1647, %v1897
      %v1946 = vadd.f32 %v1648, %v1900
      %v1947 = vadd.f32 %v1649, %v1905
      %v1948 = vadd.f32 %v1650, %v1908
      %v1949 = vadd.f32 %v1651, %v1913
      %v1950 = vadd.f32 %v1652, %v1916
      %s1951 = scalar_lea.vmem %s219, 48
      %v1952 = vld [vmem:[%s1951] sm:$0xff]
      %v1953 = vld [vmem:[%s1951 + $0x8] sm:$0xff]
      %v1954 = vld [vmem:[%s1951 + $0x18] sm:$0xff]
      %v1955 = vld [vmem:[%s1951 + $0x20] sm:$0xff]
      %v1956 = vld [vmem:[%s1951 + $0x30] sm:$0xff]
      %v1957 = vld [vmem:[%s1951 + $0x38] sm:$0xff]
      %v1958 = vld [vmem:[%s1951 + $0x48] sm:$0xff]
      %v1959 = vld [vmem:[%s1951 + $0x50] sm:$0xff]
      %v1960 = vld [vmem:[%s1951 + $0x60] sm:$0xff]
      %v1961 = vld [vmem:[%s1951 + $0x68] sm:$0xff]
      %v1962 = vld [vmem:[%s1951 + $0x78] sm:$0xff]
      %v1963 = vld [vmem:[%s1951 + $0x80] sm:$0xff]
      %v1964 = vld [vmem:[%s1951 + $0x90] sm:$0xff]
      %v1965 = vld [vmem:[%s1951 + $0x98] sm:$0xff]
      %v1966 = vld [vmem:[%s1951 + $0xa8] sm:$0xff]
      %v1967 = vld [vmem:[%s1951 + $0xb0] sm:$0xff]
      %v1968 = vld [vmem:[%s1951 + $0xc0] sm:$0xff]
      %v1969 = vld [vmem:[%s1951 + $0xc8] sm:$0xff]
      %v1970 = vld [vmem:[%s1951 + $0xd8] sm:$0xff]
      %v1971 = vld [vmem:[%s1951 + $0xe0] sm:$0xff]
      %v1972 = vld [vmem:[%s1951 + $0xf0] sm:$0xff]
      %v1973 = vld [vmem:[%s1951 + $0xf8] sm:$0xff]
      %v1974 = vld [vmem:[%s1951 + $0x108] sm:$0xff]
      %v1975 = vld [vmem:[%s1951 + $0x110] sm:$0xff]
      %v1976 = vld [vmem:[%s1951 + $0x120] sm:$0xff]
      %v1977 = vld [vmem:[%s1951 + $0x128] sm:$0xff]
      %v1978 = vld [vmem:[%s1951 + $0x138] sm:$0xff]
      %v1979 = vld [vmem:[%s1951 + $0x140] sm:$0xff]
      %v1980 = vld [vmem:[%s1951 + $0x150] sm:$0xff]
      %v1981 = vld [vmem:[%s1951 + $0x158] sm:$0xff]
      %v1982 = vld [vmem:[%s1951 + $0x168] sm:$0xff]
      %v1983 = vld [vmem:[%s1951 + $0x170] sm:$0xff]
      %v1984 = vpack.c.bf16 %v1953, %v1952
      %v1985 = vpack.c.bf16 %v1955, %v1954
      %v1986 = vpack.c.bf16 %v1957, %v1956
      %v1987 = vpack.c.bf16 %v1959, %v1958
      %v1988 = vpack.c.bf16 %v1961, %v1960
      %v1989 = vpack.c.bf16 %v1963, %v1962
      %v1990 = vpack.c.bf16 %v1965, %v1964
      %v1991 = vpack.c.bf16 %v1967, %v1966
      %v1992 = vpack.c.bf16 %v1969, %v1968
      %v1993 = vpack.c.bf16 %v1971, %v1970
      %v1994 = vpack.c.bf16 %v1973, %v1972
      %v1995 = vpack.c.bf16 %v1975, %v1974
      %v1996 = vpack.c.bf16 %v1977, %v1976
      %v1997 = vpack.c.bf16 %v1979, %v1978
      %v1998 = vpack.c.bf16 %v1981, %v1980
      %v1999 = vpack.c.bf16 %v1983, %v1982
      %s2000 = scalar_lea.vmem %s1, 48
      %v2001 = vld [vmem:[%s2000] sm:$0xf]
      %v2002 = vld [vmem:[%s2000 + $0x4] sm:$0xf]
      %v2005 = vunpack.c.l.b16 %v2001
      %v2006 = vunpack.c.l.b16 %v2002
      %v2007 = vpack.c.b16 %v2006, %v2005
      %v2010 = vsel %vm333, %v1984, 0
      %v2013 = vsel %vm333, %v1985, 0
      %v2016 = vsel %vm333, %v1986, 0
      %v2019 = vsel %vm333, %v1987, 0
      %v2022 = vsel %vm333, %v1988, 0
      %v2025 = vsel %vm333, %v1989, 0
      %v2028 = vsel %vm333, %v1990, 0
      %v2031 = vsel %vm333, %v1991, 0
      %v2034 = vsel %vm333, %v1992, 0
      %v2037 = vsel %vm333, %v1993, 0
      %v2040 = vsel %vm333, %v1994, 0
      %v2043 = vsel %vm333, %v1995, 0
      %v2046 = vsel %vm333, %v1996, 0
      %v2049 = vsel %vm333, %v1997, 0
      %v2052 = vsel %vm333, %v1998, 0
      %v2055 = vsel %vm333, %v1999, 0
      %2057 = vmatprep.subr.bf16.mxu0 0
      %2058 = vmatpush1.bf16.msra.mxu0 0
      %2059 = vmatprep.subr.bf16.mxu0 0
      %2060 = vmatpush1.bf16.msra.mxu0 0
      %2061 = vmatprep.subr.bf16.mxu0 0
      %2062 = vmatpush1.bf16.msra.mxu0 0
      %2063 = vmatprep.subr.bf16.mxu0 0
      %2064 = vmatpush1.bf16.msra.mxu0 0
      %2065 = vmatprep.subr.bf16.mxu0 0
      %2066 = vmatpush1.bf16.msra.mxu0 0
      %2067 = vmatprep.subr.bf16.mxu0 0
      %2068 = vmatpush1.bf16.msra.mxu0 0
      %2069 = vmatprep.subr.bf16.mxu0 0
      %2070 = vmatpush1.bf16.msra.mxu0 0
      %2071 = vmatprep.subr.bf16.mxu0 0
      %2072 = vmatpush1.bf16.msra.mxu0 %v2007
      %2073 = vmatprep.subr.bf16.mxu0 0
      %2074 = vmatpush2.bf16.msra.mxu0 0
      %2075 = vmatprep.subr.bf16.mxu0 0
      %2076 = vmatpush2.bf16.msra.mxu0 0
      %2077 = vmatprep.subr.bf16.mxu0 0
      %2078 = vmatpush2.bf16.msra.mxu0 0
      %2079 = vmatprep.subr.bf16.mxu0 0
      %2080 = vmatpush2.bf16.msra.mxu0 0
      %2081 = vmatprep.subr.bf16.mxu0 0
      %2082 = vmatpush2.bf16.msra.mxu0 0
      %2083 = vmatprep.subr.bf16.mxu0 0
      %2084 = vmatpush2.bf16.msra.mxu0 0
      %2085 = vmatprep.subr.bf16.mxu0 0
      %2086 = vmatpush2.bf16.msra.mxu0 0
      %2087 = vmatprep.subr.bf16.mxu0 0
      %2088 = vmatpush2.bf16.msra.mxu0 0
      %2089 = vmatprep.mubr.bf16.mxu0 0
      %2090 = vmatmul.mubr.bf16.gmra.mxu0 %v2010
      %v2091 = vpop.f32.mrf.mxu0
      %v2092 = vadd.f32 0.0, %v2091
      %v2093 = vpop.f32.mrf.mxu0
      %v2094 = vpop.f32.mrf.mxu0
      %v2095 = vadd.f32 0.0, %v2094
      %v2096 = vpop.f32.mrf.mxu0
      %2097 = vmatprep.mubr.bf16.mxu0 0
      %2098 = vmatmul.mubr.bf16.gmra.mxu0 %v2013
      %v2099 = vpop.f32.mrf.mxu0
      %v2100 = vadd.f32 0.0, %v2099
      %v2101 = vpop.f32.mrf.mxu0
      %v2102 = vpop.f32.mrf.mxu0
      %v2103 = vadd.f32 0.0, %v2102
      %v2104 = vpop.f32.mrf.mxu0
      %2105 = vmatprep.mubr.bf16.mxu0 0
      %2106 = vmatmul.mubr.bf16.gmra.mxu0 %v2016
      %v2107 = vpop.f32.mrf.mxu0
      %v2108 = vadd.f32 0.0, %v2107
      %v2109 = vpop.f32.mrf.mxu0
      %v2110 = vpop.f32.mrf.mxu0
      %v2111 = vadd.f32 0.0, %v2110
      %v2112 = vpop.f32.mrf.mxu0
      %2113 = vmatprep.mubr.bf16.mxu0 0
      %2114 = vmatmul.mubr.bf16.gmra.mxu0 %v2019
      %v2115 = vpop.f32.mrf.mxu0
      %v2116 = vadd.f32 0.0, %v2115
      %v2117 = vpop.f32.mrf.mxu0
      %v2118 = vpop.f32.mrf.mxu0
      %v2119 = vadd.f32 0.0, %v2118
      %v2120 = vpop.f32.mrf.mxu0
      %2121 = vmatprep.mubr.bf16.mxu0 0
      %2122 = vmatmul.mubr.bf16.gmra.mxu0 %v2022
      %v2123 = vpop.f32.mrf.mxu0
      %v2124 = vadd.f32 0.0, %v2123
      %v2125 = vpop.f32.mrf.mxu0
      %v2126 = vpop.f32.mrf.mxu0
      %v2127 = vadd.f32 0.0, %v2126
      %v2128 = vpop.f32.mrf.mxu0
      %2129 = vmatprep.mubr.bf16.mxu0 0
      %2130 = vmatmul.mubr.bf16.gmra.mxu0 %v2025
      %v2131 = vpop.f32.mrf.mxu0
      %v2132 = vadd.f32 0.0, %v2131
      %v2133 = vpop.f32.mrf.mxu0
      %v2134 = vpop.f32.mrf.mxu0
      %v2135 = vadd.f32 0.0, %v2134
      %v2136 = vpop.f32.mrf.mxu0
      %2137 = vmatprep.mubr.bf16.mxu0 0
      %2138 = vmatmul.mubr.bf16.gmra.mxu0 %v2028
      %v2139 = vpop.f32.mrf.mxu0
      %v2140 = vadd.f32 0.0, %v2139
      %v2141 = vpop.f32.mrf.mxu0
      %v2142 = vpop.f32.mrf.mxu0
      %v2143 = vadd.f32 0.0, %v2142
      %v2144 = vpop.f32.mrf.mxu0
      %2145 = vmatprep.mubr.bf16.mxu0 0
      %2146 = vmatmul.mubr.bf16.gmra.mxu0 %v2031
      %v2147 = vpop.f32.mrf.mxu0
      %v2148 = vadd.f32 0.0, %v2147
      %v2149 = vpop.f32.mrf.mxu0
      %v2150 = vpop.f32.mrf.mxu0
      %v2151 = vadd.f32 0.0, %v2150
      %v2152 = vpop.f32.mrf.mxu0
      %2153 = vmatprep.mubr.bf16.mxu0 0
      %2154 = vmatmul.mubr.bf16.gmra.mxu0 %v2034
      %v2155 = vpop.f32.mrf.mxu0
      %v2156 = vadd.f32 0.0, %v2155
      %v2157 = vpop.f32.mrf.mxu0
      %v2158 = vpop.f32.mrf.mxu0
      %v2159 = vadd.f32 0.0, %v2158
      %v2160 = vpop.f32.mrf.mxu0
      %2161 = vmatprep.mubr.bf16.mxu0 0
      %2162 = vmatmul.mubr.bf16.gmra.mxu0 %v2037
      %v2163 = vpop.f32.mrf.mxu0
      %v2164 = vadd.f32 0.0, %v2163
      %v2165 = vpop.f32.mrf.mxu0
      %v2166 = vpop.f32.mrf.mxu0
      %v2167 = vadd.f32 0.0, %v2166
      %v2168 = vpop.f32.mrf.mxu0
      %2169 = vmatprep.mubr.bf16.mxu0 0
      %2170 = vmatmul.mubr.bf16.gmra.mxu0 %v2040
      %v2171 = vpop.f32.mrf.mxu0
      %v2172 = vadd.f32 0.0, %v2171
      %v2173 = vpop.f32.mrf.mxu0
      %v2174 = vpop.f32.mrf.mxu0
      %v2175 = vadd.f32 0.0, %v2174
      %v2176 = vpop.f32.mrf.mxu0
      %2177 = vmatprep.mubr.bf16.mxu0 0
      %2178 = vmatmul.mubr.bf16.gmra.mxu0 %v2043
      %v2179 = vpop.f32.mrf.mxu0
      %v2180 = vadd.f32 0.0, %v2179
      %v2181 = vpop.f32.mrf.mxu0
      %v2182 = vpop.f32.mrf.mxu0
      %v2183 = vadd.f32 0.0, %v2182
      %v2184 = vpop.f32.mrf.mxu0
      %2185 = vmatprep.mubr.bf16.mxu0 0
      %2186 = vmatmul.mubr.bf16.gmra.mxu0 %v2046
      %v2187 = vpop.f32.mrf.mxu0
      %v2188 = vadd.f32 0.0, %v2187
      %v2189 = vpop.f32.mrf.mxu0
      %v2190 = vpop.f32.mrf.mxu0
      %v2191 = vadd.f32 0.0, %v2190
      %v2192 = vpop.f32.mrf.mxu0
      %2193 = vmatprep.mubr.bf16.mxu0 0
      %2194 = vmatmul.mubr.bf16.gmra.mxu0 %v2049
      %v2195 = vpop.f32.mrf.mxu0
      %v2196 = vadd.f32 0.0, %v2195
      %v2197 = vpop.f32.mrf.mxu0
      %v2198 = vpop.f32.mrf.mxu0
      %v2199 = vadd.f32 0.0, %v2198
      %v2200 = vpop.f32.mrf.mxu0
      %2201 = vmatprep.mubr.bf16.mxu0 0
      %2202 = vmatmul.mubr.bf16.gmra.mxu0 %v2052
      %v2203 = vpop.f32.mrf.mxu0
      %v2204 = vadd.f32 0.0, %v2203
      %v2205 = vpop.f32.mrf.mxu0
      %v2206 = vpop.f32.mrf.mxu0
      %v2207 = vadd.f32 0.0, %v2206
      %v2208 = vpop.f32.mrf.mxu0
      %2209 = vmatprep.mubr.bf16.mxu0 0
      %2210 = vmatmul.mubr.bf16.gmra.mxu0 %v2055
      %v2211 = vpop.f32.mrf.mxu0
      %v2212 = vadd.f32 0.0, %v2211
      %v2213 = vpop.f32.mrf.mxu0
      %v2214 = vpop.f32.mrf.mxu0
      %v2215 = vadd.f32 0.0, %v2214
      %v2216 = vpop.f32.mrf.mxu0
      %2217 = vdwg.mxu0
      %v2218 = vadd.f32 %v1919, %v2092
      %v2219 = vadd.f32 %v1920, %v2095
      %v2220 = vadd.f32 %v1921, %v2100
      %v2221 = vadd.f32 %v1922, %v2103
      %v2222 = vadd.f32 %v1923, %v2108
      %v2223 = vadd.f32 %v1924, %v2111
      %v2224 = vadd.f32 %v1925, %v2116
      %v2225 = vadd.f32 %v1926, %v2119
      %v2226 = vadd.f32 %v1927, %v2124
      %v2227 = vadd.f32 %v1928, %v2127
      %v2228 = vadd.f32 %v1929, %v2132
      %v2229 = vadd.f32 %v1930, %v2135
      %v2230 = vadd.f32 %v1931, %v2140
      %v2231 = vadd.f32 %v1932, %v2143
      %v2232 = vadd.f32 %v1933, %v2148
      %v2233 = vadd.f32 %v1934, %v2151
      %v2234 = vadd.f32 %v1935, %v2156
      %v2235 = vadd.f32 %v1936, %v2159
      %v2236 = vadd.f32 %v1937, %v2164
      %v2237 = vadd.f32 %v1938, %v2167
      %v2238 = vadd.f32 %v1939, %v2172
      %v2239 = vadd.f32 %v1940, %v2175
      %v2240 = vadd.f32 %v1941, %v2180
      %v2241 = vadd.f32 %v1942, %v2183
      %v2242 = vadd.f32 %v1943, %v2188
      %v2243 = vadd.f32 %v1944, %v2191
      %v2244 = vadd.f32 %v1945, %v2196
      %v2245 = vadd.f32 %v1946, %v2199
      %v2246 = vadd.f32 %v1947, %v2204
      %v2247 = vadd.f32 %v1948, %v2207
      %v2248 = vadd.f32 %v1949, %v2212
      %v2249 = vadd.f32 %v1950, %v2215
      %v2250 = vld [vmem:[%s1951 + $0x1] sm:$0xff]
      %v2251 = vld [vmem:[%s1951 + $0x9] sm:$0xff]
      %v2252 = vld [vmem:[%s1951 + $0x19] sm:$0xff]
      %v2253 = vld [vmem:[%s1951 + $0x21] sm:$0xff]
      %v2254 = vld [vmem:[%s1951 + $0x31] sm:$0xff]
      %v2255 = vld [vmem:[%s1951 + $0x39] sm:$0xff]
      %v2256 = vld [vmem:[%s1951 + $0x49] sm:$0xff]
      %v2257 = vld [vmem:[%s1951 + $0x51] sm:$0xff]
      %v2258 = vld [vmem:[%s1951 + $0x61] sm:$0xff]
      %v2259 = vld [vmem:[%s1951 + $0x69] sm:$0xff]
      %v2260 = vld [vmem:[%s1951 + $0x79] sm:$0xff]
      %v2261 = vld [vmem:[%s1951 + $0x81] sm:$0xff]
      %v2262 = vld [vmem:[%s1951 + $0x91] sm:$0xff]
      %v2263 = vld [vmem:[%s1951 + $0x99] sm:$0xff]
      %v2264 = vld [vmem:[%s1951 + $0xa9] sm:$0xff]
      %v2265 = vld [vmem:[%s1951 + $0xb1] sm:$0xff]
      %v2266 = vld [vmem:[%s1951 + $0xc1] sm:$0xff]
      %v2267 = vld [vmem:[%s1951 + $0xc9] sm:$0xff]
      %v2268 = vld [vmem:[%s1951 + $0xd9] sm:$0xff]
      %v2269 = vld [vmem:[%s1951 + $0xe1] sm:$0xff]
      %v2270 = vld [vmem:[%s1951 + $0xf1] sm:$0xff]
      %v2271 = vld [vmem:[%s1951 + $0xf9] sm:$0xff]
      %v2272 = vld [vmem:[%s1951 + $0x109] sm:$0xff]
      %v2273 = vld [vmem:[%s1951 + $0x111] sm:$0xff]
      %v2274 = vld [vmem:[%s1951 + $0x121] sm:$0xff]
      %v2275 = vld [vmem:[%s1951 + $0x129] sm:$0xff]
      %v2276 = vld [vmem:[%s1951 + $0x139] sm:$0xff]
      %v2277 = vld [vmem:[%s1951 + $0x141] sm:$0xff]
      %v2278 = vld [vmem:[%s1951 + $0x151] sm:$0xff]
      %v2279 = vld [vmem:[%s1951 + $0x159] sm:$0xff]
      %v2280 = vld [vmem:[%s1951 + $0x169] sm:$0xff]
      %v2281 = vld [vmem:[%s1951 + $0x171] sm:$0xff]
      %v2282 = vpack.c.bf16 %v2251, %v2250
      %v2283 = vpack.c.bf16 %v2253, %v2252
      %v2284 = vpack.c.bf16 %v2255, %v2254
      %v2285 = vpack.c.bf16 %v2257, %v2256
      %v2286 = vpack.c.bf16 %v2259, %v2258
      %v2287 = vpack.c.bf16 %v2261, %v2260
      %v2288 = vpack.c.bf16 %v2263, %v2262
      %v2289 = vpack.c.bf16 %v2265, %v2264
      %v2290 = vpack.c.bf16 %v2267, %v2266
      %v2291 = vpack.c.bf16 %v2269, %v2268
      %v2292 = vpack.c.bf16 %v2271, %v2270
      %v2293 = vpack.c.bf16 %v2273, %v2272
      %v2294 = vpack.c.bf16 %v2275, %v2274
      %v2295 = vpack.c.bf16 %v2277, %v2276
      %v2296 = vpack.c.bf16 %v2279, %v2278
      %v2297 = vpack.c.bf16 %v2281, %v2280
      %s2298 = scalar_lea.vmem %s1, 56
      %v2299 = vld [vmem:[%s2298] sm:$0xf]
      %v2300 = vld [vmem:[%s2298 + $0x4] sm:$0xf]
      %v2303 = vunpack.c.l.b16 %v2299
      %v2304 = vunpack.c.l.b16 %v2300
      %v2305 = vpack.c.b16 %v2304, %v2303
      %v2308 = vsel %vm333, %v2282, 0
      %v2311 = vsel %vm333, %v2283, 0
      %v2314 = vsel %vm333, %v2284, 0
      %v2317 = vsel %vm333, %v2285, 0
      %v2320 = vsel %vm333, %v2286, 0
      %v2323 = vsel %vm333, %v2287, 0
      %v2326 = vsel %vm333, %v2288, 0
      %v2329 = vsel %vm333, %v2289, 0
      %v2332 = vsel %vm333, %v2290, 0
      %v2335 = vsel %vm333, %v2291, 0
      %v2338 = vsel %vm333, %v2292, 0
      %v2341 = vsel %vm333, %v2293, 0
      %v2344 = vsel %vm333, %v2294, 0
      %v2347 = vsel %vm333, %v2295, 0
      %v2350 = vsel %vm333, %v2296, 0
      %v2353 = vsel %vm333, %v2297, 0
      %2355 = vmatprep.subr.bf16.mxu0 0
      %2356 = vmatpush1.bf16.msra.mxu0 0
      %2357 = vmatprep.subr.bf16.mxu0 0
      %2358 = vmatpush1.bf16.msra.mxu0 0
      %2359 = vmatprep.subr.bf16.mxu0 0
      %2360 = vmatpush1.bf16.msra.mxu0 0
      %2361 = vmatprep.subr.bf16.mxu0 0
      %2362 = vmatpush1.bf16.msra.mxu0 0
      %2363 = vmatprep.subr.bf16.mxu0 0
      %2364 = vmatpush1.bf16.msra.mxu0 0
      %2365 = vmatprep.subr.bf16.mxu0 0
      %2366 = vmatpush1.bf16.msra.mxu0 0
      %2367 = vmatprep.subr.bf16.mxu0 0
      %2368 = vmatpush1.bf16.msra.mxu0 0
      %2369 = vmatprep.subr.bf16.mxu0 0
      %2370 = vmatpush1.bf16.msra.mxu0 %v2305
      %2371 = vmatprep.subr.bf16.mxu0 0
      %2372 = vmatpush2.bf16.msra.mxu0 0
      %2373 = vmatprep.subr.bf16.mxu0 0
      %2374 = vmatpush2.bf16.msra.mxu0 0
      %2375 = vmatprep.subr.bf16.mxu0 0
      %2376 = vmatpush2.bf16.msra.mxu0 0
      %2377 = vmatprep.subr.bf16.mxu0 0
      %2378 = vmatpush2.bf16.msra.mxu0 0
      %2379 = vmatprep.subr.bf16.mxu0 0
      %2380 = vmatpush2.bf16.msra.mxu0 0
      %2381 = vmatprep.subr.bf16.mxu0 0
      %2382 = vmatpush2.bf16.msra.mxu0 0
      %2383 = vmatprep.subr.bf16.mxu0 0
      %2384 = vmatpush2.bf16.msra.mxu0 0
      %2385 = vmatprep.subr.bf16.mxu0 0
      %2386 = vmatpush2.bf16.msra.mxu0 0
      %2387 = vmatprep.mubr.bf16.mxu0 0
      %2388 = vmatmul.mubr.bf16.gmra.mxu0 %v2308
      %v2389 = vpop.f32.mrf.mxu0
      %v2390 = vadd.f32 0.0, %v2389
      %v2391 = vpop.f32.mrf.mxu0
      %v2392 = vpop.f32.mrf.mxu0
      %v2393 = vadd.f32 0.0, %v2392
      %v2394 = vpop.f32.mrf.mxu0
      %2395 = vmatprep.mubr.bf16.mxu0 0
      %2396 = vmatmul.mubr.bf16.gmra.mxu0 %v2311
      %v2397 = vpop.f32.mrf.mxu0
      %v2398 = vadd.f32 0.0, %v2397
      %v2399 = vpop.f32.mrf.mxu0
      %v2400 = vpop.f32.mrf.mxu0
      %v2401 = vadd.f32 0.0, %v2400
      %v2402 = vpop.f32.mrf.mxu0
      %2403 = vmatprep.mubr.bf16.mxu0 0
      %2404 = vmatmul.mubr.bf16.gmra.mxu0 %v2314
      %v2405 = vpop.f32.mrf.mxu0
      %v2406 = vadd.f32 0.0, %v2405
      %v2407 = vpop.f32.mrf.mxu0
      %v2408 = vpop.f32.mrf.mxu0
      %v2409 = vadd.f32 0.0, %v2408
      %v2410 = vpop.f32.mrf.mxu0
      %2411 = vmatprep.mubr.bf16.mxu0 0
      %2412 = vmatmul.mubr.bf16.gmra.mxu0 %v2317
      %v2413 = vpop.f32.mrf.mxu0
      %v2414 = vadd.f32 0.0, %v2413
      %v2415 = vpop.f32.mrf.mxu0
      %v2416 = vpop.f32.mrf.mxu0
      %v2417 = vadd.f32 0.0, %v2416
      %v2418 = vpop.f32.mrf.mxu0
      %2419 = vmatprep.mubr.bf16.mxu0 0
      %2420 = vmatmul.mubr.bf16.gmra.mxu0 %v2320
      %v2421 = vpop.f32.mrf.mxu0
      %v2422 = vadd.f32 0.0, %v2421
      %v2423 = vpop.f32.mrf.mxu0
      %v2424 = vpop.f32.mrf.mxu0
      %v2425 = vadd.f32 0.0, %v2424
      %v2426 = vpop.f32.mrf.mxu0
      %2427 = vmatprep.mubr.bf16.mxu0 0
      %2428 = vmatmul.mubr.bf16.gmra.mxu0 %v2323
      %v2429 = vpop.f32.mrf.mxu0
      %v2430 = vadd.f32 0.0, %v2429
      %v2431 = vpop.f32.mrf.mxu0
      %v2432 = vpop.f32.mrf.mxu0
      %v2433 = vadd.f32 0.0, %v2432
      %v2434 = vpop.f32.mrf.mxu0
      %2435 = vmatprep.mubr.bf16.mxu0 0
      %2436 = vmatmul.mubr.bf16.gmra.mxu0 %v2326
      %v2437 = vpop.f32.mrf.mxu0
      %v2438 = vadd.f32 0.0, %v2437
      %v2439 = vpop.f32.mrf.mxu0
      %v2440 = vpop.f32.mrf.mxu0
      %v2441 = vadd.f32 0.0, %v2440
      %v2442 = vpop.f32.mrf.mxu0
      %2443 = vmatprep.mubr.bf16.mxu0 0
      %2444 = vmatmul.mubr.bf16.gmra.mxu0 %v2329
      %v2445 = vpop.f32.mrf.mxu0
      %v2446 = vadd.f32 0.0, %v2445
      %v2447 = vpop.f32.mrf.mxu0
      %v2448 = vpop.f32.mrf.mxu0
      %v2449 = vadd.f32 0.0, %v2448
      %v2450 = vpop.f32.mrf.mxu0
      %2451 = vmatprep.mubr.bf16.mxu0 0
      %2452 = vmatmul.mubr.bf16.gmra.mxu0 %v2332
      %v2453 = vpop.f32.mrf.mxu0
      %v2454 = vadd.f32 0.0, %v2453
      %v2455 = vpop.f32.mrf.mxu0
      %v2456 = vpop.f32.mrf.mxu0
      %v2457 = vadd.f32 0.0, %v2456
      %v2458 = vpop.f32.mrf.mxu0
      %2459 = vmatprep.mubr.bf16.mxu0 0
      %2460 = vmatmul.mubr.bf16.gmra.mxu0 %v2335
      %v2461 = vpop.f32.mrf.mxu0
      %v2462 = vadd.f32 0.0, %v2461
      %v2463 = vpop.f32.mrf.mxu0
      %v2464 = vpop.f32.mrf.mxu0
      %v2465 = vadd.f32 0.0, %v2464
      %v2466 = vpop.f32.mrf.mxu0
      %2467 = vmatprep.mubr.bf16.mxu0 0
      %2468 = vmatmul.mubr.bf16.gmra.mxu0 %v2338
      %v2469 = vpop.f32.mrf.mxu0
      %v2470 = vadd.f32 0.0, %v2469
      %v2471 = vpop.f32.mrf.mxu0
      %v2472 = vpop.f32.mrf.mxu0
      %v2473 = vadd.f32 0.0, %v2472
      %v2474 = vpop.f32.mrf.mxu0
      %2475 = vmatprep.mubr.bf16.mxu0 0
      %2476 = vmatmul.mubr.bf16.gmra.mxu0 %v2341
      %v2477 = vpop.f32.mrf.mxu0
      %v2478 = vadd.f32 0.0, %v2477
      %v2479 = vpop.f32.mrf.mxu0
      %v2480 = vpop.f32.mrf.mxu0
      %v2481 = vadd.f32 0.0, %v2480
      %v2482 = vpop.f32.mrf.mxu0
      %2483 = vmatprep.mubr.bf16.mxu0 0
      %2484 = vmatmul.mubr.bf16.gmra.mxu0 %v2344
      %v2485 = vpop.f32.mrf.mxu0
      %v2486 = vadd.f32 0.0, %v2485
      %v2487 = vpop.f32.mrf.mxu0
      %v2488 = vpop.f32.mrf.mxu0
      %v2489 = vadd.f32 0.0, %v2488
      %v2490 = vpop.f32.mrf.mxu0
      %2491 = vmatprep.mubr.bf16.mxu0 0
      %2492 = vmatmul.mubr.bf16.gmra.mxu0 %v2347
      %v2493 = vpop.f32.mrf.mxu0
      %v2494 = vadd.f32 0.0, %v2493
      %v2495 = vpop.f32.mrf.mxu0
      %v2496 = vpop.f32.mrf.mxu0
      %v2497 = vadd.f32 0.0, %v2496
      %v2498 = vpop.f32.mrf.mxu0
      %2499 = vmatprep.mubr.bf16.mxu0 0
      %2500 = vmatmul.mubr.bf16.gmra.mxu0 %v2350
      %v2501 = vpop.f32.mrf.mxu0
      %v2502 = vadd.f32 0.0, %v2501
      %v2503 = vpop.f32.mrf.mxu0
      %v2504 = vpop.f32.mrf.mxu0
      %v2505 = vadd.f32 0.0, %v2504
      %v2506 = vpop.f32.mrf.mxu0
      %2507 = vmatprep.mubr.bf16.mxu0 0
      %2508 = vmatmul.mubr.bf16.gmra.mxu0 %v2353
      %v2509 = vpop.f32.mrf.mxu0
      %v2510 = vadd.f32 0.0, %v2509
      %v2511 = vpop.f32.mrf.mxu0
      %v2512 = vpop.f32.mrf.mxu0
      %v2513 = vadd.f32 0.0, %v2512
      %v2514 = vpop.f32.mrf.mxu0
      %2515 = vdwg.mxu0
      %v2516 = vadd.f32 %v2218, %v2390
      %v2517 = vadd.f32 %v2219, %v2393
      %v2518 = vadd.f32 %v2220, %v2398
      %v2519 = vadd.f32 %v2221, %v2401
      %v2520 = vadd.f32 %v2222, %v2406
      %v2521 = vadd.f32 %v2223, %v2409
      %v2522 = vadd.f32 %v2224, %v2414
      %v2523 = vadd.f32 %v2225, %v2417
      %v2524 = vadd.f32 %v2226, %v2422
      %v2525 = vadd.f32 %v2227, %v2425
      %v2526 = vadd.f32 %v2228, %v2430
      %v2527 = vadd.f32 %v2229, %v2433
      %v2528 = vadd.f32 %v2230, %v2438
      %v2529 = vadd.f32 %v2231, %v2441
      %v2530 = vadd.f32 %v2232, %v2446
      %v2531 = vadd.f32 %v2233, %v2449
      %v2532 = vadd.f32 %v2234, %v2454
      %v2533 = vadd.f32 %v2235, %v2457
      %v2534 = vadd.f32 %v2236, %v2462
      %v2535 = vadd.f32 %v2237, %v2465
      %v2536 = vadd.f32 %v2238, %v2470
      %v2537 = vadd.f32 %v2239, %v2473
      %v2538 = vadd.f32 %v2240, %v2478
      %v2539 = vadd.f32 %v2241, %v2481
      %v2540 = vadd.f32 %v2242, %v2486
      %v2541 = vadd.f32 %v2243, %v2489
      %v2542 = vadd.f32 %v2244, %v2494
      %v2543 = vadd.f32 %v2245, %v2497
      %v2544 = vadd.f32 %v2246, %v2502
      %v2545 = vadd.f32 %v2247, %v2505
      %v2546 = vadd.f32 %v2248, %v2510
      %v2547 = vadd.f32 %v2249, %v2513
      %v2548 = vld [vmem:[%s1951 + $0x2] sm:$0xff]
      %v2549 = vld [vmem:[%s1951 + $0xa] sm:$0xff]
      %v2550 = vld [vmem:[%s1951 + $0x1a] sm:$0xff]
      %v2551 = vld [vmem:[%s1951 + $0x22] sm:$0xff]
      %v2552 = vld [vmem:[%s1951 + $0x32] sm:$0xff]
      %v2553 = vld [vmem:[%s1951 + $0x3a] sm:$0xff]
      %v2554 = vld [vmem:[%s1951 + $0x4a] sm:$0xff]
      %v2555 = vld [vmem:[%s1951 + $0x52] sm:$0xff]
      %v2556 = vld [vmem:[%s1951 + $0x62] sm:$0xff]
      %v2557 = vld [vmem:[%s1951 + $0x6a] sm:$0xff]
      %v2558 = vld [vmem:[%s1951 + $0x7a] sm:$0xff]
      %v2559 = vld [vmem:[%s1951 + $0x82] sm:$0xff]
      %v2560 = vld [vmem:[%s1951 + $0x92] sm:$0xff]
      %v2561 = vld [vmem:[%s1951 + $0x9a] sm:$0xff]
      %v2562 = vld [vmem:[%s1951 + $0xaa] sm:$0xff]
      %v2563 = vld [vmem:[%s1951 + $0xb2] sm:$0xff]
      %v2564 = vld [vmem:[%s1951 + $0xc2] sm:$0xff]
      %v2565 = vld [vmem:[%s1951 + $0xca] sm:$0xff]
      %v2566 = vld [vmem:[%s1951 + $0xda] sm:$0xff]
      %v2567 = vld [vmem:[%s1951 + $0xe2] sm:$0xff]
      %v2568 = vld [vmem:[%s1951 + $0xf2] sm:$0xff]
      %v2569 = vld [vmem:[%s1951 + $0xfa] sm:$0xff]
      %v2570 = vld [vmem:[%s1951 + $0x10a] sm:$0xff]
      %v2571 = vld [vmem:[%s1951 + $0x112] sm:$0xff]
      %v2572 = vld [vmem:[%s1951 + $0x122] sm:$0xff]
      %v2573 = vld [vmem:[%s1951 + $0x12a] sm:$0xff]
      %v2574 = vld [vmem:[%s1951 + $0x13a] sm:$0xff]
      %v2575 = vld [vmem:[%s1951 + $0x142] sm:$0xff]
      %v2576 = vld [vmem:[%s1951 + $0x152] sm:$0xff]
      %v2577 = vld [vmem:[%s1951 + $0x15a] sm:$0xff]
      %v2578 = vld [vmem:[%s1951 + $0x16a] sm:$0xff]
      %v2579 = vld [vmem:[%s1951 + $0x172] sm:$0xff]
      %v2580 = vpack.c.bf16 %v2549, %v2548
      %v2581 = vpack.c.bf16 %v2551, %v2550
      %v2582 = vpack.c.bf16 %v2553, %v2552
      %v2583 = vpack.c.bf16 %v2555, %v2554
      %v2584 = vpack.c.bf16 %v2557, %v2556
      %v2585 = vpack.c.bf16 %v2559, %v2558
      %v2586 = vpack.c.bf16 %v2561, %v2560
      %v2587 = vpack.c.bf16 %v2563, %v2562
      %v2588 = vpack.c.bf16 %v2565, %v2564
      %v2589 = vpack.c.bf16 %v2567, %v2566
      %v2590 = vpack.c.bf16 %v2569, %v2568
      %v2591 = vpack.c.bf16 %v2571, %v2570
      %v2592 = vpack.c.bf16 %v2573, %v2572
      %v2593 = vpack.c.bf16 %v2575, %v2574
      %v2594 = vpack.c.bf16 %v2577, %v2576
      %v2595 = vpack.c.bf16 %v2579, %v2578
      %s2596 = scalar_lea.vmem %s1, 64
      %v2597 = vld [vmem:[%s2596] sm:$0xf]
      %v2598 = vld [vmem:[%s2596 + $0x4] sm:$0xf]
      %v2601 = vunpack.c.l.b16 %v2597
      %v2602 = vunpack.c.l.b16 %v2598
      %v2603 = vpack.c.b16 %v2602, %v2601
      %v2606 = vsel %vm333, %v2580, 0
      %v2609 = vsel %vm333, %v2581, 0
      %v2612 = vsel %vm333, %v2582, 0
      %v2615 = vsel %vm333, %v2583, 0
      %v2618 = vsel %vm333, %v2584, 0
      %v2621 = vsel %vm333, %v2585, 0
      %v2624 = vsel %vm333, %v2586, 0
      %v2627 = vsel %vm333, %v2587, 0
      %v2630 = vsel %vm333, %v2588, 0
      %v2633 = vsel %vm333, %v2589, 0
      %v2636 = vsel %vm333, %v2590, 0
      %v2639 = vsel %vm333, %v2591, 0
      %v2642 = vsel %vm333, %v2592, 0
      %v2645 = vsel %vm333, %v2593, 0
      %v2648 = vsel %vm333, %v2594, 0
      %v2651 = vsel %vm333, %v2595, 0
      %2653 = vmatprep.subr.bf16.mxu0 0
      %2654 = vmatpush1.bf16.msra.mxu0 0
      %2655 = vmatprep.subr.bf16.mxu0 0
      %2656 = vmatpush1.bf16.msra.mxu0 0
      %2657 = vmatprep.subr.bf16.mxu0 0
      %2658 = vmatpush1.bf16.msra.mxu0 0
      %2659 = vmatprep.subr.bf16.mxu0 0
      %2660 = vmatpush1.bf16.msra.mxu0 0
      %2661 = vmatprep.subr.bf16.mxu0 0
      %2662 = vmatpush1.bf16.msra.mxu0 0
      %2663 = vmatprep.subr.bf16.mxu0 0
      %2664 = vmatpush1.bf16.msra.mxu0 0
      %2665 = vmatprep.subr.bf16.mxu0 0
      %2666 = vmatpush1.bf16.msra.mxu0 0
      %2667 = vmatprep.subr.bf16.mxu0 0
      %2668 = vmatpush1.bf16.msra.mxu0 %v2603
      %2669 = vmatprep.subr.bf16.mxu0 0
      %2670 = vmatpush2.bf16.msra.mxu0 0
      %2671 = vmatprep.subr.bf16.mxu0 0
      %2672 = vmatpush2.bf16.msra.mxu0 0
      %2673 = vmatprep.subr.bf16.mxu0 0
      %2674 = vmatpush2.bf16.msra.mxu0 0
      %2675 = vmatprep.subr.bf16.mxu0 0
      %2676 = vmatpush2.bf16.msra.mxu0 0
      %2677 = vmatprep.subr.bf16.mxu0 0
      %2678 = vmatpush2.bf16.msra.mxu0 0
      %2679 = vmatprep.subr.bf16.mxu0 0
      %2680 = vmatpush2.bf16.msra.mxu0 0
      %2681 = vmatprep.subr.bf16.mxu0 0
      %2682 = vmatpush2.bf16.msra.mxu0 0
      %2683 = vmatprep.subr.bf16.mxu0 0
      %2684 = vmatpush2.bf16.msra.mxu0 0
      %2685 = vmatprep.mubr.bf16.mxu0 0
      %2686 = vmatmul.mubr.bf16.gmra.mxu0 %v2606
      %v2687 = vpop.f32.mrf.mxu0
      %v2688 = vadd.f32 0.0, %v2687
      %v2689 = vpop.f32.mrf.mxu0
      %v2690 = vpop.f32.mrf.mxu0
      %v2691 = vadd.f32 0.0, %v2690
      %v2692 = vpop.f32.mrf.mxu0
      %2693 = vmatprep.mubr.bf16.mxu0 0
      %2694 = vmatmul.mubr.bf16.gmra.mxu0 %v2609
      %v2695 = vpop.f32.mrf.mxu0
      %v2696 = vadd.f32 0.0, %v2695
      %v2697 = vpop.f32.mrf.mxu0
      %v2698 = vpop.f32.mrf.mxu0
      %v2699 = vadd.f32 0.0, %v2698
      %v2700 = vpop.f32.mrf.mxu0
      %2701 = vmatprep.mubr.bf16.mxu0 0
      %2702 = vmatmul.mubr.bf16.gmra.mxu0 %v2612
      %v2703 = vpop.f32.mrf.mxu0
      %v2704 = vadd.f32 0.0, %v2703
      %v2705 = vpop.f32.mrf.mxu0
      %v2706 = vpop.f32.mrf.mxu0
      %v2707 = vadd.f32 0.0, %v2706
      %v2708 = vpop.f32.mrf.mxu0
      %2709 = vmatprep.mubr.bf16.mxu0 0
      %2710 = vmatmul.mubr.bf16.gmra.mxu0 %v2615
      %v2711 = vpop.f32.mrf.mxu0
      %v2712 = vadd.f32 0.0, %v2711
      %v2713 = vpop.f32.mrf.mxu0
      %v2714 = vpop.f32.mrf.mxu0
      %v2715 = vadd.f32 0.0, %v2714
      %v2716 = vpop.f32.mrf.mxu0
      %2717 = vmatprep.mubr.bf16.mxu0 0
      %2718 = vmatmul.mubr.bf16.gmra.mxu0 %v2618
      %v2719 = vpop.f32.mrf.mxu0
      %v2720 = vadd.f32 0.0, %v2719
      %v2721 = vpop.f32.mrf.mxu0
      %v2722 = vpop.f32.mrf.mxu0
      %v2723 = vadd.f32 0.0, %v2722
      %v2724 = vpop.f32.mrf.mxu0
      %2725 = vmatprep.mubr.bf16.mxu0 0
      %2726 = vmatmul.mubr.bf16.gmra.mxu0 %v2621
      %v2727 = vpop.f32.mrf.mxu0
      %v2728 = vadd.f32 0.0, %v2727
      %v2729 = vpop.f32.mrf.mxu0
      %v2730 = vpop.f32.mrf.mxu0
      %v2731 = vadd.f32 0.0, %v2730
      %v2732 = vpop.f32.mrf.mxu0
      %2733 = vmatprep.mubr.bf16.mxu0 0
      %2734 = vmatmul.mubr.bf16.gmra.mxu0 %v2624
      %v2735 = vpop.f32.mrf.mxu0
      %v2736 = vadd.f32 0.0, %v2735
      %v2737 = vpop.f32.mrf.mxu0
      %v2738 = vpop.f32.mrf.mxu0
      %v2739 = vadd.f32 0.0, %v2738
      %v2740 = vpop.f32.mrf.mxu0
      %2741 = vmatprep.mubr.bf16.mxu0 0
      %2742 = vmatmul.mubr.bf16.gmra.mxu0 %v2627
      %v2743 = vpop.f32.mrf.mxu0
      %v2744 = vadd.f32 0.0, %v2743
      %v2745 = vpop.f32.mrf.mxu0
      %v2746 = vpop.f32.mrf.mxu0
      %v2747 = vadd.f32 0.0, %v2746
      %v2748 = vpop.f32.mrf.mxu0
      %2749 = vmatprep.mubr.bf16.mxu0 0
      %2750 = vmatmul.mubr.bf16.gmra.mxu0 %v2630
      %v2751 = vpop.f32.mrf.mxu0
      %v2752 = vadd.f32 0.0, %v2751
      %v2753 = vpop.f32.mrf.mxu0
      %v2754 = vpop.f32.mrf.mxu0
      %v2755 = vadd.f32 0.0, %v2754
      %v2756 = vpop.f32.mrf.mxu0
      %2757 = vmatprep.mubr.bf16.mxu0 0
      %2758 = vmatmul.mubr.bf16.gmra.mxu0 %v2633
      %v2759 = vpop.f32.mrf.mxu0
      %v2760 = vadd.f32 0.0, %v2759
      %v2761 = vpop.f32.mrf.mxu0
      %v2762 = vpop.f32.mrf.mxu0
      %v2763 = vadd.f32 0.0, %v2762
      %v2764 = vpop.f32.mrf.mxu0
      %2765 = vmatprep.mubr.bf16.mxu0 0
      %2766 = vmatmul.mubr.bf16.gmra.mxu0 %v2636
      %v2767 = vpop.f32.mrf.mxu0
      %v2768 = vadd.f32 0.0, %v2767
      %v2769 = vpop.f32.mrf.mxu0
      %v2770 = vpop.f32.mrf.mxu0
      %v2771 = vadd.f32 0.0, %v2770
      %v2772 = vpop.f32.mrf.mxu0
      %2773 = vmatprep.mubr.bf16.mxu0 0
      %2774 = vmatmul.mubr.bf16.gmra.mxu0 %v2639
      %v2775 = vpop.f32.mrf.mxu0
      %v2776 = vadd.f32 0.0, %v2775
      %v2777 = vpop.f32.mrf.mxu0
      %v2778 = vpop.f32.mrf.mxu0
      %v2779 = vadd.f32 0.0, %v2778
      %v2780 = vpop.f32.mrf.mxu0
      %2781 = vmatprep.mubr.bf16.mxu0 0
      %2782 = vmatmul.mubr.bf16.gmra.mxu0 %v2642
      %v2783 = vpop.f32.mrf.mxu0
      %v2784 = vadd.f32 0.0, %v2783
      %v2785 = vpop.f32.mrf.mxu0
      %v2786 = vpop.f32.mrf.mxu0
      %v2787 = vadd.f32 0.0, %v2786
      %v2788 = vpop.f32.mrf.mxu0
      %2789 = vmatprep.mubr.bf16.mxu0 0
      %2790 = vmatmul.mubr.bf16.gmra.mxu0 %v2645
      %v2791 = vpop.f32.mrf.mxu0
      %v2792 = vadd.f32 0.0, %v2791
      %v2793 = vpop.f32.mrf.mxu0
      %v2794 = vpop.f32.mrf.mxu0
      %v2795 = vadd.f32 0.0, %v2794
      %v2796 = vpop.f32.mrf.mxu0
      %2797 = vmatprep.mubr.bf16.mxu0 0
      %2798 = vmatmul.mubr.bf16.gmra.mxu0 %v2648
      %v2799 = vpop.f32.mrf.mxu0
      %v2800 = vadd.f32 0.0, %v2799
      %v2801 = vpop.f32.mrf.mxu0
      %v2802 = vpop.f32.mrf.mxu0
      %v2803 = vadd.f32 0.0, %v2802
      %v2804 = vpop.f32.mrf.mxu0
      %2805 = vmatprep.mubr.bf16.mxu0 0
      %2806 = vmatmul.mubr.bf16.gmra.mxu0 %v2651
      %v2807 = vpop.f32.mrf.mxu0
      %v2808 = vadd.f32 0.0, %v2807
      %v2809 = vpop.f32.mrf.mxu0
      %v2810 = vpop.f32.mrf.mxu0
      %v2811 = vadd.f32 0.0, %v2810
      %v2812 = vpop.f32.mrf.mxu0
      %2813 = vdwg.mxu0
      %v2814 = vadd.f32 %v2516, %v2688
      %v2815 = vadd.f32 %v2517, %v2691
      %v2816 = vadd.f32 %v2518, %v2696
      %v2817 = vadd.f32 %v2519, %v2699
      %v2818 = vadd.f32 %v2520, %v2704
      %v2819 = vadd.f32 %v2521, %v2707
      %v2820 = vadd.f32 %v2522, %v2712
      %v2821 = vadd.f32 %v2523, %v2715
      %v2822 = vadd.f32 %v2524, %v2720
      %v2823 = vadd.f32 %v2525, %v2723
      %v2824 = vadd.f32 %v2526, %v2728
      %v2825 = vadd.f32 %v2527, %v2731
      %v2826 = vadd.f32 %v2528, %v2736
      %v2827 = vadd.f32 %v2529, %v2739
      %v2828 = vadd.f32 %v2530, %v2744
      %v2829 = vadd.f32 %v2531, %v2747
      %v2830 = vadd.f32 %v2532, %v2752
      %v2831 = vadd.f32 %v2533, %v2755
      %v2832 = vadd.f32 %v2534, %v2760
      %v2833 = vadd.f32 %v2535, %v2763
      %v2834 = vadd.f32 %v2536, %v2768
      %v2835 = vadd.f32 %v2537, %v2771
      %v2836 = vadd.f32 %v2538, %v2776
      %v2837 = vadd.f32 %v2539, %v2779
      %v2838 = vadd.f32 %v2540, %v2784
      %v2839 = vadd.f32 %v2541, %v2787
      %v2840 = vadd.f32 %v2542, %v2792
      %v2841 = vadd.f32 %v2543, %v2795
      %v2842 = vadd.f32 %v2544, %v2800
      %v2843 = vadd.f32 %v2545, %v2803
      %v2844 = vadd.f32 %v2546, %v2808
      %v2845 = vadd.f32 %v2547, %v2811
      %v2846 = vld [vmem:[%s2] sm:$0x1]
      %v2848 = vlaneseq
      %v2849 = vshrl.u32 %v2848, 7
      %v2850 = vsub.s32 0, %v2849
      %v2851 = vrot.slane %v2846, %v2850
      %v2853 = vadd.f32 %v2814, %v2851
      %v2854 = vadd.f32 %v2815, %v2851
      %v2855 = vadd.f32 %v2816, %v2851
      %v2856 = vadd.f32 %v2817, %v2851
      %v2857 = vadd.f32 %v2818, %v2851
      %v2858 = vadd.f32 %v2819, %v2851
      %v2859 = vadd.f32 %v2820, %v2851
      %v2860 = vadd.f32 %v2821, %v2851
      %v2861 = vadd.f32 %v2822, %v2851
      %v2862 = vadd.f32 %v2823, %v2851
      %v2863 = vadd.f32 %v2824, %v2851
      %v2864 = vadd.f32 %v2825, %v2851
      %v2865 = vadd.f32 %v2826, %v2851
      %v2866 = vadd.f32 %v2827, %v2851
      %v2867 = vadd.f32 %v2828, %v2851
      %v2868 = vadd.f32 %v2829, %v2851
      %v2869 = vadd.f32 %v2830, %v2851
      %v2870 = vadd.f32 %v2831, %v2851
      %v2871 = vadd.f32 %v2832, %v2851
      %v2872 = vadd.f32 %v2833, %v2851
      %v2873 = vadd.f32 %v2834, %v2851
      %v2874 = vadd.f32 %v2835, %v2851
      %v2875 = vadd.f32 %v2836, %v2851
      %v2876 = vadd.f32 %v2837, %v2851
      %v2877 = vadd.f32 %v2838, %v2851
      %v2878 = vadd.f32 %v2839, %v2851
      %v2879 = vadd.f32 %v2840, %v2851
      %v2880 = vadd.f32 %v2841, %v2851
      %v2881 = vadd.f32 %v2842, %v2851
      %v2882 = vadd.f32 %v2843, %v2851
      %v2883 = vadd.f32 %v2844, %v2851
      %v2884 = vadd.f32 %v2845, %v2851
      %v2885 = vmax.f32 %v2853, 0.0
      %v2886 = vmax.f32 %v2854, 0.0
      %v2887 = vmax.f32 %v2855, 0.0
      %v2888 = vmax.f32 %v2856, 0.0
      %v2889 = vmax.f32 %v2857, 0.0
      %v2890 = vmax.f32 %v2858, 0.0
      %v2891 = vmax.f32 %v2859, 0.0
      %v2892 = vmax.f32 %v2860, 0.0
      %v2893 = vmax.f32 %v2861, 0.0
      %v2894 = vmax.f32 %v2862, 0.0
      %v2895 = vmax.f32 %v2863, 0.0
      %v2896 = vmax.f32 %v2864, 0.0
      %v2897 = vmax.f32 %v2865, 0.0
      %v2898 = vmax.f32 %v2866, 0.0
      %v2899 = vmax.f32 %v2867, 0.0
      %v2900 = vmax.f32 %v2868, 0.0
      %v2901 = vmax.f32 %v2869, 0.0
      %v2902 = vmax.f32 %v2870, 0.0
      %v2903 = vmax.f32 %v2871, 0.0
      %v2904 = vmax.f32 %v2872, 0.0
      %v2905 = vmax.f32 %v2873, 0.0
      %v2906 = vmax.f32 %v2874, 0.0
      %v2907 = vmax.f32 %v2875, 0.0
      %v2908 = vmax.f32 %v2876, 0.0
      %v2909 = vmax.f32 %v2877, 0.0
      %v2910 = vmax.f32 %v2878, 0.0
      %v2911 = vmax.f32 %v2879, 0.0
      %v2912 = vmax.f32 %v2880, 0.0
      %v2913 = vmax.f32 %v2881, 0.0
      %v2914 = vmax.f32 %v2882, 0.0
      %v2915 = vmax.f32 %v2883, 0.0
      %v2916 = vmax.f32 %v2884, 0.0
      %v2917 = vpack.c.bf16 %v2886, %v2885
      %v2918 = vpack.c.bf16 %v2888, %v2887
      %v2919 = vpack.c.bf16 %v2890, %v2889
      %v2920 = vpack.c.bf16 %v2892, %v2891
      %v2921 = vpack.c.bf16 %v2894, %v2893
      %v2922 = vpack.c.bf16 %v2896, %v2895
      %v2923 = vpack.c.bf16 %v2898, %v2897
      %v2924 = vpack.c.bf16 %v2900, %v2899
      %v2925 = vpack.c.bf16 %v2902, %v2901
      %v2926 = vpack.c.bf16 %v2904, %v2903
      %v2927 = vpack.c.bf16 %v2906, %v2905
      %v2928 = vpack.c.bf16 %v2908, %v2907
      %v2929 = vpack.c.bf16 %v2910, %v2909
      %v2930 = vpack.c.bf16 %v2912, %v2911
      %v2931 = vpack.c.bf16 %v2914, %v2913
      %v2932 = vpack.c.bf16 %v2916, %v2915
      %v2933 = vld [vmem:[%s3] sm:$0xf]
      %v2934 = vld [vmem:[%s3 + $0x4] sm:$0xf]
      %v2935 = vld [vmem:[%s4] sm:$0x1]
      %v2937 = vlaneseq
      %v2938 = vshrl.u32 %v2937, 7
      %v2939 = vsub.s32 0, %v2938
      %v2940 = vrot.slane %v2935, %v2939
      %v2944 = vunpack.c.l.b16 %v2933
      %v2945 = vunpack.c.l.b16 %v2934
      %v2946 = vpack.c.b16 %v2945, %v2944
      %v2949 = vsel %vm333, %v2917, 0
      %v2952 = vsel %vm333, %v2918, 0
      %v2955 = vsel %vm333, %v2919, 0
      %v2958 = vsel %vm333, %v2920, 0
      %v2961 = vsel %vm333, %v2921, 0
      %v2964 = vsel %vm333, %v2922, 0
      %v2967 = vsel %vm333, %v2923, 0
      %v2970 = vsel %vm333, %v2924, 0
      %v2973 = vsel %vm333, %v2925, 0
      %v2976 = vsel %vm333, %v2926, 0
      %v2979 = vsel %vm333, %v2927, 0
      %v2982 = vsel %vm333, %v2928, 0
      %v2985 = vsel %vm333, %v2929, 0
      %v2988 = vsel %vm333, %v2930, 0
      %v2991 = vsel %vm333, %v2931, 0
      %v2994 = vsel %vm333, %v2932, 0
      %2996 = vmatprep.subr.bf16.mxu0 0
      %2997 = vmatpush1.bf16.msra.mxu0 0
      %2998 = vmatprep.subr.bf16.mxu0 0
      %2999 = vmatpush1.bf16.msra.mxu0 0
      %3000 = vmatprep.subr.bf16.mxu0 0
      %3001 = vmatpush1.bf16.msra.mxu0 0
      %3002 = vmatprep.subr.bf16.mxu0 0
      %3003 = vmatpush1.bf16.msra.mxu0 0
      %3004 = vmatprep.subr.bf16.mxu0 0
      %3005 = vmatpush1.bf16.msra.mxu0 0
      %3006 = vmatprep.subr.bf16.mxu0 0
      %3007 = vmatpush1.bf16.msra.mxu0 0
      %3008 = vmatprep.subr.bf16.mxu0 0
      %3009 = vmatpush1.bf16.msra.mxu0 0
      %3010 = vmatprep.subr.bf16.mxu0 0
      %3011 = vmatpush1.bf16.msra.mxu0 %v2946
      %3012 = vmatprep.subr.bf16.mxu0 0
      %3013 = vmatpush2.bf16.msra.mxu0 0
      %3014 = vmatprep.subr.bf16.mxu0 0
      %3015 = vmatpush2.bf16.msra.mxu0 0
      %3016 = vmatprep.subr.bf16.mxu0 0
      %3017 = vmatpush2.bf16.msra.mxu0 0
      %3018 = vmatprep.subr.bf16.mxu0 0
      %3019 = vmatpush2.bf16.msra.mxu0 0
      %3020 = vmatprep.subr.bf16.mxu0 0
      %3021 = vmatpush2.bf16.msra.mxu0 0
      %3022 = vmatprep.subr.bf16.mxu0 0
      %3023 = vmatpush2.bf16.msra.mxu0 0
      %3024 = vmatprep.subr.bf16.mxu0 0
      %3025 = vmatpush2.bf16.msra.mxu0 0
      %3026 = vmatprep.subr.bf16.mxu0 0
      %3027 = vmatpush2.bf16.msra.mxu0 0
      %3028 = vmatprep.mubr.bf16.mxu0 0
      %3029 = vmatmul.mubr.bf16.gmra.mxu0 %v2949
      %v3030 = vpop.f32.mrf.mxu0
      %v3031 = vadd.f32 %v2940, %v3030
      %v3032 = vpop.f32.mrf.mxu0
      %v3033 = vpop.f32.mrf.mxu0
      %v3034 = vadd.f32 %v2940, %v3033
      %v3035 = vpop.f32.mrf.mxu0
      %3036 = vmatprep.mubr.bf16.mxu0 0
      %3037 = vmatmul.mubr.bf16.gmra.mxu0 %v2952
      %v3038 = vpop.f32.mrf.mxu0
      %v3039 = vadd.f32 %v2940, %v3038
      %v3040 = vpop.f32.mrf.mxu0
      %v3041 = vpop.f32.mrf.mxu0
      %v3042 = vadd.f32 %v2940, %v3041
      %v3043 = vpop.f32.mrf.mxu0
      %3044 = vmatprep.mubr.bf16.mxu0 0
      %3045 = vmatmul.mubr.bf16.gmra.mxu0 %v2955
      %v3046 = vpop.f32.mrf.mxu0
      %v3047 = vadd.f32 %v2940, %v3046
      %v3048 = vpop.f32.mrf.mxu0
      %v3049 = vpop.f32.mrf.mxu0
      %v3050 = vadd.f32 %v2940, %v3049
      %v3051 = vpop.f32.mrf.mxu0
      %3052 = vmatprep.mubr.bf16.mxu0 0
      %3053 = vmatmul.mubr.bf16.gmra.mxu0 %v2958
      %v3054 = vpop.f32.mrf.mxu0
      %v3055 = vadd.f32 %v2940, %v3054
      %v3056 = vpop.f32.mrf.mxu0
      %v3057 = vpop.f32.mrf.mxu0
      %v3058 = vadd.f32 %v2940, %v3057
      %v3059 = vpop.f32.mrf.mxu0
      %3060 = vmatprep.mubr.bf16.mxu0 0
      %3061 = vmatmul.mubr.bf16.gmra.mxu0 %v2961
      %v3062 = vpop.f32.mrf.mxu0
      %v3063 = vadd.f32 %v2940, %v3062
      %v3064 = vpop.f32.mrf.mxu0
      %v3065 = vpop.f32.mrf.mxu0
      %v3066 = vadd.f32 %v2940, %v3065
      %v3067 = vpop.f32.mrf.mxu0
      %3068 = vmatprep.mubr.bf16.mxu0 0
      %3069 = vmatmul.mubr.bf16.gmra.mxu0 %v2964
      %v3070 = vpop.f32.mrf.mxu0
      %v3071 = vadd.f32 %v2940, %v3070
      %v3072 = vpop.f32.mrf.mxu0
      %v3073 = vpop.f32.mrf.mxu0
      %v3074 = vadd.f32 %v2940, %v3073
      %v3075 = vpop.f32.mrf.mxu0
      %3076 = vmatprep.mubr.bf16.mxu0 0
      %3077 = vmatmul.mubr.bf16.gmra.mxu0 %v2967
      %v3078 = vpop.f32.mrf.mxu0
      %v3079 = vadd.f32 %v2940, %v3078
      %v3080 = vpop.f32.mrf.mxu0
      %v3081 = vpop.f32.mrf.mxu0
      %v3082 = vadd.f32 %v2940, %v3081
      %v3083 = vpop.f32.mrf.mxu0
      %3084 = vmatprep.mubr.bf16.mxu0 0
      %3085 = vmatmul.mubr.bf16.gmra.mxu0 %v2970
      %v3086 = vpop.f32.mrf.mxu0
      %v3087 = vadd.f32 %v2940, %v3086
      %v3088 = vpop.f32.mrf.mxu0
      %v3089 = vpop.f32.mrf.mxu0
      %v3090 = vadd.f32 %v2940, %v3089
      %v3091 = vpop.f32.mrf.mxu0
      %3092 = vmatprep.mubr.bf16.mxu0 0
      %3093 = vmatmul.mubr.bf16.gmra.mxu0 %v2973
      %v3094 = vpop.f32.mrf.mxu0
      %v3095 = vadd.f32 %v2940, %v3094
      %v3096 = vpop.f32.mrf.mxu0
      %v3097 = vpop.f32.mrf.mxu0
      %v3098 = vadd.f32 %v2940, %v3097
      %v3099 = vpop.f32.mrf.mxu0
      %3100 = vmatprep.mubr.bf16.mxu0 0
      %3101 = vmatmul.mubr.bf16.gmra.mxu0 %v2976
      %v3102 = vpop.f32.mrf.mxu0
      %v3103 = vadd.f32 %v2940, %v3102
      %v3104 = vpop.f32.mrf.mxu0
      %v3105 = vpop.f32.mrf.mxu0
      %v3106 = vadd.f32 %v2940, %v3105
      %v3107 = vpop.f32.mrf.mxu0
      %3108 = vmatprep.mubr.bf16.mxu0 0
      %3109 = vmatmul.mubr.bf16.gmra.mxu0 %v2979
      %v3110 = vpop.f32.mrf.mxu0
      %v3111 = vadd.f32 %v2940, %v3110
      %v3112 = vpop.f32.mrf.mxu0
      %v3113 = vpop.f32.mrf.mxu0
      %v3114 = vadd.f32 %v2940, %v3113
      %v3115 = vpop.f32.mrf.mxu0
      %3116 = vmatprep.mubr.bf16.mxu0 0
      %3117 = vmatmul.mubr.bf16.gmra.mxu0 %v2982
      %v3118 = vpop.f32.mrf.mxu0
      %v3119 = vadd.f32 %v2940, %v3118
      %v3120 = vpop.f32.mrf.mxu0
      %v3121 = vpop.f32.mrf.mxu0
      %v3122 = vadd.f32 %v2940, %v3121
      %v3123 = vpop.f32.mrf.mxu0
      %3124 = vmatprep.mubr.bf16.mxu0 0
      %3125 = vmatmul.mubr.bf16.gmra.mxu0 %v2985
      %v3126 = vpop.f32.mrf.mxu0
      %v3127 = vadd.f32 %v2940, %v3126
      %v3128 = vpop.f32.mrf.mxu0
      %v3129 = vpop.f32.mrf.mxu0
      %v3130 = vadd.f32 %v2940, %v3129
      %v3131 = vpop.f32.mrf.mxu0
      %3132 = vmatprep.mubr.bf16.mxu0 0
      %3133 = vmatmul.mubr.bf16.gmra.mxu0 %v2988
      %v3134 = vpop.f32.mrf.mxu0
      %v3135 = vadd.f32 %v2940, %v3134
      %v3136 = vpop.f32.mrf.mxu0
      %v3137 = vpop.f32.mrf.mxu0
      %v3138 = vadd.f32 %v2940, %v3137
      %v3139 = vpop.f32.mrf.mxu0
      %3140 = vmatprep.mubr.bf16.mxu0 0
      %3141 = vmatmul.mubr.bf16.gmra.mxu0 %v2991
      %v3142 = vpop.f32.mrf.mxu0
      %v3143 = vadd.f32 %v2940, %v3142
      %v3144 = vpop.f32.mrf.mxu0
      %v3145 = vpop.f32.mrf.mxu0
      %v3146 = vadd.f32 %v2940, %v3145
      %v3147 = vpop.f32.mrf.mxu0
      %3148 = vmatprep.mubr.bf16.mxu0 0
      %3149 = vmatmul.mubr.bf16.gmra.mxu0 %v2994
      %v3150 = vpop.f32.mrf.mxu0
      %v3151 = vadd.f32 %v2940, %v3150
      %v3152 = vpop.f32.mrf.mxu0
      %v3153 = vpop.f32.mrf.mxu0
      %v3154 = vadd.f32 %v2940, %v3153
      %v3155 = vpop.f32.mrf.mxu0
      %3156 = vdwg.mxu0
      %vm3157 = vcmask 31744
      %3158 = vst.msk [vmem:[%s224] sm:$0xff] %vm3157, %v3031
      %3159 = vst.msk [vmem:[%s224 + $0x8] sm:$0xff] %vm3157, %v3034
      %3160 = vst.msk [vmem:[%s224 + $0x10] sm:$0xff] %vm3157, %v3039
      %3161 = vst.msk [vmem:[%s224 + $0x18] sm:$0xff] %vm3157, %v3042
      %3162 = vst.msk [vmem:[%s224 + $0x20] sm:$0xff] %vm3157, %v3047
      %3163 = vst.msk [vmem:[%s224 + $0x28] sm:$0xff] %vm3157, %v3050
      %3164 = vst.msk [vmem:[%s224 + $0x30] sm:$0xff] %vm3157, %v3055
      %3165 = vst.msk [vmem:[%s224 + $0x38] sm:$0xff] %vm3157, %v3058
      %3166 = vst.msk [vmem:[%s224 + $0x40] sm:$0xff] %vm3157, %v3063
      %3167 = vst.msk [vmem:[%s224 + $0x48] sm:$0xff] %vm3157, %v3066
      %3168 = vst.msk [vmem:[%s224 + $0x50] sm:$0xff] %vm3157, %v3071
      %3169 = vst.msk [vmem:[%s224 + $0x58] sm:$0xff] %vm3157, %v3074
      %3170 = vst.msk [vmem:[%s224 + $0x60] sm:$0xff] %vm3157, %v3079
      %3171 = vst.msk [vmem:[%s224 + $0x68] sm:$0xff] %vm3157, %v3082
      %3172 = vst.msk [vmem:[%s224 + $0x70] sm:$0xff] %vm3157, %v3087
      %3173 = vst.msk [vmem:[%s224 + $0x78] sm:$0xff] %vm3157, %v3090
      %3174 = vst.msk [vmem:[%s224 + $0x80] sm:$0xff] %vm3157, %v3095
      %3175 = vst.msk [vmem:[%s224 + $0x88] sm:$0xff] %vm3157, %v3098
      %3176 = vst.msk [vmem:[%s224 + $0x90] sm:$0xff] %vm3157, %v3103
      %3177 = vst.msk [vmem:[%s224 + $0x98] sm:$0xff] %vm3157, %v3106
      %3178 = vst.msk [vmem:[%s224 + $0xa0] sm:$0xff] %vm3157, %v3111
      %3179 = vst.msk [vmem:[%s224 + $0xa8] sm:$0xff] %vm3157, %v3114
      %3180 = vst.msk [vmem:[%s224 + $0xb0] sm:$0xff] %vm3157, %v3119
      %3181 = vst.msk [vmem:[%s224 + $0xb8] sm:$0xff] %vm3157, %v3122
      %3182 = vst.msk [vmem:[%s224 + $0xc0] sm:$0xff] %vm3157, %v3127
      %3183 = vst.msk [vmem:[%s224 + $0xc8] sm:$0xff] %vm3157, %v3130
      %3184 = vst.msk [vmem:[%s224 + $0xd0] sm:$0xff] %vm3157, %v3135
      %3185 = vst.msk [vmem:[%s224 + $0xd8] sm:$0xff] %vm3157, %v3138
      %3186 = vst.msk [vmem:[%s224 + $0xe0] sm:$0xff] %vm3157, %v3143
      %3187 = vst.msk [vmem:[%s224 + $0xe8] sm:$0xff] %vm3157, %v3146
      %3188 = vst.msk [vmem:[%s224 + $0xf0] sm:$0xff] %vm3157, %v3151
      %3189 = vst.msk [vmem:[%s224 + $0xf8] sm:$0xff] %vm3157, %v3154
      %p3190 = scmp.lt.s32.totalorder %s16, 1
      %s3191 = scalar_select %p3190, %s16, 1
      %s3192 = smul.addr %s3191, 32
      %s3193 = smul.addr %s3192, 8
      %s3194 = scalar_lea.vmem %s5, %s3193
      // Predicated region
      $region41: #{head_module_forward.1} parent=39 // pred_check
        %p3195 = pneg %p144
      $region42: #{head_module_forward.1} parent=39 // pred_check_branch
        %3197 = sbr.rel (%p3195) target = $region44
      $region43: #{head_module_forward.1} parent=39 // pred_region
        _
      $region44: #{head_module_forward.1} parent=39 // pred_fallthru
        _
    $region40: #{head_module_forward.1} parent=5 // pred_fallthru
      _
    %p3198 = scmp.le.s32.totalorder 2, %s11
    // Predicated region
    $region45: #{head_module_forward.1} parent=5 // pred_check
      %p3199 = pneg %p3198
    $region46: #{head_module_forward.1} parent=5 // pred_check_branch
      %3201 = sbr.rel (%p3199) target = $region48
    $region47: #{head_module_forward.1} parent=5 // pred_region
      %s3202 = ssub.s32 %s11, 2
      // Predicated region
      $region49: #{head_module_forward.1} parent=47 // pred_check
        %p3203 = pneg %p150
      $region50: #{head_module_forward.1} parent=47 // pred_check_branch
        %3205 = sbr.rel (%p3203) target = $region52
      $region51: #{head_module_forward.1} parent=47 // pred_region
        %p3206 = scmp.lt.s32.totalorder %s17, 1
        %s3207 = scalar_select %p3206, %s17, 1
        %s3208 = smul.addr %s3207, 32
        %s3209 = smul.addr %s3208, 8
        %s3210 = scalar_lea.vmem %s5, %s3209
      $region52: #{head_module_forward.1} parent=47 // pred_fallthru
        _
    $region48: #{head_module_forward.1} parent=5 // pred_fallthru
      _
  $region6: #{head_module_forward.1} parent=0 // loop_footer
    %s15 = sadd.s32 1, %s11
  $region7: #{head_module_forward.1} parent=0 // loop_footer_branch
    %10 = sbr.rel target = $region3
  $region8: #{head_module_forward.1} parent=0 // loop_exit
    _

</llo_original>
